<compile_context>
chip_gen: v5e
topology: v5e:2x2
jax: 0.10.0
libtpu: 0.0.40
codegen_flags: <defaults>
</compile_context>

<pallas_src>
import jax
import jax.numpy as jnp
from jax import lax
from jax.experimental import pallas as pl
from jax.experimental.pallas import tpu as pltpu

BN_EPS = 1e-5
NC = 2        # leading "parallel" grid axis (one H-slice per TensorCore on v7x)
O_PAD = 128   # pad output dim 10 -> 128 for full-lane stores / contiguous w2 rows


def _pick_h_tile():
    """Perf-review tile sweep: 1024 for v6e/v7x (fewest steps), 512 on v5e
    (slower HBM -> keep a bit more DMA/compute pipelining)."""
    try:
        kind = jax.devices()[0].device_kind.lower()
    except Exception:
        return 1024
    if "v5 lite" in kind or "v5lite" in kind or "v5e" in kind:
        return 512
    return 1024


def flatnet_kernel(x_ref, w1_ref, bgb_ref, w2_ref, out_ref):
    # x:   (B, D)       bf16  resident
    # w1:  (D, TH)      bf16  streamed H tile (the only real HBM traffic)
    # bgb: (3, TH)      f32   rows = [b1, gamma, beta] for this H tile (1 DMA)
    # w2:  (Hp, O_PAD)  bf16  resident; sliced per H tile with pl.ds
    # out: (B, O_PAD)   f32   per-core partial, resident accumulator
    c = pl.program_id(0)
    i = pl.program_id(1)
    n_inner = pl.num_programs(1)
    th = w1_ref.shape[1]

    # ---- linear_1 tile + ReLU (bf16 MXU inputs, f32 accumulation) ----
    h = jnp.dot(x_ref[...], w1_ref[...],
                preferred_element_type=jnp.float32) + bgb_ref[0:1, :]
    h = jnp.maximum(h, 0.0)                                   # (B, TH) f32

    # ---- BatchNorm1d (training mode, biased variance).  Per-feature, so each
    # H tile is self-contained.  One-pass variance with a >=0 clamp. ----
    mean = jnp.mean(h, axis=0, keepdims=True)                 # (1, TH)
    mean_sq = jnp.mean(h * h, axis=0, keepdims=True)
    var = jnp.maximum(mean_sq - mean * mean, 0.0)
    h_norm = (h - mean) * lax.rsqrt(var + BN_EPS)
    h_norm = h_norm * bgb_ref[1:2, :] + bgb_ref[2:3, :]

    # ---- partial linear_2 for this H tile (resident w2, aligned VMEM slice) ----
    row = pl.multiple_of((c * n_inner + i) * th, th)
    w2_tile = w2_ref[pl.ds(row, th), :]                       # (TH, O_PAD) bf16
    partial = jnp.dot(h_norm.astype(jnp.bfloat16), w2_tile,
                      preferred_element_type=jnp.float32)     # (B, O_PAD) f32

    @pl.when(i == 0)
    def _():
        out_ref[...] = partial

    @pl.when(i > 0)
    def _():
        out_ref[...] += partial


def flatnet_forward(x_nchw, params, h_tile=None):
    """x_nchw: (B, C, H, W) float32.  Returns (B, output_dim) float32."""
    w1, b1, gamma, beta, w2, b2 = params
    B = x_nchw.shape[0]
    D, H = w1.shape
    O = w2.shape[1]
    if h_tile is None:
        h_tile = _pick_h_tile()

    # Pad hidden 2000 -> multiple of NC*h_tile (2048 here).  Zero padding is
    # exact: padded features are 0 after ReLU, BN maps them to 0 (gamma/beta
    # pads are 0), and the padded w2 rows/columns are 0.
    Hp = pl.cdiv(H, NC * h_tile) * NC * h_tile
    hpad = Hp - H
    opad = O_PAD - O
    n_inner = Hp // (NC * h_tile)

    w1p = jnp.pad(w1, ((0, 0), (0, hpad))).astype(jnp.bfloat16)
    w2p = jnp.pad(w2, ((0, hpad), (0, opad))).astype(jnp.bfloat16)
    # b1 / gamma / beta collapsed into one (3, Hp) f32 array -> one DMA per step.
    bgb = jnp.concatenate([
        jnp.pad(b1, ((0, 0), (0, hpad))),
        jnp.pad(gamma, ((0, 0), (0, hpad))),
        jnp.pad(beta, ((0, 0), (0, hpad))),
    ], axis=0)

    # flatten(x, 1) + host-side bf16 cast (no per-step in-kernel pack).
    x_flat = x_nchw.reshape(B, D).astype(jnp.bfloat16)

    partials = pl.pallas_call(
        flatnet_kernel,
        out_shape=jax.ShapeDtypeStruct((NC, B, O_PAD), jnp.float32),
        grid_spec=pltpu.PrefetchScalarGridSpec(
            num_scalar_prefetch=0,
            grid=(NC, n_inner),
            in_specs=[
                pl.BlockSpec((B, D), lambda c, i: (0, 0)),                      # x (resident)
                pl.BlockSpec((D, h_tile), lambda c, i: (0, c * n_inner + i)),   # w1 tile
                pl.BlockSpec((3, h_tile), lambda c, i: (0, c * n_inner + i)),   # b1/gamma/beta
                pl.BlockSpec((Hp, O_PAD), lambda c, i: (0, 0)),                 # w2 (resident)
            ],
            # One resident (B, O_PAD) partial per value of c (per core on v7x).
            out_specs=pl.BlockSpec((None, B, O_PAD), lambda c, i: (c, 0, 0)),
        ),
        compiler_params=pltpu.CompilerParams(
            # c: independent partial outputs -> "parallel" (both TCs on v7x);
            # i: carries the linear_2 accumulation -> "arbitrary".
            dimension_semantics=("parallel", "arbitrary"),
        ),
    )(x_flat, w1p, bgb, w2p)

    # Tiny epilogue: combine per-core partials, add bias, drop the O padding.
    return partials.sum(axis=0)[:, :O] + b2


def init_params(key, input_dim, hidden_dim, output_dim):
    """Deterministic synthetic init (shapes match the PyTorch module)."""
    k1, k2, k3, k4 = jax.random.split(key, 4)
    s1 = 1.0 / jnp.sqrt(input_dim)
    s2 = 1.0 / jnp.sqrt(hidden_dim)
    w1 = jax.random.uniform(k1, (input_dim, hidden_dim), jnp.float32, -s1, s1)
    b1 = jax.random.uniform(k2, (1, hidden_dim), jnp.float32, -s1, s1)
    gamma = jnp.ones((1, hidden_dim), jnp.float32)   # BN weight init
    beta = jnp.zeros((1, hidden_dim), jnp.float32)   # BN bias init
    w2 = jax.random.uniform(k3, (hidden_dim, output_dim), jnp.float32, -s2, s2)
    b2 = jax.random.uniform(k4, (1, output_dim), jnp.float32, -s2, s2)
    return (w1, b1, gamma, beta, w2, b2)


def flatnet_reference(x_nchw, params):
    """Pure-JAX f32 reference for correctness checking."""
    w1, b1, gamma, beta, w2, b2 = params
    x = x_nchw.reshape(x_nchw.shape[0], -1)
    h = jnp.maximum(x @ w1 + b1, 0.0)
    mean = jnp.mean(h, axis=0, keepdims=True)
    var = jnp.mean((h - mean) ** 2, axis=0, keepdims=True)
    hn = (h - mean) / jnp.sqrt(var + BN_EPS) * gamma + beta
    return hn @ w2 + b2


if __name__ == "__main__":
    # image_shape = (4, 16, 16) -> input_dim = 1024; output_shape = 10; batch = 2
    image_shape = (4, 16, 16)
    output_dim = 10
    batch = 2
    input_dim = 4 * 16 * 16
    hidden_dim = 2000

    key = jax.random.PRNGKey(0)
    kx, kp = jax.random.split(key)
    x = jax.random.normal(kx, (batch,) + image_shape, dtype=jnp.float32)
    params = init_params(kp, input_dim, hidden_dim, output_dim)

    out = flatnet_forward(x, params)
    out = jax.block_until_ready(out)

    ref = flatnet_reference(x, params)
    assert out.shape == (batch, output_dim)
    # Both matmul operands are streamed/cast to bf16 (f32 accumulation), so
    # compare against the f32 reference with bf16-input-level tolerance.
    assert jnp.allclose(out, ref, atol=3e-2, rtol=3e-2)

    print("KERNEL_OK")
</pallas_src>

<mosaic_0001>
module attributes {stable_mosaic.version = 11 : i64} {
  func.func @flatnet_kernel(%arg0: i32, %arg1: i32, %arg2: memref<2x1024xbf16, #tpu.memory_space<vmem>>, %arg3: memref<1024x1024xbf16, #tpu.memory_space<vmem>>, %arg4: memref<3x1024xf32, #tpu.memory_space<vmem>>, %arg5: memref<2048x128xbf16, #tpu.memory_space<vmem>>, %arg6: memref<1x2x128xf32, #tpu.memory_space<vmem>>) attributes {dimension_semantics = [#tpu.dimension_semantics<parallel>, #tpu.dimension_semantics<arbitrary>], iteration_bounds = array<i64: 2, 1>, scalar_prefetch = 0 : i64, scratch_operands = 0 : i64, tpu.core_type = #tpu.core_type<tc>, window_params = [{pipeline_mode = #tpu.pipeline_mode<synchronous>, transform_indices = @transform_0, window_bounds = array<i64: 2, 1024>}, {transform_indices = @transform_1, window_bounds = array<i64: 1024, 1024>}, {transform_indices = @transform_2, window_bounds = array<i64: 3, 1024>}, {pipeline_mode = #tpu.pipeline_mode<synchronous>, transform_indices = @transform_3, window_bounds = array<i64: 2048, 128>}, {transform_indices = @transform_4, window_bounds = array<i64: 1, 2, 128>}]} {
    %c0 = arith.constant 0 : index
    %c0_0 = arith.constant 0 : index
    %0 = vector.load %arg2[%c0, %c0_0] : memref<2x1024xbf16, #tpu.memory_space<vmem>>, vector<2x1024xbf16>
    %c0_1 = arith.constant 0 : index
    %c0_2 = arith.constant 0 : index
    %1 = vector.load %arg3[%c0_1, %c0_2] : memref<1024x1024xbf16, #tpu.memory_space<vmem>>, vector<1024x1024xbf16>
    %cst = arith.constant dense<0.000000e+00> : vector<2x1024xf32>
    %2 = tpu.matmul %0, %1, %cst {dimension_numbers = #tpu.dot_dimension_numbers<[1], [0], [0], [1], [0, 0, 1, 1], [], []>} : vector<2x1024xbf16>, vector<1024x1024xbf16>, vector<2x1024xf32> -> vector<2x1024xf32>
    %c0_3 = arith.constant 0 : index
    %c0_4 = arith.constant 0 : index
    %3 = vector.load %arg4[%c0_3, %c0_4] : memref<3x1024xf32, #tpu.memory_space<vmem>>, vector<1x1024xf32>
    %4 = vector.broadcast %3 : vector<1x1024xf32> to vector<2x1024xf32>
    %5 = arith.addf %2, %4 : vector<2x1024xf32>
    %cst_5 = arith.constant 0.000000e+00 : f32
    %6 = vector.broadcast %cst_5 : f32 to vector<2x1024xf32>
    %7 = arith.maximumf %5, %6 : vector<2x1024xf32>
    %cst_6 = arith.constant dense<0.000000e+00> : vector<1024xf32>
    %8 = vector.multi_reduction <add>, %7, %cst_6 [0] : vector<2x1024xf32> to vector<1024xf32>
    %9 = vector.shape_cast %8 : vector<1024xf32> to vector<1x1024xf32>
    %cst_7 = arith.constant 2.000000e+00 : f32
    %10 = vector.broadcast %cst_7 : f32 to vector<1x1024xf32>
    %11 = arith.divf %9, %10 : vector<1x1024xf32>
    %12 = arith.mulf %7, %7 : vector<2x1024xf32>
    %cst_8 = arith.constant dense<0.000000e+00> : vector<1024xf32>
    %13 = vector.multi_reduction <add>, %12, %cst_8 [0] : vector<2x1024xf32> to vector<1024xf32>
    %14 = vector.shape_cast %13 : vector<1024xf32> to vector<1x1024xf32>
    %cst_9 = arith.constant 2.000000e+00 : f32
    %15 = vector.broadcast %cst_9 : f32 to vector<1x1024xf32>
    %16 = arith.divf %14, %15 : vector<1x1024xf32>
    %17 = arith.mulf %11, %11 : vector<1x1024xf32>
    %18 = arith.subf %16, %17 : vector<1x1024xf32>
    %cst_10 = arith.constant 0.000000e+00 : f32
    %19 = vector.broadcast %cst_10 : f32 to vector<1x1024xf32>
    %20 = arith.maximumf %18, %19 : vector<1x1024xf32>
    %21 = vector.broadcast %11 : vector<1x1024xf32> to vector<2x1024xf32>
    %22 = arith.subf %7, %21 : vector<2x1024xf32>
    %cst_11 = arith.constant 9.99999974E-6 : f32
    %23 = vector.broadcast %cst_11 : f32 to vector<1x1024xf32>
    %24 = arith.addf %20, %23 : vector<1x1024xf32>
    %25 = math.rsqrt %24 : vector<1x1024xf32>
    %26 = vector.broadcast %25 : vector<1x1024xf32> to vector<2x1024xf32>
    %27 = arith.mulf %22, %26 : vector<2x1024xf32>
    %c1 = arith.constant 1 : index
    %c0_12 = arith.constant 0 : index
    %28 = vector.load %arg4[%c1, %c0_12] : memref<3x1024xf32, #tpu.memory_space<vmem>>, vector<1x1024xf32>
    %29 = vector.broadcast %28 : vector<1x1024xf32> to vector<2x1024xf32>
    %30 = arith.mulf %27, %29 : vector<2x1024xf32>
    %c2 = arith.constant 2 : index
    %c0_13 = arith.constant 0 : index
    %31 = vector.load %arg4[%c2, %c0_13] : memref<3x1024xf32, #tpu.memory_space<vmem>>, vector<1x1024xf32>
    %32 = vector.broadcast %31 : vector<1x1024xf32> to vector<2x1024xf32>
    %33 = arith.addf %30, %32 : vector<2x1024xf32>
    %c1_i32 = arith.constant 1 : i32
    %34 = arith.muli %arg0, %c1_i32 : i32
    %35 = arith.addi %34, %arg1 : i32
    %c1024_i32 = arith.constant 1024 : i32
    %36 = arith.muli %35, %c1024_i32 : i32
    %37 = tpu.assume_multiple %36, 1024 : i32
    %38 = arith.index_cast %37 : i32 to index
    %c0_14 = arith.constant 0 : index
    %39 = vector.load %arg5[%38, %c0_14] : memref<2048x128xbf16, #tpu.memory_space<vmem>>, vector<1024x128xbf16>
    %40 = arith.truncf %33 : vector<2x1024xf32> to vector<2x1024xbf16>
    %cst_15 = arith.constant dense<0.000000e+00> : vector<2x128xf32>
    %41 = tpu.matmul %40, %39, %cst_15 {dimension_numbers = #tpu.dot_dimension_numbers<[1], [0], [0], [1], [0, 0, 1, 1], [], []>} : vector<2x1024xbf16>, vector<1024x128xbf16>, vector<2x128xf32> -> vector<2x128xf32>
    %c0_i32 = arith.constant 0 : i32
    %42 = arith.cmpi eq, %arg1, %c0_i32 : i32
    %43 = arith.extui %42 : i1 to i32
    %c0_i32_16 = arith.constant 0 : i32
    %44 = arith.cmpi ne, %43, %c0_i32_16 : i32
    scf.if %44 {
      %c0_19 = arith.constant 0 : index
      %c0_20 = arith.constant 0 : index
      %c0_21 = arith.constant 0 : index
      %48 = vector.load %arg6[%c0_19, %c0_20, %c0_21] : memref<1x2x128xf32, #tpu.memory_space<vmem>>, vector<1x2x128xf32>
      %49 = vector.shape_cast %48 : vector<1x2x128xf32> to vector<2x128xf32>
      %50 = vector.shape_cast %41 : vector<2x128xf32> to vector<1x2x128xf32>
      tpu.vector_store %arg6[%c0_19, %c0_20, %c0_21], %50 {strides = array<i32>} : memref<1x2x128xf32, #tpu.memory_space<vmem>>, vector<1x2x128xf32>,
    } else {
    }
    %c0_i32_17 = arith.constant 0 : i32
    %45 = arith.cmpi sgt, %arg1, %c0_i32_17 : i32
    %46 = arith.extui %45 : i1 to i32
    %c0_i32_18 = arith.constant 0 : i32
    %47 = arith.cmpi ne, %46, %c0_i32_18 : i32
    scf.if %47 {
      %c0_19 = arith.constant 0 : index
      %c0_20 = arith.constant 0 : index
      %c0_21 = arith.constant 0 : index
      %48 = vector.load %arg6[%c0_19, %c0_20, %c0_21] : memref<1x2x128xf32, #tpu.memory_space<vmem>>, vector<1x2x128xf32>
      %49 = vector.shape_cast %48 : vector<1x2x128xf32> to vector<2x128xf32>
      %50 = arith.addf %49, %41 : vector<2x128xf32>
      %c0_22 = arith.constant 0 : index
      %c0_23 = arith.constant 0 : index
      %c0_24 = arith.constant 0 : index
      %51 = vector.load %arg6[%c0_22, %c0_23, %c0_24] : memref<1x2x128xf32, #tpu.memory_space<vmem>>, vector<1x2x128xf32>
      %52 = vector.shape_cast %51 : vector<1x2x128xf32> to vector<2x128xf32>
      %53 = vector.shape_cast %50 : vector<2x128xf32> to vector<1x2x128xf32>
      tpu.vector_store %arg6[%c0_22, %c0_23, %c0_24], %53 {strides = array<i32>} : memref<1x2x128xf32, #tpu.memory_space<vmem>>, vector<1x2x128xf32>,
    } else {
    }
    return
  }
  func.func @transform_0(%arg0: i32, %arg1: i32) -> (i32, i32) {
    %c0_i32 = arith.constant 0 : i32
    %c0_i32_0 = arith.constant 0 : i32
    %c0_i32_1 = arith.constant 0 : i32
    return %c0_i32, %c0_i32_0 : i32, i32
  }
  func.func @transform_1(%arg0: i32, %arg1: i32) -> (i32, i32) {
    %c1_i32 = arith.constant 1 : i32
    %0 = arith.muli %arg0, %c1_i32 : i32
    %1 = arith.addi %0, %arg1 : i32
    %c0_i32 = arith.constant 0 : i32
    %c0_i32_0 = arith.constant 0 : i32
    return %c0_i32, %1 : i32, i32
  }
  func.func @transform_2(%arg0: i32, %arg1: i32) -> (i32, i32) {
    %c1_i32 = arith.constant 1 : i32
    %0 = arith.muli %arg0, %c1_i32 : i32
    %1 = arith.addi %0, %arg1 : i32
    %c0_i32 = arith.constant 0 : i32
    %c0_i32_0 = arith.constant 0 : i32
    return %c0_i32, %1 : i32, i32
  }
  func.func @transform_3(%arg0: i32, %arg1: i32) -> (i32, i32) {
    %c0_i32 = arith.constant 0 : i32
    %c0_i32_0 = arith.constant 0 : i32
    %c0_i32_1 = arith.constant 0 : i32
    return %c0_i32, %c0_i32_0 : i32, i32
  }
  func.func @transform_4(%arg0: i32, %arg1: i32) -> (i32, i32, i32) {
    %c0_i32 = arith.constant 0 : i32
    %c0_i32_0 = arith.constant 0 : i32
    %c0_i32_1 = arith.constant 0 : i32
    return %arg0, %c0_i32, %c0_i32_0 : i32, i32, i32
  }
}

</mosaic_0001>

<llo_original>
// kernel: tpu_custom_call.1
$region0: #{tpu_custom_call.1}
  #allocation0 [shape = 'u32[]', space=smem, size = 0x4, offset = 0x4, fixed_abs, tag = 'smem constant byte address 0x4 - core index']
  #allocation1 [shape = 'u32[72,128]{1,0:T(1,128)}', space=vmem, size = 0x9000, scoped, tag = 'internal scratch']
  %s0 = inlined_call_operand.hbm [shape: bf16[2,1024], index: 0, kind: input, shape index: {}]
  %s1 = inlined_call_operand.hbm [shape: bf16[1024,2048], index: 1, kind: input, shape index: {}]
  %s2 = inlined_call_operand.hbm [shape: f32[3,2048], index: 2, kind: input, shape index: {}]
  %s3 = inlined_call_operand.hbm [shape: bf16[2048,128], index: 3, kind: input, shape index: {}]
  %s4 = inlined_call_operand.hbm [shape: f32[2,2,128], index: 4, kind: output, shape index: {}]
  %s5 = sld [smem:[#allocation0]]
  $region73: #{tpu_custom_call.1} parent=0
    _
  %s7 = ssub.s32 1, %s5
  %s8 = scalar_select 0, %s7, %s5
  $region1: #{tpu_custom_call.1} parent=0
    #allocation2 [shape = 'u8[4096]{0}', space=vmem, size = 0x1000, scoped, tag = 'input window, operand 0, single buffered']
    #allocation3 [shape = 's32[2]{0}', space=sflag, size = 0x8, scoped, tag = 'scoped memory for tpu_custom_call.1']
    #allocation4 [shape = 's32[2]{0}', space=sflag, size = 0x8, scoped, tag = 'scoped memory for tpu_custom_call.1']
    #allocation5 [shape = 'u8[4194304]{0}', space=vmem, size = 0x400000, scoped, tag = 'input window, operand 1']
    #allocation6 [shape = 's32[2]{0}', space=sflag, size = 0x8, scoped, tag = 'scoped memory for tpu_custom_call.1']
    #allocation7 [shape = 'u8[32768]{0}', space=vmem, size = 0x8000, scoped, tag = 'input window, operand 2']
    #allocation8 [shape = 'u8[524288]{0}', space=vmem, size = 0x80000, scoped, tag = 'input window, operand 3, single buffered']
    #allocation9 [shape = 's32[1]{0}', space=sflag, size = 0x4, scoped, tag = 'scoped memory for tpu_custom_call.1']
    #allocation10 [shape = 'u8[2048]{0}', space=vmem, size = 0x800, scoped, tag = 'output window, operand 0']
    %9 = vsyncpa [#allocation3], 0
    %10 = vsyncpa [#allocation6], 0
    %s11 = scalar_lea.sflag [#allocation6], 1
    %12 = vsyncpa %s11, 0
    %13 = vsyncpa [#allocation9], 0
    %14 = vsyncpa [#allocation4], 0
    %s15 = scalar_lea.sflag [#allocation4], 1
    %16 = vsyncpa %s15, 0
    loop: start=0, step=1, limit=4
    $region2: #{tpu_custom_call.1} parent=1 // loop_pre_header
      _
    $region3: #{tpu_custom_call.1} parent=1 // loop_header
      %s18 = sphi 0, %s22
      %p19 = scmp.ge.s32.totalorder %s18, 4
      %s25 = sphi 0, %s37
      %s26 = sphi 0, %s33
      %s27 = sphi 0, %s25
      %s28 = sphi 0, %s26
      %s29 = sphi 0, %s27
      %s30 = sphi 0, %s28
      %s38 = sphi 0, %s38
      %s40 = sphi 0, %s38
      %s41 = sphi 0, %s40
      %s55 = sphi 0, %s41
      %s63 = sphi 0, %s65
      %s66 = sphi 0, %s63
      %s67 = sphi 0, %s66
      %s83 = sphi 0, %s67
      %s91 = sphi 0, %s93
      %s94 = sphi 0, %s91
      %s95 = sphi 0, %s94
      %s111 = sphi 0, %s95
      %s115 = sphi 0, %s115
      %s117 = sphi 0, %s115
      %s118 = sphi 0, %s117
      %s132 = sphi 0, %s118
      %s138 = sphi 0, %s140
      %s141 = sphi 0, %s138
      %s142 = sphi 0, %s141
      %s158 = sphi 0, %s142
    $region4: #{tpu_custom_call.1} parent=1 // loop_header_branch
      %21 = sbr.rel (%p19) target = $region8
    $region5: #{tpu_custom_call.1} parent=1 // loop_body
      %s23 = ssub.s32 %s18, 1
      %s24 = ssub.s32 %s18, 2
      %s31 = sadd.s32 1, %s26
      %p32 = scmp.ge.s32.totalorder %s31, 1
      %s33 = scalar_select %p32, 0, %s31
      %s34 = sadd.s32 1, %s25
      %s35 = scalar_select %p32, %s34, %s25
      %p36 = scmp.ge.s32.totalorder %s35, 2
      %s37 = scalar_select %p36, 0, %s35
      %s39 = sadd.s32 %s38, 1
      %p42 = scmp.eq.s32.totalorder %s18, 1
      %p43 = scmp.ne.s32.totalorder %s38, %s40
      %p44 = scmp.eq.s32.totalorder %s18, 0
      %p45 = por %p43, %p44
      %p46 = scmp.ne.s32.totalorder %s38, %s40
      %p47 = scmp.eq.s32.totalorder %s23, 1
      %p48 = por %p46, %p47
      %p49 = scmp.ne.s32.totalorder %s40, %s41
      %p50 = scmp.eq.s32.totalorder %s23, 0
      %p51 = por %p49, %p50
      %p52 = scmp.ne.s32.totalorder %s40, %s41
      %p53 = scmp.eq.s32.totalorder %s24, 1
      %p54 = por %p52, %p53
      %p56 = scmp.ne.s32.totalorder %s41, %s55
      %p57 = scmp.eq.s32.totalorder %s24, 0
      %p58 = por %p56, %p57
      %s59 = sadd.s32 %s25, %s26
      %s60 = sadd.s32 %s37, %s33
      %s61 = ssub.s32 %s59, %s60
      %p62 = scmp.eq.s32.totalorder %s61, 0
      %s64 = sadd.s32 %s63, 1
      %s65 = scalar_select %p62, %s63, %s64
      %p68 = pneg %p62
      %p69 = scmp.eq.s32.totalorder %s18, 1
      %p70 = por %p68, %p69
      %p71 = scmp.ne.s32.totalorder %s63, %s66
      %p72 = scmp.eq.s32.totalorder %s18, 0
      %p73 = por %p71, %p72
      %p74 = scmp.ne.s32.totalorder %s63, %s66
      %p75 = scmp.eq.s32.totalorder %s23, 1
      %p76 = por %p74, %p75
      %p77 = scmp.ne.s32.totalorder %s66, %s67
      %p78 = scmp.eq.s32.totalorder %s23, 0
      %p79 = por %p77, %p78
      %p80 = scmp.ne.s32.totalorder %s66, %s67
      %p81 = scmp.eq.s32.totalorder %s24, 1
      %p82 = por %p80, %p81
      %p84 = scmp.ne.s32.totalorder %s67, %s83
      %p85 = scmp.eq.s32.totalorder %s24, 0
      %p86 = por %p84, %p85
      %s87 = sadd.s32 %s25, %s26
      %s88 = sadd.s32 %s37, %s33
      %s89 = ssub.s32 %s87, %s88
      %p90 = scmp.eq.s32.totalorder %s89, 0
      %s92 = sadd.s32 %s91, 1
      %s93 = scalar_select %p90, %s91, %s92
      %p96 = pneg %p90
      %p97 = scmp.eq.s32.totalorder %s18, 1
      %p98 = por %p96, %p97
      %p99 = scmp.ne.s32.totalorder %s91, %s94
      %p100 = scmp.eq.s32.totalorder %s18, 0
      %p101 = por %p99, %p100
      %p102 = scmp.ne.s32.totalorder %s91, %s94
      %p103 = scmp.eq.s32.totalorder %s23, 1
      %p104 = por %p102, %p103
      %p105 = scmp.ne.s32.totalorder %s94, %s95
      %p106 = scmp.eq.s32.totalorder %s23, 0
      %p107 = por %p105, %p106
      %p108 = scmp.ne.s32.totalorder %s94, %s95
      %p109 = scmp.eq.s32.totalorder %s24, 1
      %p110 = por %p108, %p109
      %p112 = scmp.ne.s32.totalorder %s95, %s111
      %p113 = scmp.eq.s32.totalorder %s24, 0
      %p114 = por %p112, %p113
      %s116 = sadd.s32 %s115, 1
      %p119 = scmp.eq.s32.totalorder %s18, 1
      %p120 = scmp.ne.s32.totalorder %s115, %s117
      %p121 = scmp.eq.s32.totalorder %s18, 0
      %p122 = por %p120, %p121
      %p123 = scmp.ne.s32.totalorder %s115, %s117
      %p124 = scmp.eq.s32.totalorder %s23, 1
      %p125 = por %p123, %p124
      %p126 = scmp.ne.s32.totalorder %s117, %s118
      %p127 = scmp.eq.s32.totalorder %s23, 0
      %p128 = por %p126, %p127
      %p129 = scmp.ne.s32.totalorder %s117, %s118
      %p130 = scmp.eq.s32.totalorder %s24, 1
      %p131 = por %p129, %p130
      %p133 = scmp.ne.s32.totalorder %s118, %s132
      %p134 = scmp.eq.s32.totalorder %s24, 0
      %p135 = por %p133, %p134
      %s136 = ssub.s32 %s25, %s37
      %p137 = scmp.eq.s32.totalorder %s136, 0
      %s139 = sadd.s32 %s138, 1
      %s140 = scalar_select %p137, %s138, %s139
      %p143 = pneg %p137
      %p144 = scmp.eq.s32.totalorder %s18, 1
      %p145 = por %p143, %p144
      %p146 = scmp.ne.s32.totalorder %s138, %s141
      %p147 = scmp.eq.s32.totalorder %s18, 0
      %p148 = por %p146, %p147
      %p149 = scmp.ne.s32.totalorder %s138, %s141
      %p150 = scmp.eq.s32.totalorder %s23, 1
      %p151 = por %p149, %p150
      %p152 = scmp.ne.s32.totalorder %s141, %s142
      %p153 = scmp.eq.s32.totalorder %s23, 0
      %p154 = por %p152, %p153
      %p155 = scmp.ne.s32.totalorder %s141, %s142
      %p156 = scmp.eq.s32.totalorder %s24, 1
      %p157 = por %p155, %p156
      %p159 = scmp.ne.s32.totalorder %s142, %s158
      %p160 = scmp.eq.s32.totalorder %s24, 0
      %p161 = por %p159, %p160
      %p162 = scmp.le.s32.totalorder 1, %s18
      %p163 = scmp.lt.s32.totalorder %s18, 3
      %p164 = pnand %p162, %p163
      %p165 = pneg %p164
      // Predicated region
      $region9: #{tpu_custom_call.1} parent=5 // pred_check
        _
      $region10: #{tpu_custom_call.1} parent=5 // pred_check_branch
        %167 = sbr.rel (%p164) target = $region12
      $region11: #{tpu_custom_call.1} parent=5 // pred_region
        %s168 = ssub.s32 %s18, 1
        // Predicated region
        $region13: #{tpu_custom_call.1} parent=11 // pred_check
          %p169 = pneg %p51
        $region14: #{tpu_custom_call.1} parent=11 // pred_check_branch
          %171 = sbr.rel (%p169) target = $region16
        $region15: #{tpu_custom_call.1} parent=11 // pred_region
          %173 = vsyncadd [#allocation3], 0
          %s175 = sshll.u32 %s0, 4
          %s176 = int_to_ptr.hbm [resolvable:$true] %s175
          %s177 = sshll.u32 [#allocation2], 4
          %s178 = int_to_ptr.vmem [resolvable:$true] %s177
          %180 = dma.hbm_to_vmem [thread:$0]  %s176, 128, %s178, [#allocation3]
        $region16: #{tpu_custom_call.1} parent=11 // pred_fallthru
          _
        // Predicated region
        $region17: #{tpu_custom_call.1} parent=11 // pred_check
          %p181 = pneg %p128
        $region18: #{tpu_custom_call.1} parent=11 // pred_check_branch
          %183 = sbr.rel (%p181) target = $region20
        $region19: #{tpu_custom_call.1} parent=11 // pred_region
          %185 = vsyncadd [#allocation9], 0
          %s186 = sshll.u32 %s3, 4
          %s187 = int_to_ptr.hbm [resolvable:$true] %s186
          %s188 = sshll.u32 [#allocation8], 4
          %s189 = int_to_ptr.vmem [resolvable:$true] %s188
          %194 = dma.hbm_to_vmem [thread:$0]  %s187, 16384, %s189, [#allocation9], 64, 64, 4
        $region20: #{tpu_custom_call.1} parent=11 // pred_fallthru
          _
      $region12: #{tpu_custom_call.1} parent=5 // pred_fallthru
        _
      %p195 = scmp.lt.s32.totalorder %s18, 2
      // Predicated region
      $region21: #{tpu_custom_call.1} parent=5 // pred_check
        %p196 = pneg %p195
      $region22: #{tpu_custom_call.1} parent=5 // pred_check_branch
        %198 = sbr.rel (%p196) target = $region24
      $region23: #{tpu_custom_call.1} parent=5 // pred_region
        // Predicated region
        $region25: #{tpu_custom_call.1} parent=23 // pred_check
          %p199 = pneg %p73
        $region26: #{tpu_custom_call.1} parent=23 // pred_check_branch
          %201 = sbr.rel (%p199) target = $region28
        $region27: #{tpu_custom_call.1} parent=23 // pred_region
          %s202 = sand.u32 %s18, 1
          %s203 = scalar_lea.sflag [#allocation6], %s202
          %s204 = sand.u32 %s63, 1
          %s205 = smul.addr %s204, 4096
          %s206 = scalar_lea.vmem [#allocation5], %s205
          %s207 = sadd.s32 %s25, %s26
          %s208 = smul.u32 8, %s207
          %210 = vsyncadd %s203, 0
          %s211 = smul.addr %s208, 4
          %s212 = scalar_lea.hbm %s1, %s211
          %s213 = sshll.u32 %s212, 4
          %s214 = int_to_ptr.hbm [resolvable:$true] %s213
          %s215 = sshll.u32 %s206, 4
          %s216 = int_to_ptr.vmem [resolvable:$true] %s215
          %221 = dma.hbm_to_vmem [thread:$0]  %s214, 65536, %s216, %s203, 1024, 512, 32
        $region28: #{tpu_custom_call.1} parent=23 // pred_fallthru
          _
        // Predicated region
        $region29: #{tpu_custom_call.1} parent=23 // pred_check
          %p222 = pneg %p101
        $region30: #{tpu_custom_call.1} parent=23 // pred_check_branch
          %224 = sbr.rel (%p222) target = $region32
        $region31: #{tpu_custom_call.1} parent=23 // pred_region
          %s225 = sand.u32 %s18, 1
          %s226 = scalar_lea.sflag [#allocation6], %s225
          %s227 = sand.u32 %s91, 1
          %s228 = smul.addr %s227, 32
          %s229 = scalar_lea.vmem [#allocation7], %s228
          %s230 = sadd.s32 %s25, %s26
          %s231 = smul.u32 8, %s230
          %233 = vsyncadd %s226, 0
          %s234 = smul.addr %s231, 4
          %s235 = scalar_lea.hbm %s2, %s234
          %s237 = sshll.u32 %s235, 4
          %s238 = int_to_ptr.hbm [resolvable:$true] %s237
          %s239 = sshll.u32 %s229, 4
          %s240 = int_to_ptr.vmem [resolvable:$true] %s239
          %242 = dma.hbm_to_vmem [thread:$0]  %s238, 512, %s240, %s226
        $region32: #{tpu_custom_call.1} parent=23 // pred_fallthru
          _
      $region24: #{tpu_custom_call.1} parent=5 // pred_fallthru
        _
      %p243 = scmp.le.s32.totalorder 1, %s18
      %p244 = scmp.lt.s32.totalorder %s18, 3
      %p245 = pnand %p243, %p244
      %p246 = pneg %p245
      // Predicated region
      $region33: #{tpu_custom_call.1} parent=5 // pred_check
        _
      $region34: #{tpu_custom_call.1} parent=5 // pred_check_branch
        %248 = sbr.rel (%p245) target = $region36
      $region35: #{tpu_custom_call.1} parent=5 // pred_region
        %s249 = ssub.s32 %s18, 1
        // Predicated region
        $region37: #{tpu_custom_call.1} parent=35 // pred_check
          %p250 = pneg %p51
        $region38: #{tpu_custom_call.1} parent=35 // pred_check_branch
          %252 = sbr.rel (%p250) target = $region40
        $region39: #{tpu_custom_call.1} parent=35 // pred_region
          %254 = dma.done [#allocation3], 128
        $region40: #{tpu_custom_call.1} parent=35 // pred_fallthru
          _
        %s255 = sand.u32 %s23, 1
        %s256 = scalar_lea.sflag [#allocation6], %s255
        %s257 = sand.u32 %s66, 1
        %s258 = smul.addr %s257, 4096
        %s259 = scalar_lea.vmem [#allocation5], %s258
        // Predicated region
        $region41: #{tpu_custom_call.1} parent=35 // pred_check
          %p260 = pneg %p79
        $region42: #{tpu_custom_call.1} parent=35 // pred_check_branch
          %262 = sbr.rel (%p260) target = $region44
        $region43: #{tpu_custom_call.1} parent=35 // pred_region
          %264 = dma.done %s256, 65536
        $region44: #{tpu_custom_call.1} parent=35 // pred_fallthru
          _
        %s265 = sand.u32 %s23, 1
        %s266 = scalar_lea.sflag [#allocation6], %s265
        %s267 = sand.u32 %s94, 1
        %s268 = smul.addr %s267, 32
        %s269 = scalar_lea.vmem [#allocation7], %s268
        // Predicated region
        $region45: #{tpu_custom_call.1} parent=35 // pred_check
          %p270 = pneg %p107
        $region46: #{tpu_custom_call.1} parent=35 // pred_check_branch
          %272 = sbr.rel (%p270) target = $region48
        $region47: #{tpu_custom_call.1} parent=35 // pred_region
          %274 = dma.done %s266, 512
        $region48: #{tpu_custom_call.1} parent=35 // pred_fallthru
          _
        // Predicated region
        $region49: #{tpu_custom_call.1} parent=35 // pred_check
          %p275 = pneg %p128
        $region50: #{tpu_custom_call.1} parent=35 // pred_check_branch
          %277 = sbr.rel (%p275) target = $region52
        $region51: #{tpu_custom_call.1} parent=35 // pred_region
          %279 = dma.done [#allocation9], 16384
        $region52: #{tpu_custom_call.1} parent=35 // pred_fallthru
          _
        %p280 = pneg %p51
        %p281 = pneg %p48
        %s282 = sand.u32 %s23, 1
        %s283 = scalar_lea.sflag [#allocation6], %s282
        %s284 = sand.u32 %s66, 1
        %s285 = smul.addr %s284, 4096
        %s286 = scalar_lea.vmem [#allocation5], %s285
        %p287 = pneg %p79
        %p288 = pneg %p76
        %s289 = sand.u32 %s23, 1
        %s290 = scalar_lea.sflag [#allocation6], %s289
        %s291 = sand.u32 %s94, 1
        %s292 = smul.addr %s291, 32
        %s293 = scalar_lea.vmem [#allocation7], %s292
        %p294 = pneg %p107
        %p295 = pneg %p104
        %p296 = pneg %p128
        %p297 = pneg %p125
        %p298 = pneg %p154
        %p299 = pneg %p151
        %s300 = sand.u32 %s141, 1
        %s301 = scalar_lea.sflag [#allocation4], %s300
        %s302 = sand.u32 %s141, 1
        %s303 = smul.addr %s302, 2
        %s304 = scalar_lea.vmem [#allocation10], %s303
        %s305 = sadd.s32 %s27, %s28
        %s306 = smul.u32 8, %s305
        %s307 = sadd.s32 %s27, %s28
        %s308 = smul.u32 8, %s307
        %v309 = vld [vmem:[#allocation2] sm:$0xff]
        %v310 = vld [vmem:[%s259] sm:$0xff]
        %v311 = vld [vmem:[%s259 + $0x8] sm:$0xff]
        %v312 = vld [vmem:[%s259 + $0x10] sm:$0xff]
        %v313 = vld [vmem:[%s259 + $0x18] sm:$0xff]
        %v314 = vld [vmem:[%s259 + $0x20] sm:$0xff]
        %v315 = vld [vmem:[%s259 + $0x28] sm:$0xff]
        %v316 = vld [vmem:[%s259 + $0x30] sm:$0xff]
        %v317 = vld [vmem:[%s259 + $0x38] sm:$0xff]
        %v318 = vld [vmem:[%s259 + $0x40] sm:$0xff]
        %v319 = vld [vmem:[%s259 + $0x48] sm:$0xff]
        %v320 = vld [vmem:[%s259 + $0x50] sm:$0xff]
        %v321 = vld [vmem:[%s259 + $0x58] sm:$0xff]
        %v322 = vld [vmem:[%s259 + $0x60] sm:$0xff]
        %v323 = vld [vmem:[%s259 + $0x68] sm:$0xff]
        %v324 = vld [vmem:[%s259 + $0x70] sm:$0xff]
        %v325 = vld [vmem:[%s259 + $0x78] sm:$0xff]
        %v326 = vld [vmem:[%s259 + $0x80] sm:$0xff]
        %v327 = vld [vmem:[%s259 + $0x88] sm:$0xff]
        %v328 = vld [vmem:[%s259 + $0x90] sm:$0xff]
        %v329 = vld [vmem:[%s259 + $0x98] sm:$0xff]
        %v330 = vld [vmem:[%s259 + $0xa0] sm:$0xff]
        %v331 = vld [vmem:[%s259 + $0xa8] sm:$0xff]
        %v332 = vld [vmem:[%s259 + $0xb0] sm:$0xff]
        %v333 = vld [vmem:[%s259 + $0xb8] sm:$0xff]
        %v334 = vld [vmem:[%s259 + $0xc0] sm:$0xff]
        %v335 = vld [vmem:[%s259 + $0xc8] sm:$0xff]
        %v336 = vld [vmem:[%s259 + $0xd0] sm:$0xff]
        %v337 = vld [vmem:[%s259 + $0xd8] sm:$0xff]
        %v338 = vld [vmem:[%s259 + $0xe0] sm:$0xff]
        %v339 = vld [vmem:[%s259 + $0xe8] sm:$0xff]
        %v340 = vld [vmem:[%s259 + $0xf0] sm:$0xff]
        %v341 = vld [vmem:[%s259 + $0xf8] sm:$0xff]
        %v342 = vld [vmem:[%s259 + $0x100] sm:$0xff]
        %v343 = vld [vmem:[%s259 + $0x108] sm:$0xff]
        %v344 = vld [vmem:[%s259 + $0x110] sm:$0xff]
        %v345 = vld [vmem:[%s259 + $0x118] sm:$0xff]
        %v346 = vld [vmem:[%s259 + $0x120] sm:$0xff]
        %v347 = vld [vmem:[%s259 + $0x128] sm:$0xff]
        %v348 = vld [vmem:[%s259 + $0x130] sm:$0xff]
        %v349 = vld [vmem:[%s259 + $0x138] sm:$0xff]
        %v350 = vld [vmem:[%s259 + $0x140] sm:$0xff]
        %v351 = vld [vmem:[%s259 + $0x148] sm:$0xff]
        %v352 = vld [vmem:[%s259 + $0x150] sm:$0xff]
        %v353 = vld [vmem:[%s259 + $0x158] sm:$0xff]
        %v354 = vld [vmem:[%s259 + $0x160] sm:$0xff]
        %v355 = vld [vmem:[%s259 + $0x168] sm:$0xff]
        %v356 = vld [vmem:[%s259 + $0x170] sm:$0xff]
        %v357 = vld [vmem:[%s259 + $0x178] sm:$0xff]
        %v358 = vld [vmem:[%s259 + $0x180] sm:$0xff]
        %v359 = vld [vmem:[%s259 + $0x188] sm:$0xff]
        %v360 = vld [vmem:[%s259 + $0x190] sm:$0xff]
        %v361 = vld [vmem:[%s259 + $0x198] sm:$0xff]
        %v362 = vld [vmem:[%s259 + $0x1a0] sm:$0xff]
        %v363 = vld [vmem:[%s259 + $0x1a8] sm:$0xff]
        %v364 = vld [vmem:[%s259 + $0x1b0] sm:$0xff]
        %v365 = vld [vmem:[%s259 + $0x1b8] sm:$0xff]
        %v366 = vld [vmem:[%s259 + $0x1c0] sm:$0xff]
        %v367 = vld [vmem:[%s259 + $0x1c8] sm:$0xff]
        %v368 = vld [vmem:[%s259 + $0x1d0] sm:$0xff]
        %v369 = vld [vmem:[%s259 + $0x1d8] sm:$0xff]
        %v370 = vld [vmem:[%s259 + $0x1e0] sm:$0xff]
        %v371 = vld [vmem:[%s259 + $0x1e8] sm:$0xff]
        %v372 = vld [vmem:[%s259 + $0x1f0] sm:$0xff]
        %v373 = vld [vmem:[%s259 + $0x1f8] sm:$0xff]
        %v374 = vld [vmem:[%s259 + $0x200] sm:$0xff]
        %v375 = vld [vmem:[%s259 + $0x208] sm:$0xff]
        %v376 = vld [vmem:[%s259 + $0x210] sm:$0xff]
        %v377 = vld [vmem:[%s259 + $0x218] sm:$0xff]
        %v378 = vld [vmem:[%s259 + $0x220] sm:$0xff]
        %v379 = vld [vmem:[%s259 + $0x228] sm:$0xff]
        %v380 = vld [vmem:[%s259 + $0x230] sm:$0xff]
        %v381 = vld [vmem:[%s259 + $0x238] sm:$0xff]
        %v382 = vld [vmem:[%s259 + $0x240] sm:$0xff]
        %v383 = vld [vmem:[%s259 + $0x248] sm:$0xff]
        %v384 = vld [vmem:[%s259 + $0x250] sm:$0xff]
        %v385 = vld [vmem:[%s259 + $0x258] sm:$0xff]
        %v386 = vld [vmem:[%s259 + $0x260] sm:$0xff]
        %v387 = vld [vmem:[%s259 + $0x268] sm:$0xff]
        %v388 = vld [vmem:[%s259 + $0x270] sm:$0xff]
        %v389 = vld [vmem:[%s259 + $0x278] sm:$0xff]
        %v390 = vld [vmem:[%s259 + $0x280] sm:$0xff]
        %v391 = vld [vmem:[%s259 + $0x288] sm:$0xff]
        %v392 = vld [vmem:[%s259 + $0x290] sm:$0xff]
        %v393 = vld [vmem:[%s259 + $0x298] sm:$0xff]
        %v394 = vld [vmem:[%s259 + $0x2a0] sm:$0xff]
        %v395 = vld [vmem:[%s259 + $0x2a8] sm:$0xff]
        %v396 = vld [vmem:[%s259 + $0x2b0] sm:$0xff]
        %v397 = vld [vmem:[%s259 + $0x2b8] sm:$0xff]
        %v398 = vld [vmem:[%s259 + $0x2c0] sm:$0xff]
        %v399 = vld [vmem:[%s259 + $0x2c8] sm:$0xff]
        %v400 = vld [vmem:[%s259 + $0x2d0] sm:$0xff]
        %v401 = vld [vmem:[%s259 + $0x2d8] sm:$0xff]
        %v402 = vld [vmem:[%s259 + $0x2e0] sm:$0xff]
        %v403 = vld [vmem:[%s259 + $0x2e8] sm:$0xff]
        %v404 = vld [vmem:[%s259 + $0x2f0] sm:$0xff]
        %v405 = vld [vmem:[%s259 + $0x2f8] sm:$0xff]
        %v406 = vld [vmem:[%s259 + $0x300] sm:$0xff]
        %v407 = vld [vmem:[%s259 + $0x308] sm:$0xff]
        %v408 = vld [vmem:[%s259 + $0x310] sm:$0xff]
        %v409 = vld [vmem:[%s259 + $0x318] sm:$0xff]
        %v410 = vld [vmem:[%s259 + $0x320] sm:$0xff]
        %v411 = vld [vmem:[%s259 + $0x328] sm:$0xff]
        %v412 = vld [vmem:[%s259 + $0x330] sm:$0xff]
        %v413 = vld [vmem:[%s259 + $0x338] sm:$0xff]
        %v414 = vld [vmem:[%s259 + $0x340] sm:$0xff]
        %v415 = vld [vmem:[%s259 + $0x348] sm:$0xff]
        %v416 = vld [vmem:[%s259 + $0x350] sm:$0xff]
        %v417 = vld [vmem:[%s259 + $0x358] sm:$0xff]
        %v418 = vld [vmem:[%s259 + $0x360] sm:$0xff]
        %v419 = vld [vmem:[%s259 + $0x368] sm:$0xff]
        %v420 = vld [vmem:[%s259 + $0x370] sm:$0xff]
        %v421 = vld [vmem:[%s259 + $0x378] sm:$0xff]
        %v422 = vld [vmem:[%s259 + $0x380] sm:$0xff]
        %v423 = vld [vmem:[%s259 + $0x388] sm:$0xff]
        %v424 = vld [vmem:[%s259 + $0x390] sm:$0xff]
        %v425 = vld [vmem:[%s259 + $0x398] sm:$0xff]
        %v426 = vld [vmem:[%s259 + $0x3a0] sm:$0xff]
        %v427 = vld [vmem:[%s259 + $0x3a8] sm:$0xff]
        %v428 = vld [vmem:[%s259 + $0x3b0] sm:$0xff]
        %v429 = vld [vmem:[%s259 + $0x3b8] sm:$0xff]
        %v430 = vld [vmem:[%s259 + $0x3c0] sm:$0xff]
        %v431 = vld [vmem:[%s259 + $0x3c8] sm:$0xff]
        %v432 = vld [vmem:[%s259 + $0x3d0] sm:$0xff]
        %v433 = vld [vmem:[%s259 + $0x3d8] sm:$0xff]
        %v434 = vld [vmem:[%s259 + $0x3e0] sm:$0xff]
        %v435 = vld [vmem:[%s259 + $0x3e8] sm:$0xff]
        %v436 = vld [vmem:[%s259 + $0x3f0] sm:$0xff]
        %v437 = vld [vmem:[%s259 + $0x3f8] sm:$0xff]
        %v438 = vld [vmem:[%s259 + $0x400] sm:$0xff]
        %v439 = vld [vmem:[%s259 + $0x408] sm:$0xff]
        %v440 = vld [vmem:[%s259 + $0x410] sm:$0xff]
        %v441 = vld [vmem:[%s259 + $0x418] sm:$0xff]
        %v442 = vld [vmem:[%s259 + $0x420] sm:$0xff]
        %v443 = vld [vmem:[%s259 + $0x428] sm:$0xff]
        %v444 = vld [vmem:[%s259 + $0x430] sm:$0xff]
        %v445 = vld [vmem:[%s259 + $0x438] sm:$0xff]
        %v446 = vld [vmem:[%s259 + $0x440] sm:$0xff]
        %v447 = vld [vmem:[%s259 + $0x448] sm:$0xff]
        %v448 = vld [vmem:[%s259 + $0x450] sm:$0xff]
        %v449 = vld [vmem:[%s259 + $0x458] sm:$0xff]
        %v450 = vld [vmem:[%s259 + $0x460] sm:$0xff]
        %v451 = vld [vmem:[%s259 + $0x468] sm:$0xff]
        %v452 = vld [vmem:[%s259 + $0x470] sm:$0xff]
        %v453 = vld [vmem:[%s259 + $0x478] sm:$0xff]
        %v454 = vld [vmem:[%s259 + $0x480] sm:$0xff]
        %v455 = vld [vmem:[%s259 + $0x488] sm:$0xff]
        %v456 = vld [vmem:[%s259 + $0x490] sm:$0xff]
        %v457 = vld [vmem:[%s259 + $0x498] sm:$0xff]
        %v458 = vld [vmem:[%s259 + $0x4a0] sm:$0xff]
        %v459 = vld [vmem:[%s259 + $0x4a8] sm:$0xff]
        %v460 = vld [vmem:[%s259 + $0x4b0] sm:$0xff]
        %v461 = vld [vmem:[%s259 + $0x4b8] sm:$0xff]
        %v462 = vld [vmem:[%s259 + $0x4c0] sm:$0xff]
        %v463 = vld [vmem:[%s259 + $0x4c8] sm:$0xff]
        %v464 = vld [vmem:[%s259 + $0x4d0] sm:$0xff]
        %v465 = vld [vmem:[%s259 + $0x4d8] sm:$0xff]
        %v466 = vld [vmem:[%s259 + $0x4e0] sm:$0xff]
        %v467 = vld [vmem:[%s259 + $0x4e8] sm:$0xff]
        %v468 = vld [vmem:[%s259 + $0x4f0] sm:$0xff]
        %v469 = vld [vmem:[%s259 + $0x4f8] sm:$0xff]
        %v470 = vld [vmem:[%s259 + $0x500] sm:$0xff]
        %v471 = vld [vmem:[%s259 + $0x508] sm:$0xff]
        %v472 = vld [vmem:[%s259 + $0x510] sm:$0xff]
        %v473 = vld [vmem:[%s259 + $0x518] sm:$0xff]
        %v474 = vld [vmem:[%s259 + $0x520] sm:$0xff]
        %v475 = vld [vmem:[%s259 + $0x528] sm:$0xff]
        %v476 = vld [vmem:[%s259 + $0x530] sm:$0xff]
        %v477 = vld [vmem:[%s259 + $0x538] sm:$0xff]
        %v478 = vld [vmem:[%s259 + $0x540] sm:$0xff]
        %v479 = vld [vmem:[%s259 + $0x548] sm:$0xff]
        %v480 = vld [vmem:[%s259 + $0x550] sm:$0xff]
        %v481 = vld [vmem:[%s259 + $0x558] sm:$0xff]
        %v482 = vld [vmem:[%s259 + $0x560] sm:$0xff]
        %v483 = vld [vmem:[%s259 + $0x568] sm:$0xff]
        %v484 = vld [vmem:[%s259 + $0x570] sm:$0xff]
        %v485 = vld [vmem:[%s259 + $0x578] sm:$0xff]
        %v486 = vld [vmem:[%s259 + $0x580] sm:$0xff]
        %v487 = vld [vmem:[%s259 + $0x588] sm:$0xff]
        %v488 = vld [vmem:[%s259 + $0x590] sm:$0xff]
        %v489 = vld [vmem:[%s259 + $0x598] sm:$0xff]
        %v490 = vld [vmem:[%s259 + $0x5a0] sm:$0xff]
        %v491 = vld [vmem:[%s259 + $0x5a8] sm:$0xff]
        %v492 = vld [vmem:[%s259 + $0x5b0] sm:$0xff]
        %v493 = vld [vmem:[%s259 + $0x5b8] sm:$0xff]
        %v494 = vld [vmem:[%s259 + $0x5c0] sm:$0xff]
        %v495 = vld [vmem:[%s259 + $0x5c8] sm:$0xff]
        %v496 = vld [vmem:[%s259 + $0x5d0] sm:$0xff]
        %v497 = vld [vmem:[%s259 + $0x5d8] sm:$0xff]
        %v498 = vld [vmem:[%s259 + $0x5e0] sm:$0xff]
        %v499 = vld [vmem:[%s259 + $0x5e8] sm:$0xff]
        %v500 = vld [vmem:[%s259 + $0x5f0] sm:$0xff]
        %v501 = vld [vmem:[%s259 + $0x5f8] sm:$0xff]
        %v502 = vld [vmem:[%s259 + $0x600] sm:$0xff]
        %v503 = vld [vmem:[%s259 + $0x608] sm:$0xff]
        %v504 = vld [vmem:[%s259 + $0x610] sm:$0xff]
        %v505 = vld [vmem:[%s259 + $0x618] sm:$0xff]
        %v506 = vld [vmem:[%s259 + $0x620] sm:$0xff]
        %v507 = vld [vmem:[%s259 + $0x628] sm:$0xff]
        %v508 = vld [vmem:[%s259 + $0x630] sm:$0xff]
        %v509 = vld [vmem:[%s259 + $0x638] sm:$0xff]
        %v510 = vld [vmem:[%s259 + $0x640] sm:$0xff]
        %v511 = vld [vmem:[%s259 + $0x648] sm:$0xff]
        %v512 = vld [vmem:[%s259 + $0x650] sm:$0xff]
        %v513 = vld [vmem:[%s259 + $0x658] sm:$0xff]
        %v514 = vld [vmem:[%s259 + $0x660] sm:$0xff]
        %v515 = vld [vmem:[%s259 + $0x668] sm:$0xff]
        %v516 = vld [vmem:[%s259 + $0x670] sm:$0xff]
        %v517 = vld [vmem:[%s259 + $0x678] sm:$0xff]
        %v518 = vld [vmem:[%s259 + $0x680] sm:$0xff]
        %v519 = vld [vmem:[%s259 + $0x688] sm:$0xff]
        %v520 = vld [vmem:[%s259 + $0x690] sm:$0xff]
        %v521 = vld [vmem:[%s259 + $0x698] sm:$0xff]
        %v522 = vld [vmem:[%s259 + $0x6a0] sm:$0xff]
        %v523 = vld [vmem:[%s259 + $0x6a8] sm:$0xff]
        %v524 = vld [vmem:[%s259 + $0x6b0] sm:$0xff]
        %v525 = vld [vmem:[%s259 + $0x6b8] sm:$0xff]
        %v526 = vld [vmem:[%s259 + $0x6c0] sm:$0xff]
        %v527 = vld [vmem:[%s259 + $0x6c8] sm:$0xff]
        %v528 = vld [vmem:[%s259 + $0x6d0] sm:$0xff]
        %v529 = vld [vmem:[%s259 + $0x6d8] sm:$0xff]
        %v530 = vld [vmem:[%s259 + $0x6e0] sm:$0xff]
        %v531 = vld [vmem:[%s259 + $0x6e8] sm:$0xff]
        %v532 = vld [vmem:[%s259 + $0x6f0] sm:$0xff]
        %v533 = vld [vmem:[%s259 + $0x6f8] sm:$0xff]
        %v534 = vld [vmem:[%s259 + $0x700] sm:$0xff]
        %v535 = vld [vmem:[%s259 + $0x708] sm:$0xff]
        %v536 = vld [vmem:[%s259 + $0x710] sm:$0xff]
        %v537 = vld [vmem:[%s259 + $0x718] sm:$0xff]
        %v538 = vld [vmem:[%s259 + $0x720] sm:$0xff]
        %v539 = vld [vmem:[%s259 + $0x728] sm:$0xff]
        %v540 = vld [vmem:[%s259 + $0x730] sm:$0xff]
        %v541 = vld [vmem:[%s259 + $0x738] sm:$0xff]
        %v542 = vld [vmem:[%s259 + $0x740] sm:$0xff]
        %v543 = vld [vmem:[%s259 + $0x748] sm:$0xff]
        %v544 = vld [vmem:[%s259 + $0x750] sm:$0xff]
        %v545 = vld [vmem:[%s259 + $0x758] sm:$0xff]
        %v546 = vld [vmem:[%s259 + $0x760] sm:$0xff]
        %v547 = vld [vmem:[%s259 + $0x768] sm:$0xff]
        %v548 = vld [vmem:[%s259 + $0x770] sm:$0xff]
        %v549 = vld [vmem:[%s259 + $0x778] sm:$0xff]
        %v550 = vld [vmem:[%s259 + $0x780] sm:$0xff]
        %v551 = vld [vmem:[%s259 + $0x788] sm:$0xff]
        %v552 = vld [vmem:[%s259 + $0x790] sm:$0xff]
        %v553 = vld [vmem:[%s259 + $0x798] sm:$0xff]
        %v554 = vld [vmem:[%s259 + $0x7a0] sm:$0xff]
        %v555 = vld [vmem:[%s259 + $0x7a8] sm:$0xff]
        %v556 = vld [vmem:[%s259 + $0x7b0] sm:$0xff]
        %v557 = vld [vmem:[%s259 + $0x7b8] sm:$0xff]
        %v558 = vld [vmem:[%s259 + $0x7c0] sm:$0xff]
        %v559 = vld [vmem:[%s259 + $0x7c8] sm:$0xff]
        %v560 = vld [vmem:[%s259 + $0x7d0] sm:$0xff]
        %v561 = vld [vmem:[%s259 + $0x7d8] sm:$0xff]
        %v562 = vld [vmem:[%s259 + $0x7e0] sm:$0xff]
        %v563 = vld [vmem:[%s259 + $0x7e8] sm:$0xff]
        %v564 = vld [vmem:[%s259 + $0x7f0] sm:$0xff]
        %v565 = vld [vmem:[%s259 + $0x7f8] sm:$0xff]
        %v566 = vld [vmem:[%s259 + $0x800] sm:$0xff]
        %v567 = vld [vmem:[%s259 + $0x808] sm:$0xff]
        %v568 = vld [vmem:[%s259 + $0x810] sm:$0xff]
        %v569 = vld [vmem:[%s259 + $0x818] sm:$0xff]
        %v570 = vld [vmem:[%s259 + $0x820] sm:$0xff]
        %v571 = vld [vmem:[%s259 + $0x828] sm:$0xff]
        %v572 = vld [vmem:[%s259 + $0x830] sm:$0xff]
        %v573 = vld [vmem:[%s259 + $0x838] sm:$0xff]
        %v574 = vld [vmem:[%s259 + $0x840] sm:$0xff]
        %v575 = vld [vmem:[%s259 + $0x848] sm:$0xff]
        %v576 = vld [vmem:[%s259 + $0x850] sm:$0xff]
        %v577 = vld [vmem:[%s259 + $0x858] sm:$0xff]
        %v578 = vld [vmem:[%s259 + $0x860] sm:$0xff]
        %v579 = vld [vmem:[%s259 + $0x868] sm:$0xff]
        %v580 = vld [vmem:[%s259 + $0x870] sm:$0xff]
        %v581 = vld [vmem:[%s259 + $0x878] sm:$0xff]
        %v582 = vld [vmem:[%s259 + $0x880] sm:$0xff]
        %v583 = vld [vmem:[%s259 + $0x888] sm:$0xff]
        %v584 = vld [vmem:[%s259 + $0x890] sm:$0xff]
        %v585 = vld [vmem:[%s259 + $0x898] sm:$0xff]
        %v586 = vld [vmem:[%s259 + $0x8a0] sm:$0xff]
        %v587 = vld [vmem:[%s259 + $0x8a8] sm:$0xff]
        %v588 = vld [vmem:[%s259 + $0x8b0] sm:$0xff]
        %v589 = vld [vmem:[%s259 + $0x8b8] sm:$0xff]
        %v590 = vld [vmem:[%s259 + $0x8c0] sm:$0xff]
        %v591 = vld [vmem:[%s259 + $0x8c8] sm:$0xff]
        %v592 = vld [vmem:[%s259 + $0x8d0] sm:$0xff]
        %v593 = vld [vmem:[%s259 + $0x8d8] sm:$0xff]
        %v594 = vld [vmem:[%s259 + $0x8e0] sm:$0xff]
        %v595 = vld [vmem:[%s259 + $0x8e8] sm:$0xff]
        %v596 = vld [vmem:[%s259 + $0x8f0] sm:$0xff]
        %v597 = vld [vmem:[%s259 + $0x8f8] sm:$0xff]
        %v598 = vld [vmem:[%s259 + $0x900] sm:$0xff]
        %v599 = vld [vmem:[%s259 + $0x908] sm:$0xff]
        %v600 = vld [vmem:[%s259 + $0x910] sm:$0xff]
        %v601 = vld [vmem:[%s259 + $0x918] sm:$0xff]
        %v602 = vld [vmem:[%s259 + $0x920] sm:$0xff]
        %v603 = vld [vmem:[%s259 + $0x928] sm:$0xff]
        %v604 = vld [vmem:[%s259 + $0x930] sm:$0xff]
        %v605 = vld [vmem:[%s259 + $0x938] sm:$0xff]
        %v606 = vld [vmem:[%s259 + $0x940] sm:$0xff]
        %v607 = vld [vmem:[%s259 + $0x948] sm:$0xff]
        %v608 = vld [vmem:[%s259 + $0x950] sm:$0xff]
        %v609 = vld [vmem:[%s259 + $0x958] sm:$0xff]
        %v610 = vld [vmem:[%s259 + $0x960] sm:$0xff]
        %v611 = vld [vmem:[%s259 + $0x968] sm:$0xff]
        %v612 = vld [vmem:[%s259 + $0x970] sm:$0xff]
        %v613 = vld [vmem:[%s259 + $0x978] sm:$0xff]
        %v614 = vld [vmem:[%s259 + $0x980] sm:$0xff]
        %v615 = vld [vmem:[%s259 + $0x988] sm:$0xff]
        %v616 = vld [vmem:[%s259 + $0x990] sm:$0xff]
        %v617 = vld [vmem:[%s259 + $0x998] sm:$0xff]
        %v618 = vld [vmem:[%s259 + $0x9a0] sm:$0xff]
        %v619 = vld [vmem:[%s259 + $0x9a8] sm:$0xff]
        %v620 = vld [vmem:[%s259 + $0x9b0] sm:$0xff]
        %v621 = vld [vmem:[%s259 + $0x9b8] sm:$0xff]
        %v622 = vld [vmem:[%s259 + $0x9c0] sm:$0xff]
        %v623 = vld [vmem:[%s259 + $0x9c8] sm:$0xff]
        %v624 = vld [vmem:[%s259 + $0x9d0] sm:$0xff]
        %v625 = vld [vmem:[%s259 + $0x9d8] sm:$0xff]
        %v626 = vld [vmem:[%s259 + $0x9e0] sm:$0xff]
        %v627 = vld [vmem:[%s259 + $0x9e8] sm:$0xff]
        %v628 = vld [vmem:[%s259 + $0x9f0] sm:$0xff]
        %v629 = vld [vmem:[%s259 + $0x9f8] sm:$0xff]
        %v630 = vld [vmem:[%s259 + $0xa00] sm:$0xff]
        %v631 = vld [vmem:[%s259 + $0xa08] sm:$0xff]
        %v632 = vld [vmem:[%s259 + $0xa10] sm:$0xff]
        %v633 = vld [vmem:[%s259 + $0xa18] sm:$0xff]
        %v634 = vld [vmem:[%s259 + $0xa20] sm:$0xff]
        %v635 = vld [vmem:[%s259 + $0xa28] sm:$0xff]
        %v636 = vld [vmem:[%s259 + $0xa30] sm:$0xff]
        %v637 = vld [vmem:[%s259 + $0xa38] sm:$0xff]
        %v638 = vld [vmem:[%s259 + $0xa40] sm:$0xff]
        %v639 = vld [vmem:[%s259 + $0xa48] sm:$0xff]
        %v640 = vld [vmem:[%s259 + $0xa50] sm:$0xff]
        %v641 = vld [vmem:[%s259 + $0xa58] sm:$0xff]
        %v642 = vld [vmem:[%s259 + $0xa60] sm:$0xff]
        %v643 = vld [vmem:[%s259 + $0xa68] sm:$0xff]
        %v644 = vld [vmem:[%s259 + $0xa70] sm:$0xff]
        %v645 = vld [vmem:[%s259 + $0xa78] sm:$0xff]
        %v646 = vld [vmem:[%s259 + $0xa80] sm:$0xff]
        %v647 = vld [vmem:[%s259 + $0xa88] sm:$0xff]
        %v648 = vld [vmem:[%s259 + $0xa90] sm:$0xff]
        %v649 = vld [vmem:[%s259 + $0xa98] sm:$0xff]
        %v650 = vld [vmem:[%s259 + $0xaa0] sm:$0xff]
        %v651 = vld [vmem:[%s259 + $0xaa8] sm:$0xff]
        %v652 = vld [vmem:[%s259 + $0xab0] sm:$0xff]
        %v653 = vld [vmem:[%s259 + $0xab8] sm:$0xff]
        %v654 = vld [vmem:[%s259 + $0xac0] sm:$0xff]
        %v655 = vld [vmem:[%s259 + $0xac8] sm:$0xff]
        %v656 = vld [vmem:[%s259 + $0xad0] sm:$0xff]
        %v657 = vld [vmem:[%s259 + $0xad8] sm:$0xff]
        %v658 = vld [vmem:[%s259 + $0xae0] sm:$0xff]
        %v659 = vld [vmem:[%s259 + $0xae8] sm:$0xff]
        %v660 = vld [vmem:[%s259 + $0xaf0] sm:$0xff]
        %v661 = vld [vmem:[%s259 + $0xaf8] sm:$0xff]
        %v662 = vld [vmem:[%s259 + $0xb00] sm:$0xff]
        %v663 = vld [vmem:[%s259 + $0xb08] sm:$0xff]
        %v664 = vld [vmem:[%s259 + $0xb10] sm:$0xff]
        %v665 = vld [vmem:[%s259 + $0xb18] sm:$0xff]
        %v666 = vld [vmem:[%s259 + $0xb20] sm:$0xff]
        %v667 = vld [vmem:[%s259 + $0xb28] sm:$0xff]
        %v668 = vld [vmem:[%s259 + $0xb30] sm:$0xff]
        %v669 = vld [vmem:[%s259 + $0xb38] sm:$0xff]
        %v670 = vld [vmem:[%s259 + $0xb40] sm:$0xff]
        %v671 = vld [vmem:[%s259 + $0xb48] sm:$0xff]
        %v672 = vld [vmem:[%s259 + $0xb50] sm:$0xff]
        %v673 = vld [vmem:[%s259 + $0xb58] sm:$0xff]
        %v674 = vld [vmem:[%s259 + $0xb60] sm:$0xff]
        %v675 = vld [vmem:[%s259 + $0xb68] sm:$0xff]
        %v676 = vld [vmem:[%s259 + $0xb70] sm:$0xff]
        %v677 = vld [vmem:[%s259 + $0xb78] sm:$0xff]
        %v678 = vld [vmem:[%s259 + $0xb80] sm:$0xff]
        %v679 = vld [vmem:[%s259 + $0xb88] sm:$0xff]
        %v680 = vld [vmem:[%s259 + $0xb90] sm:$0xff]
        %v681 = vld [vmem:[%s259 + $0xb98] sm:$0xff]
        %v682 = vld [vmem:[%s259 + $0xba0] sm:$0xff]
        %v683 = vld [vmem:[%s259 + $0xba8] sm:$0xff]
        %v684 = vld [vmem:[%s259 + $0xbb0] sm:$0xff]
        %v685 = vld [vmem:[%s259 + $0xbb8] sm:$0xff]
        %v686 = vld [vmem:[%s259 + $0xbc0] sm:$0xff]
        %v687 = vld [vmem:[%s259 + $0xbc8] sm:$0xff]
        %v688 = vld [vmem:[%s259 + $0xbd0] sm:$0xff]
        %v689 = vld [vmem:[%s259 + $0xbd8] sm:$0xff]
        %v690 = vld [vmem:[%s259 + $0xbe0] sm:$0xff]
        %v691 = vld [vmem:[%s259 + $0xbe8] sm:$0xff]
        %v692 = vld [vmem:[%s259 + $0xbf0] sm:$0xff]
        %v693 = vld [vmem:[%s259 + $0xbf8] sm:$0xff]
        %v694 = vld [vmem:[%s259 + $0xc00] sm:$0xff]
        %v695 = vld [vmem:[%s259 + $0xc08] sm:$0xff]
        %v696 = vld [vmem:[%s259 + $0xc10] sm:$0xff]
        %v697 = vld [vmem:[%s259 + $0xc18] sm:$0xff]
        %v698 = vld [vmem:[%s259 + $0xc20] sm:$0xff]
        %v699 = vld [vmem:[%s259 + $0xc28] sm:$0xff]
        %v700 = vld [vmem:[%s259 + $0xc30] sm:$0xff]
        %v701 = vld [vmem:[%s259 + $0xc38] sm:$0xff]
        %v702 = vld [vmem:[%s259 + $0xc40] sm:$0xff]
        %v703 = vld [vmem:[%s259 + $0xc48] sm:$0xff]
        %v704 = vld [vmem:[%s259 + $0xc50] sm:$0xff]
        %v705 = vld [vmem:[%s259 + $0xc58] sm:$0xff]
        %v706 = vld [vmem:[%s259 + $0xc60] sm:$0xff]
        %v707 = vld [vmem:[%s259 + $0xc68] sm:$0xff]
        %v708 = vld [vmem:[%s259 + $0xc70] sm:$0xff]
        %v709 = vld [vmem:[%s259 + $0xc78] sm:$0xff]
        %v710 = vld [vmem:[%s259 + $0xc80] sm:$0xff]
        %v711 = vld [vmem:[%s259 + $0xc88] sm:$0xff]
        %v712 = vld [vmem:[%s259 + $0xc90] sm:$0xff]
        %v713 = vld [vmem:[%s259 + $0xc98] sm:$0xff]
        %v714 = vld [vmem:[%s259 + $0xca0] sm:$0xff]
        %v715 = vld [vmem:[%s259 + $0xca8] sm:$0xff]
        %v716 = vld [vmem:[%s259 + $0xcb0] sm:$0xff]
        %v717 = vld [vmem:[%s259 + $0xcb8] sm:$0xff]
        %v718 = vld [vmem:[%s259 + $0xcc0] sm:$0xff]
        %v719 = vld [vmem:[%s259 + $0xcc8] sm:$0xff]
        %v720 = vld [vmem:[%s259 + $0xcd0] sm:$0xff]
        %v721 = vld [vmem:[%s259 + $0xcd8] sm:$0xff]
        %v722 = vld [vmem:[%s259 + $0xce0] sm:$0xff]
        %v723 = vld [vmem:[%s259 + $0xce8] sm:$0xff]
        %v724 = vld [vmem:[%s259 + $0xcf0] sm:$0xff]
        %v725 = vld [vmem:[%s259 + $0xcf8] sm:$0xff]
        %v726 = vld [vmem:[%s259 + $0xd00] sm:$0xff]
        %v727 = vld [vmem:[%s259 + $0xd08] sm:$0xff]
        %v728 = vld [vmem:[%s259 + $0xd10] sm:$0xff]
        %v729 = vld [vmem:[%s259 + $0xd18] sm:$0xff]
        %v730 = vld [vmem:[%s259 + $0xd20] sm:$0xff]
        %v731 = vld [vmem:[%s259 + $0xd28] sm:$0xff]
        %v732 = vld [vmem:[%s259 + $0xd30] sm:$0xff]
        %v733 = vld [vmem:[%s259 + $0xd38] sm:$0xff]
        %v734 = vld [vmem:[%s259 + $0xd40] sm:$0xff]
        %v735 = vld [vmem:[%s259 + $0xd48] sm:$0xff]
        %v736 = vld [vmem:[%s259 + $0xd50] sm:$0xff]
        %v737 = vld [vmem:[%s259 + $0xd58] sm:$0xff]
        %v738 = vld [vmem:[%s259 + $0xd60] sm:$0xff]
        %v739 = vld [vmem:[%s259 + $0xd68] sm:$0xff]
        %v740 = vld [vmem:[%s259 + $0xd70] sm:$0xff]
        %v741 = vld [vmem:[%s259 + $0xd78] sm:$0xff]
        %v742 = vld [vmem:[%s259 + $0xd80] sm:$0xff]
        %v743 = vld [vmem:[%s259 + $0xd88] sm:$0xff]
        %v744 = vld [vmem:[%s259 + $0xd90] sm:$0xff]
        %v745 = vld [vmem:[%s259 + $0xd98] sm:$0xff]
        %v746 = vld [vmem:[%s259 + $0xda0] sm:$0xff]
        %v747 = vld [vmem:[%s259 + $0xda8] sm:$0xff]
        %v748 = vld [vmem:[%s259 + $0xdb0] sm:$0xff]
        %v749 = vld [vmem:[%s259 + $0xdb8] sm:$0xff]
        %v750 = vld [vmem:[%s259 + $0xdc0] sm:$0xff]
        %v751 = vld [vmem:[%s259 + $0xdc8] sm:$0xff]
        %v752 = vld [vmem:[%s259 + $0xdd0] sm:$0xff]
        %v753 = vld [vmem:[%s259 + $0xdd8] sm:$0xff]
        %v754 = vld [vmem:[%s259 + $0xde0] sm:$0xff]
        %v755 = vld [vmem:[%s259 + $0xde8] sm:$0xff]
        %v756 = vld [vmem:[%s259 + $0xdf0] sm:$0xff]
        %v757 = vld [vmem:[%s259 + $0xdf8] sm:$0xff]
        %v758 = vld [vmem:[%s259 + $0xe00] sm:$0xff]
        %v759 = vld [vmem:[%s259 + $0xe08] sm:$0xff]
        %v760 = vld [vmem:[%s259 + $0xe10] sm:$0xff]
        %v761 = vld [vmem:[%s259 + $0xe18] sm:$0xff]
        %v762 = vld [vmem:[%s259 + $0xe20] sm:$0xff]
        %v763 = vld [vmem:[%s259 + $0xe28] sm:$0xff]
        %v764 = vld [vmem:[%s259 + $0xe30] sm:$0xff]
        %v765 = vld [vmem:[%s259 + $0xe38] sm:$0xff]
        %v766 = vld [vmem:[%s259 + $0xe40] sm:$0xff]
        %v767 = vld [vmem:[%s259 + $0xe48] sm:$0xff]
        %v768 = vld [vmem:[%s259 + $0xe50] sm:$0xff]
        %v769 = vld [vmem:[%s259 + $0xe58] sm:$0xff]
        %v770 = vld [vmem:[%s259 + $0xe60] sm:$0xff]
        %v771 = vld [vmem:[%s259 + $0xe68] sm:$0xff]
        %v772 = vld [vmem:[%s259 + $0xe70] sm:$0xff]
        %v773 = vld [vmem:[%s259 + $0xe78] sm:$0xff]
        %v774 = vld [vmem:[%s259 + $0xe80] sm:$0xff]
        %v775 = vld [vmem:[%s259 + $0xe88] sm:$0xff]
        %v776 = vld [vmem:[%s259 + $0xe90] sm:$0xff]
        %v777 = vld [vmem:[%s259 + $0xe98] sm:$0xff]
        %v778 = vld [vmem:[%s259 + $0xea0] sm:$0xff]
        %v779 = vld [vmem:[%s259 + $0xea8] sm:$0xff]
        %v780 = vld [vmem:[%s259 + $0xeb0] sm:$0xff]
        %v781 = vld [vmem:[%s259 + $0xeb8] sm:$0xff]
        %v782 = vld [vmem:[%s259 + $0xec0] sm:$0xff]
        %v783 = vld [vmem:[%s259 + $0xec8] sm:$0xff]
        %v784 = vld [vmem:[%s259 + $0xed0] sm:$0xff]
        %v785 = vld [vmem:[%s259 + $0xed8] sm:$0xff]
        %v786 = vld [vmem:[%s259 + $0xee0] sm:$0xff]
        %v787 = vld [vmem:[%s259 + $0xee8] sm:$0xff]
        %v788 = vld [vmem:[%s259 + $0xef0] sm:$0xff]
        %v789 = vld [vmem:[%s259 + $0xef8] sm:$0xff]
        %v790 = vld [vmem:[%s259 + $0xf00] sm:$0xff]
        %v791 = vld [vmem:[%s259 + $0xf08] sm:$0xff]
        %v792 = vld [vmem:[%s259 + $0xf10] sm:$0xff]
        %v793 = vld [vmem:[%s259 + $0xf18] sm:$0xff]
        %v794 = vld [vmem:[%s259 + $0xf20] sm:$0xff]
        %v795 = vld [vmem:[%s259 + $0xf28] sm:$0xff]
        %v796 = vld [vmem:[%s259 + $0xf30] sm:$0xff]
        %v797 = vld [vmem:[%s259 + $0xf38] sm:$0xff]
        %v798 = vld [vmem:[%s259 + $0xf40] sm:$0xff]
        %v799 = vld [vmem:[%s259 + $0xf48] sm:$0xff]
        %v800 = vld [vmem:[%s259 + $0xf50] sm:$0xff]
        %v801 = vld [vmem:[%s259 + $0xf58] sm:$0xff]
        %v802 = vld [vmem:[%s259 + $0xf60] sm:$0xff]
        %v803 = vld [vmem:[%s259 + $0xf68] sm:$0xff]
        %v804 = vld [vmem:[%s259 + $0xf70] sm:$0xff]
        %v805 = vld [vmem:[%s259 + $0xf78] sm:$0xff]
        %v806 = vld [vmem:[%s259 + $0xf80] sm:$0xff]
        %v807 = vld [vmem:[%s259 + $0xf88] sm:$0xff]
        %v808 = vld [vmem:[%s259 + $0xf90] sm:$0xff]
        %v809 = vld [vmem:[%s259 + $0xf98] sm:$0xff]
        %v810 = vld [vmem:[%s259 + $0xfa0] sm:$0xff]
        %v811 = vld [vmem:[%s259 + $0xfa8] sm:$0xff]
        %v812 = vld [vmem:[%s259 + $0xfb0] sm:$0xff]
        %v813 = vld [vmem:[%s259 + $0xfb8] sm:$0xff]
        %v814 = vld [vmem:[%s259 + $0xfc0] sm:$0xff]
        %v815 = vld [vmem:[%s259 + $0xfc8] sm:$0xff]
        %v816 = vld [vmem:[%s259 + $0xfd0] sm:$0xff]
        %v817 = vld [vmem:[%s259 + $0xfd8] sm:$0xff]
        %v818 = vld [vmem:[%s259 + $0xfe0] sm:$0xff]
        %v819 = vld [vmem:[%s259 + $0xfe8] sm:$0xff]
        %v820 = vld [vmem:[%s259 + $0xff0] sm:$0xff]
        %v821 = vld [vmem:[%s259 + $0xff8] sm:$0xff]
        %v822 = vld [vmem:[%s269] ss:$4 sm:$0xff]
        %v824 = vperm.slane %v822, 0
        %v825 = vperm.slane %v822, 1
        %v826 = vperm.slane %v822, 2
        %v827 = vperm.slane %v822, 3
        %v828 = vperm.slane %v822, 4
        %v829 = vperm.slane %v822, 5
        %v830 = vperm.slane %v822, 6
        %v831 = vperm.slane %v822, 7
        %841 = vst [vmem:[#allocation1] ss:$9 sm:$0xff] %v309
        %v842 = vld [vmem:[#allocation1] sm:$0xff]
        %v843 = vld [vmem:[#allocation1 + $0x9] sm:$0xff]
        %v844 = vld [vmem:[#allocation1 + $0x12] sm:$0xff]
        %v845 = vld [vmem:[#allocation1 + $0x1b] sm:$0xff]
        %v846 = vld [vmem:[#allocation1 + $0x24] sm:$0xff]
        %v847 = vld [vmem:[#allocation1 + $0x2d] sm:$0xff]
        %v848 = vld [vmem:[#allocation1 + $0x36] sm:$0xff]
        %v849 = vld [vmem:[#allocation1 + $0x3f] sm:$0xff]
        %v1370 = vunpack.c.l.b16 %v310
        %v1371 = vunpack.c.h.b16 %v310
        %v1372 = vunpack.c.l.b16 %v311
        %v1373 = vunpack.c.h.b16 %v311
        %v1374 = vunpack.c.l.b16 %v312
        %v1375 = vunpack.c.h.b16 %v312
        %v1376 = vunpack.c.l.b16 %v313
        %v1377 = vunpack.c.h.b16 %v313
        %v1378 = vunpack.c.l.b16 %v314
        %v1379 = vunpack.c.h.b16 %v314
        %v1380 = vunpack.c.l.b16 %v315
        %v1381 = vunpack.c.h.b16 %v315
        %v1382 = vunpack.c.l.b16 %v316
        %v1383 = vunpack.c.h.b16 %v316
        %v1384 = vunpack.c.l.b16 %v317
        %v1385 = vunpack.c.h.b16 %v317
        %v1386 = vunpack.c.l.b16 %v318
        %v1387 = vunpack.c.h.b16 %v318
        %v1388 = vunpack.c.l.b16 %v319
        %v1389 = vunpack.c.h.b16 %v319
        %v1390 = vunpack.c.l.b16 %v320
        %v1391 = vunpack.c.h.b16 %v320
        %v1392 = vunpack.c.l.b16 %v321
        %v1393 = vunpack.c.h.b16 %v321
        %v1394 = vunpack.c.l.b16 %v322
        %v1395 = vunpack.c.h.b16 %v322
        %v1396 = vunpack.c.l.b16 %v323
        %v1397 = vunpack.c.h.b16 %v323
        %v1398 = vunpack.c.l.b16 %v324
        %v1399 = vunpack.c.h.b16 %v324
        %v1400 = vunpack.c.l.b16 %v325
        %v1401 = vunpack.c.h.b16 %v325
        %v1402 = vunpack.c.l.b16 %v326
        %v1403 = vunpack.c.h.b16 %v326
        %v1404 = vunpack.c.l.b16 %v327
        %v1405 = vunpack.c.h.b16 %v327
        %v1406 = vunpack.c.l.b16 %v328
        %v1407 = vunpack.c.h.b16 %v328
        %v1408 = vunpack.c.l.b16 %v329
        %v1409 = vunpack.c.h.b16 %v329
        %v1410 = vunpack.c.l.b16 %v330
        %v1411 = vunpack.c.h.b16 %v330
        %v1412 = vunpack.c.l.b16 %v331
        %v1413 = vunpack.c.h.b16 %v331
        %v1414 = vunpack.c.l.b16 %v332
        %v1415 = vunpack.c.h.b16 %v332
        %v1416 = vunpack.c.l.b16 %v333
        %v1417 = vunpack.c.h.b16 %v333
        %v1418 = vunpack.c.l.b16 %v334
        %v1419 = vunpack.c.h.b16 %v334
        %v1420 = vunpack.c.l.b16 %v335
        %v1421 = vunpack.c.h.b16 %v335
        %v1422 = vunpack.c.l.b16 %v336
        %v1423 = vunpack.c.h.b16 %v336
        %v1424 = vunpack.c.l.b16 %v337
        %v1425 = vunpack.c.h.b16 %v337
        %v1426 = vunpack.c.l.b16 %v338
        %v1427 = vunpack.c.h.b16 %v338
        %v1428 = vunpack.c.l.b16 %v339
        %v1429 = vunpack.c.h.b16 %v339
        %v1430 = vunpack.c.l.b16 %v340
        %v1431 = vunpack.c.h.b16 %v340
        %v1432 = vunpack.c.l.b16 %v341
        %v1433 = vunpack.c.h.b16 %v341
        %v1434 = vunpack.c.l.b16 %v342
        %v1435 = vunpack.c.h.b16 %v342
        %v1436 = vunpack.c.l.b16 %v343
        %v1437 = vunpack.c.h.b16 %v343
        %v1438 = vunpack.c.l.b16 %v344
        %v1439 = vunpack.c.h.b16 %v344
        %v1440 = vunpack.c.l.b16 %v345
        %v1441 = vunpack.c.h.b16 %v345
        %v1442 = vunpack.c.l.b16 %v346
        %v1443 = vunpack.c.h.b16 %v346
        %v1444 = vunpack.c.l.b16 %v347
        %v1445 = vunpack.c.h.b16 %v347
        %v1446 = vunpack.c.l.b16 %v348
        %v1447 = vunpack.c.h.b16 %v348
        %v1448 = vunpack.c.l.b16 %v349
        %v1449 = vunpack.c.h.b16 %v349
        %v1450 = vunpack.c.l.b16 %v350
        %v1451 = vunpack.c.h.b16 %v350
        %v1452 = vunpack.c.l.b16 %v351
        %v1453 = vunpack.c.h.b16 %v351
        %v1454 = vunpack.c.l.b16 %v352
        %v1455 = vunpack.c.h.b16 %v352
        %v1456 = vunpack.c.l.b16 %v353
        %v1457 = vunpack.c.h.b16 %v353
        %v1458 = vunpack.c.l.b16 %v354
        %v1459 = vunpack.c.h.b16 %v354
        %v1460 = vunpack.c.l.b16 %v355
        %v1461 = vunpack.c.h.b16 %v355
        %v1462 = vunpack.c.l.b16 %v356
        %v1463 = vunpack.c.h.b16 %v356
        %v1464 = vunpack.c.l.b16 %v357
        %v1465 = vunpack.c.h.b16 %v357
        %v1466 = vunpack.c.l.b16 %v358
        %v1467 = vunpack.c.h.b16 %v358
        %v1468 = vunpack.c.l.b16 %v359
        %v1469 = vunpack.c.h.b16 %v359
        %v1470 = vunpack.c.l.b16 %v360
        %v1471 = vunpack.c.h.b16 %v360
        %v1472 = vunpack.c.l.b16 %v361
        %v1473 = vunpack.c.h.b16 %v361
        %v1474 = vunpack.c.l.b16 %v362
        %v1475 = vunpack.c.h.b16 %v362
        %v1476 = vunpack.c.l.b16 %v363
        %v1477 = vunpack.c.h.b16 %v363
        %v1478 = vunpack.c.l.b16 %v364
        %v1479 = vunpack.c.h.b16 %v364
        %v1480 = vunpack.c.l.b16 %v365
        %v1481 = vunpack.c.h.b16 %v365
        %v1482 = vunpack.c.l.b16 %v366
        %v1483 = vunpack.c.h.b16 %v366
        %v1484 = vunpack.c.l.b16 %v367
        %v1485 = vunpack.c.h.b16 %v367
        %v1486 = vunpack.c.l.b16 %v368
        %v1487 = vunpack.c.h.b16 %v368
        %v1488 = vunpack.c.l.b16 %v369
        %v1489 = vunpack.c.h.b16 %v369
        %v1490 = vunpack.c.l.b16 %v370
        %v1491 = vunpack.c.h.b16 %v370
        %v1492 = vunpack.c.l.b16 %v371
        %v1493 = vunpack.c.h.b16 %v371
        %v1494 = vunpack.c.l.b16 %v372
        %v1495 = vunpack.c.h.b16 %v372
        %v1496 = vunpack.c.l.b16 %v373
        %v1497 = vunpack.c.h.b16 %v373
        %v1498 = vunpack.c.l.b16 %v374
        %v1499 = vunpack.c.h.b16 %v374
        %v1500 = vunpack.c.l.b16 %v375
        %v1501 = vunpack.c.h.b16 %v375
        %v1502 = vunpack.c.l.b16 %v376
        %v1503 = vunpack.c.h.b16 %v376
        %v1504 = vunpack.c.l.b16 %v377
        %v1505 = vunpack.c.h.b16 %v377
        %v1506 = vunpack.c.l.b16 %v378
        %v1507 = vunpack.c.h.b16 %v378
        %v1508 = vunpack.c.l.b16 %v379
        %v1509 = vunpack.c.h.b16 %v379
        %v1510 = vunpack.c.l.b16 %v380
        %v1511 = vunpack.c.h.b16 %v380
        %v1512 = vunpack.c.l.b16 %v381
        %v1513 = vunpack.c.h.b16 %v381
        %v1514 = vunpack.c.l.b16 %v382
        %v1515 = vunpack.c.h.b16 %v382
        %v1516 = vunpack.c.l.b16 %v383
        %v1517 = vunpack.c.h.b16 %v383
        %v1518 = vunpack.c.l.b16 %v384
        %v1519 = vunpack.c.h.b16 %v384
        %v1520 = vunpack.c.l.b16 %v385
        %v1521 = vunpack.c.h.b16 %v385
        %v1522 = vunpack.c.l.b16 %v386
        %v1523 = vunpack.c.h.b16 %v386
        %v1524 = vunpack.c.l.b16 %v387
        %v1525 = vunpack.c.h.b16 %v387
        %v1526 = vunpack.c.l.b16 %v388
        %v1527 = vunpack.c.h.b16 %v388
        %v1528 = vunpack.c.l.b16 %v389
        %v1529 = vunpack.c.h.b16 %v389
        %v1530 = vunpack.c.l.b16 %v390
        %v1531 = vunpack.c.h.b16 %v390
        %v1532 = vunpack.c.l.b16 %v391
        %v1533 = vunpack.c.h.b16 %v391
        %v1534 = vunpack.c.l.b16 %v392
        %v1535 = vunpack.c.h.b16 %v392
        %v1536 = vunpack.c.l.b16 %v393
        %v1537 = vunpack.c.h.b16 %v393
        %v1538 = vunpack.c.l.b16 %v394
        %v1539 = vunpack.c.h.b16 %v394
        %v1540 = vunpack.c.l.b16 %v395
        %v1541 = vunpack.c.h.b16 %v395
        %v1542 = vunpack.c.l.b16 %v396
        %v1543 = vunpack.c.h.b16 %v396
        %v1544 = vunpack.c.l.b16 %v397
        %v1545 = vunpack.c.h.b16 %v397
        %v1546 = vunpack.c.l.b16 %v398
        %v1547 = vunpack.c.h.b16 %v398
        %v1548 = vunpack.c.l.b16 %v399
        %v1549 = vunpack.c.h.b16 %v399
        %v1550 = vunpack.c.l.b16 %v400
        %v1551 = vunpack.c.h.b16 %v400
        %v1552 = vunpack.c.l.b16 %v401
        %v1553 = vunpack.c.h.b16 %v401
        %v1554 = vunpack.c.l.b16 %v402
        %v1555 = vunpack.c.h.b16 %v402
        %v1556 = vunpack.c.l.b16 %v403
        %v1557 = vunpack.c.h.b16 %v403
        %v1558 = vunpack.c.l.b16 %v404
        %v1559 = vunpack.c.h.b16 %v404
        %v1560 = vunpack.c.l.b16 %v405
        %v1561 = vunpack.c.h.b16 %v405
        %v1562 = vunpack.c.l.b16 %v406
        %v1563 = vunpack.c.h.b16 %v406
        %v1564 = vunpack.c.l.b16 %v407
        %v1565 = vunpack.c.h.b16 %v407
        %v1566 = vunpack.c.l.b16 %v408
        %v1567 = vunpack.c.h.b16 %v408
        %v1568 = vunpack.c.l.b16 %v409
        %v1569 = vunpack.c.h.b16 %v409
        %v1570 = vunpack.c.l.b16 %v410
        %v1571 = vunpack.c.h.b16 %v410
        %v1572 = vunpack.c.l.b16 %v411
        %v1573 = vunpack.c.h.b16 %v411
        %v1574 = vunpack.c.l.b16 %v412
        %v1575 = vunpack.c.h.b16 %v412
        %v1576 = vunpack.c.l.b16 %v413
        %v1577 = vunpack.c.h.b16 %v413
        %v1578 = vunpack.c.l.b16 %v414
        %v1579 = vunpack.c.h.b16 %v414
        %v1580 = vunpack.c.l.b16 %v415
        %v1581 = vunpack.c.h.b16 %v415
        %v1582 = vunpack.c.l.b16 %v416
        %v1583 = vunpack.c.h.b16 %v416
        %v1584 = vunpack.c.l.b16 %v417
        %v1585 = vunpack.c.h.b16 %v417
        %v1586 = vunpack.c.l.b16 %v418
        %v1587 = vunpack.c.h.b16 %v418
        %v1588 = vunpack.c.l.b16 %v419
        %v1589 = vunpack.c.h.b16 %v419
        %v1590 = vunpack.c.l.b16 %v420
        %v1591 = vunpack.c.h.b16 %v420
        %v1592 = vunpack.c.l.b16 %v421
        %v1593 = vunpack.c.h.b16 %v421
        %v1594 = vunpack.c.l.b16 %v422
        %v1595 = vunpack.c.h.b16 %v422
        %v1596 = vunpack.c.l.b16 %v423
        %v1597 = vunpack.c.h.b16 %v423
        %v1598 = vunpack.c.l.b16 %v424
        %v1599 = vunpack.c.h.b16 %v424
        %v1600 = vunpack.c.l.b16 %v425
        %v1601 = vunpack.c.h.b16 %v425
        %v1602 = vunpack.c.l.b16 %v426
        %v1603 = vunpack.c.h.b16 %v426
        %v1604 = vunpack.c.l.b16 %v427
        %v1605 = vunpack.c.h.b16 %v427
        %v1606 = vunpack.c.l.b16 %v428
        %v1607 = vunpack.c.h.b16 %v428
        %v1608 = vunpack.c.l.b16 %v429
        %v1609 = vunpack.c.h.b16 %v429
        %v1610 = vunpack.c.l.b16 %v430
        %v1611 = vunpack.c.h.b16 %v430
        %v1612 = vunpack.c.l.b16 %v431
        %v1613 = vunpack.c.h.b16 %v431
        %v1614 = vunpack.c.l.b16 %v432
        %v1615 = vunpack.c.h.b16 %v432
        %v1616 = vunpack.c.l.b16 %v433
        %v1617 = vunpack.c.h.b16 %v433
        %v1618 = vunpack.c.l.b16 %v434
        %v1619 = vunpack.c.h.b16 %v434
        %v1620 = vunpack.c.l.b16 %v435
        %v1621 = vunpack.c.h.b16 %v435
        %v1622 = vunpack.c.l.b16 %v436
        %v1623 = vunpack.c.h.b16 %v436
        %v1624 = vunpack.c.l.b16 %v437
        %v1625 = vunpack.c.h.b16 %v437
        %v1626 = vunpack.c.l.b16 %v438
        %v1627 = vunpack.c.h.b16 %v438
        %v1628 = vunpack.c.l.b16 %v439
        %v1629 = vunpack.c.h.b16 %v439
        %v1630 = vunpack.c.l.b16 %v440
        %v1631 = vunpack.c.h.b16 %v440
        %v1632 = vunpack.c.l.b16 %v441
        %v1633 = vunpack.c.h.b16 %v441
        %v1634 = vunpack.c.l.b16 %v442
        %v1635 = vunpack.c.h.b16 %v442
        %v1636 = vunpack.c.l.b16 %v443
        %v1637 = vunpack.c.h.b16 %v443
        %v1638 = vunpack.c.l.b16 %v444
        %v1639 = vunpack.c.h.b16 %v444
        %v1640 = vunpack.c.l.b16 %v445
        %v1641 = vunpack.c.h.b16 %v445
        %v1642 = vunpack.c.l.b16 %v446
        %v1643 = vunpack.c.h.b16 %v446
        %v1644 = vunpack.c.l.b16 %v447
        %v1645 = vunpack.c.h.b16 %v447
        %v1646 = vunpack.c.l.b16 %v448
        %v1647 = vunpack.c.h.b16 %v448
        %v1648 = vunpack.c.l.b16 %v449
        %v1649 = vunpack.c.h.b16 %v449
        %v1650 = vunpack.c.l.b16 %v450
        %v1651 = vunpack.c.h.b16 %v450
        %v1652 = vunpack.c.l.b16 %v451
        %v1653 = vunpack.c.h.b16 %v451
        %v1654 = vunpack.c.l.b16 %v452
        %v1655 = vunpack.c.h.b16 %v452
        %v1656 = vunpack.c.l.b16 %v453
        %v1657 = vunpack.c.h.b16 %v453
        %v1658 = vunpack.c.l.b16 %v454
        %v1659 = vunpack.c.h.b16 %v454
        %v1660 = vunpack.c.l.b16 %v455
        %v1661 = vunpack.c.h.b16 %v455
        %v1662 = vunpack.c.l.b16 %v456
        %v1663 = vunpack.c.h.b16 %v456
        %v1664 = vunpack.c.l.b16 %v457
        %v1665 = vunpack.c.h.b16 %v457
        %v1666 = vunpack.c.l.b16 %v458
        %v1667 = vunpack.c.h.b16 %v458
        %v1668 = vunpack.c.l.b16 %v459
        %v1669 = vunpack.c.h.b16 %v459
        %v1670 = vunpack.c.l.b16 %v460
        %v1671 = vunpack.c.h.b16 %v460
        %v1672 = vunpack.c.l.b16 %v461
        %v1673 = vunpack.c.h.b16 %v461
        %v1674 = vunpack.c.l.b16 %v462
        %v1675 = vunpack.c.h.b16 %v462
        %v1676 = vunpack.c.l.b16 %v463
        %v1677 = vunpack.c.h.b16 %v463
        %v1678 = vunpack.c.l.b16 %v464
        %v1679 = vunpack.c.h.b16 %v464
        %v1680 = vunpack.c.l.b16 %v465
        %v1681 = vunpack.c.h.b16 %v465
        %v1682 = vunpack.c.l.b16 %v466
        %v1683 = vunpack.c.h.b16 %v466
        %v1684 = vunpack.c.l.b16 %v467
        %v1685 = vunpack.c.h.b16 %v467
        %v1686 = vunpack.c.l.b16 %v468
        %v1687 = vunpack.c.h.b16 %v468
        %v1688 = vunpack.c.l.b16 %v469
        %v1689 = vunpack.c.h.b16 %v469
        %v1690 = vunpack.c.l.b16 %v470
        %v1691 = vunpack.c.h.b16 %v470
        %v1692 = vunpack.c.l.b16 %v471
        %v1693 = vunpack.c.h.b16 %v471
        %v1694 = vunpack.c.l.b16 %v472
        %v1695 = vunpack.c.h.b16 %v472
        %v1696 = vunpack.c.l.b16 %v473
        %v1697 = vunpack.c.h.b16 %v473
        %v1698 = vunpack.c.l.b16 %v474
        %v1699 = vunpack.c.h.b16 %v474
        %v1700 = vunpack.c.l.b16 %v475
        %v1701 = vunpack.c.h.b16 %v475
        %v1702 = vunpack.c.l.b16 %v476
        %v1703 = vunpack.c.h.b16 %v476
        %v1704 = vunpack.c.l.b16 %v477
        %v1705 = vunpack.c.h.b16 %v477
        %v1706 = vunpack.c.l.b16 %v478
        %v1707 = vunpack.c.h.b16 %v478
        %v1708 = vunpack.c.l.b16 %v479
        %v1709 = vunpack.c.h.b16 %v479
        %v1710 = vunpack.c.l.b16 %v480
        %v1711 = vunpack.c.h.b16 %v480
        %v1712 = vunpack.c.l.b16 %v481
        %v1713 = vunpack.c.h.b16 %v481
        %v1714 = vunpack.c.l.b16 %v482
        %v1715 = vunpack.c.h.b16 %v482
        %v1716 = vunpack.c.l.b16 %v483
        %v1717 = vunpack.c.h.b16 %v483
        %v1718 = vunpack.c.l.b16 %v484
        %v1719 = vunpack.c.h.b16 %v484
        %v1720 = vunpack.c.l.b16 %v485
        %v1721 = vunpack.c.h.b16 %v485
        %v1722 = vunpack.c.l.b16 %v486
        %v1723 = vunpack.c.h.b16 %v486
        %v1724 = vunpack.c.l.b16 %v487
        %v1725 = vunpack.c.h.b16 %v487
        %v1726 = vunpack.c.l.b16 %v488
        %v1727 = vunpack.c.h.b16 %v488
        %v1728 = vunpack.c.l.b16 %v489
        %v1729 = vunpack.c.h.b16 %v489
        %v1730 = vunpack.c.l.b16 %v490
        %v1731 = vunpack.c.h.b16 %v490
        %v1732 = vunpack.c.l.b16 %v491
        %v1733 = vunpack.c.h.b16 %v491
        %v1734 = vunpack.c.l.b16 %v492
        %v1735 = vunpack.c.h.b16 %v492
        %v1736 = vunpack.c.l.b16 %v493
        %v1737 = vunpack.c.h.b16 %v493
        %v1738 = vunpack.c.l.b16 %v494
        %v1739 = vunpack.c.h.b16 %v494
        %v1740 = vunpack.c.l.b16 %v495
        %v1741 = vunpack.c.h.b16 %v495
        %v1742 = vunpack.c.l.b16 %v496
        %v1743 = vunpack.c.h.b16 %v496
        %v1744 = vunpack.c.l.b16 %v497
        %v1745 = vunpack.c.h.b16 %v497
        %v1746 = vunpack.c.l.b16 %v498
        %v1747 = vunpack.c.h.b16 %v498
        %v1748 = vunpack.c.l.b16 %v499
        %v1749 = vunpack.c.h.b16 %v499
        %v1750 = vunpack.c.l.b16 %v500
        %v1751 = vunpack.c.h.b16 %v500
        %v1752 = vunpack.c.l.b16 %v501
        %v1753 = vunpack.c.h.b16 %v501
        %v1754 = vunpack.c.l.b16 %v502
        %v1755 = vunpack.c.h.b16 %v502
        %v1756 = vunpack.c.l.b16 %v503
        %v1757 = vunpack.c.h.b16 %v503
        %v1758 = vunpack.c.l.b16 %v504
        %v1759 = vunpack.c.h.b16 %v504
        %v1760 = vunpack.c.l.b16 %v505
        %v1761 = vunpack.c.h.b16 %v505
        %v1762 = vunpack.c.l.b16 %v506
        %v1763 = vunpack.c.h.b16 %v506
        %v1764 = vunpack.c.l.b16 %v507
        %v1765 = vunpack.c.h.b16 %v507
        %v1766 = vunpack.c.l.b16 %v508
        %v1767 = vunpack.c.h.b16 %v508
        %v1768 = vunpack.c.l.b16 %v509
        %v1769 = vunpack.c.h.b16 %v509
        %v1770 = vunpack.c.l.b16 %v510
        %v1771 = vunpack.c.h.b16 %v510
        %v1772 = vunpack.c.l.b16 %v511
        %v1773 = vunpack.c.h.b16 %v511
        %v1774 = vunpack.c.l.b16 %v512
        %v1775 = vunpack.c.h.b16 %v512
        %v1776 = vunpack.c.l.b16 %v513
        %v1777 = vunpack.c.h.b16 %v513
        %v1778 = vunpack.c.l.b16 %v514
        %v1779 = vunpack.c.h.b16 %v514
        %v1780 = vunpack.c.l.b16 %v515
        %v1781 = vunpack.c.h.b16 %v515
        %v1782 = vunpack.c.l.b16 %v516
        %v1783 = vunpack.c.h.b16 %v516
        %v1784 = vunpack.c.l.b16 %v517
        %v1785 = vunpack.c.h.b16 %v517
        %v1786 = vunpack.c.l.b16 %v518
        %v1787 = vunpack.c.h.b16 %v518
        %v1788 = vunpack.c.l.b16 %v519
        %v1789 = vunpack.c.h.b16 %v519
        %v1790 = vunpack.c.l.b16 %v520
        %v1791 = vunpack.c.h.b16 %v520
        %v1792 = vunpack.c.l.b16 %v521
        %v1793 = vunpack.c.h.b16 %v521
        %v1794 = vunpack.c.l.b16 %v522
        %v1795 = vunpack.c.h.b16 %v522
        %v1796 = vunpack.c.l.b16 %v523
        %v1797 = vunpack.c.h.b16 %v523
        %v1798 = vunpack.c.l.b16 %v524
        %v1799 = vunpack.c.h.b16 %v524
        %v1800 = vunpack.c.l.b16 %v525
        %v1801 = vunpack.c.h.b16 %v525
        %v1802 = vunpack.c.l.b16 %v526
        %v1803 = vunpack.c.h.b16 %v526
        %v1804 = vunpack.c.l.b16 %v527
        %v1805 = vunpack.c.h.b16 %v527
        %v1806 = vunpack.c.l.b16 %v528
        %v1807 = vunpack.c.h.b16 %v528
        %v1808 = vunpack.c.l.b16 %v529
        %v1809 = vunpack.c.h.b16 %v529
        %v1810 = vunpack.c.l.b16 %v530
        %v1811 = vunpack.c.h.b16 %v530
        %v1812 = vunpack.c.l.b16 %v531
        %v1813 = vunpack.c.h.b16 %v531
        %v1814 = vunpack.c.l.b16 %v532
        %v1815 = vunpack.c.h.b16 %v532
        %v1816 = vunpack.c.l.b16 %v533
        %v1817 = vunpack.c.h.b16 %v533
        %v1818 = vunpack.c.l.b16 %v534
        %v1819 = vunpack.c.h.b16 %v534
        %v1820 = vunpack.c.l.b16 %v535
        %v1821 = vunpack.c.h.b16 %v535
        %v1822 = vunpack.c.l.b16 %v536
        %v1823 = vunpack.c.h.b16 %v536
        %v1824 = vunpack.c.l.b16 %v537
        %v1825 = vunpack.c.h.b16 %v537
        %v1826 = vunpack.c.l.b16 %v538
        %v1827 = vunpack.c.h.b16 %v538
        %v1828 = vunpack.c.l.b16 %v539
        %v1829 = vunpack.c.h.b16 %v539
        %v1830 = vunpack.c.l.b16 %v540
        %v1831 = vunpack.c.h.b16 %v540
        %v1832 = vunpack.c.l.b16 %v541
        %v1833 = vunpack.c.h.b16 %v541
        %v1834 = vunpack.c.l.b16 %v542
        %v1835 = vunpack.c.h.b16 %v542
        %v1836 = vunpack.c.l.b16 %v543
        %v1837 = vunpack.c.h.b16 %v543
        %v1838 = vunpack.c.l.b16 %v544
        %v1839 = vunpack.c.h.b16 %v544
        %v1840 = vunpack.c.l.b16 %v545
        %v1841 = vunpack.c.h.b16 %v545
        %v1842 = vunpack.c.l.b16 %v546
        %v1843 = vunpack.c.h.b16 %v546
        %v1844 = vunpack.c.l.b16 %v547
        %v1845 = vunpack.c.h.b16 %v547
        %v1846 = vunpack.c.l.b16 %v548
        %v1847 = vunpack.c.h.b16 %v548
        %v1848 = vunpack.c.l.b16 %v549
        %v1849 = vunpack.c.h.b16 %v549
        %v1850 = vunpack.c.l.b16 %v550
        %v1851 = vunpack.c.h.b16 %v550
        %v1852 = vunpack.c.l.b16 %v551
        %v1853 = vunpack.c.h.b16 %v551
        %v1854 = vunpack.c.l.b16 %v552
        %v1855 = vunpack.c.h.b16 %v552
        %v1856 = vunpack.c.l.b16 %v553
        %v1857 = vunpack.c.h.b16 %v553
        %v1858 = vunpack.c.l.b16 %v554
        %v1859 = vunpack.c.h.b16 %v554
        %v1860 = vunpack.c.l.b16 %v555
        %v1861 = vunpack.c.h.b16 %v555
        %v1862 = vunpack.c.l.b16 %v556
        %v1863 = vunpack.c.h.b16 %v556
        %v1864 = vunpack.c.l.b16 %v557
        %v1865 = vunpack.c.h.b16 %v557
        %v1866 = vunpack.c.l.b16 %v558
        %v1867 = vunpack.c.h.b16 %v558
        %v1868 = vunpack.c.l.b16 %v559
        %v1869 = vunpack.c.h.b16 %v559
        %v1870 = vunpack.c.l.b16 %v560
        %v1871 = vunpack.c.h.b16 %v560
        %v1872 = vunpack.c.l.b16 %v561
        %v1873 = vunpack.c.h.b16 %v561
        %v1874 = vunpack.c.l.b16 %v562
        %v1875 = vunpack.c.h.b16 %v562
        %v1876 = vunpack.c.l.b16 %v563
        %v1877 = vunpack.c.h.b16 %v563
        %v1878 = vunpack.c.l.b16 %v564
        %v1879 = vunpack.c.h.b16 %v564
        %v1880 = vunpack.c.l.b16 %v565
        %v1881 = vunpack.c.h.b16 %v565
        %v1882 = vunpack.c.l.b16 %v566
        %v1883 = vunpack.c.h.b16 %v566
        %v1884 = vunpack.c.l.b16 %v567
        %v1885 = vunpack.c.h.b16 %v567
        %v1886 = vunpack.c.l.b16 %v568
        %v1887 = vunpack.c.h.b16 %v568
        %v1888 = vunpack.c.l.b16 %v569
        %v1889 = vunpack.c.h.b16 %v569
        %v1890 = vunpack.c.l.b16 %v570
        %v1891 = vunpack.c.h.b16 %v570
        %v1892 = vunpack.c.l.b16 %v571
        %v1893 = vunpack.c.h.b16 %v571
        %v1894 = vunpack.c.l.b16 %v572
        %v1895 = vunpack.c.h.b16 %v572
        %v1896 = vunpack.c.l.b16 %v573
        %v1897 = vunpack.c.h.b16 %v573
        %v1898 = vunpack.c.l.b16 %v574
        %v1899 = vunpack.c.h.b16 %v574
        %v1900 = vunpack.c.l.b16 %v575
        %v1901 = vunpack.c.h.b16 %v575
        %v1902 = vunpack.c.l.b16 %v576
        %v1903 = vunpack.c.h.b16 %v576
        %v1904 = vunpack.c.l.b16 %v577
        %v1905 = vunpack.c.h.b16 %v577
        %v1906 = vunpack.c.l.b16 %v578
        %v1907 = vunpack.c.h.b16 %v578
        %v1908 = vunpack.c.l.b16 %v579
        %v1909 = vunpack.c.h.b16 %v579
        %v1910 = vunpack.c.l.b16 %v580
        %v1911 = vunpack.c.h.b16 %v580
        %v1912 = vunpack.c.l.b16 %v581
        %v1913 = vunpack.c.h.b16 %v581
        %v1914 = vunpack.c.l.b16 %v582
        %v1915 = vunpack.c.h.b16 %v582
        %v1916 = vunpack.c.l.b16 %v583
        %v1917 = vunpack.c.h.b16 %v583
        %v1918 = vunpack.c.l.b16 %v584
        %v1919 = vunpack.c.h.b16 %v584
        %v1920 = vunpack.c.l.b16 %v585
        %v1921 = vunpack.c.h.b16 %v585
        %v1922 = vunpack.c.l.b16 %v586
        %v1923 = vunpack.c.h.b16 %v586
        %v1924 = vunpack.c.l.b16 %v587
        %v1925 = vunpack.c.h.b16 %v587
        %v1926 = vunpack.c.l.b16 %v588
        %v1927 = vunpack.c.h.b16 %v588
        %v1928 = vunpack.c.l.b16 %v589
        %v1929 = vunpack.c.h.b16 %v589
        %v1930 = vunpack.c.l.b16 %v590
        %v1931 = vunpack.c.h.b16 %v590
        %v1932 = vunpack.c.l.b16 %v591
        %v1933 = vunpack.c.h.b16 %v591
        %v1934 = vunpack.c.l.b16 %v592
        %v1935 = vunpack.c.h.b16 %v592
        %v1936 = vunpack.c.l.b16 %v593
        %v1937 = vunpack.c.h.b16 %v593
        %v1938 = vunpack.c.l.b16 %v594
        %v1939 = vunpack.c.h.b16 %v594
        %v1940 = vunpack.c.l.b16 %v595
        %v1941 = vunpack.c.h.b16 %v595
        %v1942 = vunpack.c.l.b16 %v596
        %v1943 = vunpack.c.h.b16 %v596
        %v1944 = vunpack.c.l.b16 %v597
        %v1945 = vunpack.c.h.b16 %v597
        %v1946 = vunpack.c.l.b16 %v598
        %v1947 = vunpack.c.h.b16 %v598
        %v1948 = vunpack.c.l.b16 %v599
        %v1949 = vunpack.c.h.b16 %v599
        %v1950 = vunpack.c.l.b16 %v600
        %v1951 = vunpack.c.h.b16 %v600
        %v1952 = vunpack.c.l.b16 %v601
        %v1953 = vunpack.c.h.b16 %v601
        %v1954 = vunpack.c.l.b16 %v602
        %v1955 = vunpack.c.h.b16 %v602
        %v1956 = vunpack.c.l.b16 %v603
        %v1957 = vunpack.c.h.b16 %v603
        %v1958 = vunpack.c.l.b16 %v604
        %v1959 = vunpack.c.h.b16 %v604
        %v1960 = vunpack.c.l.b16 %v605
        %v1961 = vunpack.c.h.b16 %v605
        %v1962 = vunpack.c.l.b16 %v606
        %v1963 = vunpack.c.h.b16 %v606
        %v1964 = vunpack.c.l.b16 %v607
        %v1965 = vunpack.c.h.b16 %v607
        %v1966 = vunpack.c.l.b16 %v608
        %v1967 = vunpack.c.h.b16 %v608
        %v1968 = vunpack.c.l.b16 %v609
        %v1969 = vunpack.c.h.b16 %v609
        %v1970 = vunpack.c.l.b16 %v610
        %v1971 = vunpack.c.h.b16 %v610
        %v1972 = vunpack.c.l.b16 %v611
        %v1973 = vunpack.c.h.b16 %v611
        %v1974 = vunpack.c.l.b16 %v612
        %v1975 = vunpack.c.h.b16 %v612
        %v1976 = vunpack.c.l.b16 %v613
        %v1977 = vunpack.c.h.b16 %v613
        %v1978 = vunpack.c.l.b16 %v614
        %v1979 = vunpack.c.h.b16 %v614
        %v1980 = vunpack.c.l.b16 %v615
        %v1981 = vunpack.c.h.b16 %v615
        %v1982 = vunpack.c.l.b16 %v616
        %v1983 = vunpack.c.h.b16 %v616
        %v1984 = vunpack.c.l.b16 %v617
        %v1985 = vunpack.c.h.b16 %v617
        %v1986 = vunpack.c.l.b16 %v618
        %v1987 = vunpack.c.h.b16 %v618
        %v1988 = vunpack.c.l.b16 %v619
        %v1989 = vunpack.c.h.b16 %v619
        %v1990 = vunpack.c.l.b16 %v620
        %v1991 = vunpack.c.h.b16 %v620
        %v1992 = vunpack.c.l.b16 %v621
        %v1993 = vunpack.c.h.b16 %v621
        %v1994 = vunpack.c.l.b16 %v622
        %v1995 = vunpack.c.h.b16 %v622
        %v1996 = vunpack.c.l.b16 %v623
        %v1997 = vunpack.c.h.b16 %v623
        %v1998 = vunpack.c.l.b16 %v624
        %v1999 = vunpack.c.h.b16 %v624
        %v2000 = vunpack.c.l.b16 %v625
        %v2001 = vunpack.c.h.b16 %v625
        %v2002 = vunpack.c.l.b16 %v626
        %v2003 = vunpack.c.h.b16 %v626
        %v2004 = vunpack.c.l.b16 %v627
        %v2005 = vunpack.c.h.b16 %v627
        %v2006 = vunpack.c.l.b16 %v628
        %v2007 = vunpack.c.h.b16 %v628
        %v2008 = vunpack.c.l.b16 %v629
        %v2009 = vunpack.c.h.b16 %v629
        %v2010 = vunpack.c.l.b16 %v630
        %v2011 = vunpack.c.h.b16 %v630
        %v2012 = vunpack.c.l.b16 %v631
        %v2013 = vunpack.c.h.b16 %v631
        %v2014 = vunpack.c.l.b16 %v632
        %v2015 = vunpack.c.h.b16 %v632
        %v2016 = vunpack.c.l.b16 %v633
        %v2017 = vunpack.c.h.b16 %v633
        %v2018 = vunpack.c.l.b16 %v634
        %v2019 = vunpack.c.h.b16 %v634
        %v2020 = vunpack.c.l.b16 %v635
        %v2021 = vunpack.c.h.b16 %v635
        %v2022 = vunpack.c.l.b16 %v636
        %v2023 = vunpack.c.h.b16 %v636
        %v2024 = vunpack.c.l.b16 %v637
        %v2025 = vunpack.c.h.b16 %v637
        %v2026 = vunpack.c.l.b16 %v638
        %v2027 = vunpack.c.h.b16 %v638
        %v2028 = vunpack.c.l.b16 %v639
        %v2029 = vunpack.c.h.b16 %v639
        %v2030 = vunpack.c.l.b16 %v640
        %v2031 = vunpack.c.h.b16 %v640
        %v2032 = vunpack.c.l.b16 %v641
        %v2033 = vunpack.c.h.b16 %v641
        %v2034 = vunpack.c.l.b16 %v642
        %v2035 = vunpack.c.h.b16 %v642
        %v2036 = vunpack.c.l.b16 %v643
        %v2037 = vunpack.c.h.b16 %v643
        %v2038 = vunpack.c.l.b16 %v644
        %v2039 = vunpack.c.h.b16 %v644
        %v2040 = vunpack.c.l.b16 %v645
        %v2041 = vunpack.c.h.b16 %v645
        %v2042 = vunpack.c.l.b16 %v646
        %v2043 = vunpack.c.h.b16 %v646
        %v2044 = vunpack.c.l.b16 %v647
        %v2045 = vunpack.c.h.b16 %v647
        %v2046 = vunpack.c.l.b16 %v648
        %v2047 = vunpack.c.h.b16 %v648
        %v2048 = vunpack.c.l.b16 %v649
        %v2049 = vunpack.c.h.b16 %v649
        %v2050 = vunpack.c.l.b16 %v650
        %v2051 = vunpack.c.h.b16 %v650
        %v2052 = vunpack.c.l.b16 %v651
        %v2053 = vunpack.c.h.b16 %v651
        %v2054 = vunpack.c.l.b16 %v652
        %v2055 = vunpack.c.h.b16 %v652
        %v2056 = vunpack.c.l.b16 %v653
        %v2057 = vunpack.c.h.b16 %v653
        %v2058 = vunpack.c.l.b16 %v654
        %v2059 = vunpack.c.h.b16 %v654
        %v2060 = vunpack.c.l.b16 %v655
        %v2061 = vunpack.c.h.b16 %v655
        %v2062 = vunpack.c.l.b16 %v656
        %v2063 = vunpack.c.h.b16 %v656
        %v2064 = vunpack.c.l.b16 %v657
        %v2065 = vunpack.c.h.b16 %v657
        %v2066 = vunpack.c.l.b16 %v658
        %v2067 = vunpack.c.h.b16 %v658
        %v2068 = vunpack.c.l.b16 %v659
        %v2069 = vunpack.c.h.b16 %v659
        %v2070 = vunpack.c.l.b16 %v660
        %v2071 = vunpack.c.h.b16 %v660
        %v2072 = vunpack.c.l.b16 %v661
        %v2073 = vunpack.c.h.b16 %v661
        %v2074 = vunpack.c.l.b16 %v662
        %v2075 = vunpack.c.h.b16 %v662
        %v2076 = vunpack.c.l.b16 %v663
        %v2077 = vunpack.c.h.b16 %v663
        %v2078 = vunpack.c.l.b16 %v664
        %v2079 = vunpack.c.h.b16 %v664
        %v2080 = vunpack.c.l.b16 %v665
        %v2081 = vunpack.c.h.b16 %v665
        %v2082 = vunpack.c.l.b16 %v666
        %v2083 = vunpack.c.h.b16 %v666
        %v2084 = vunpack.c.l.b16 %v667
        %v2085 = vunpack.c.h.b16 %v667
        %v2086 = vunpack.c.l.b16 %v668
        %v2087 = vunpack.c.h.b16 %v668
        %v2088 = vunpack.c.l.b16 %v669
        %v2089 = vunpack.c.h.b16 %v669
        %v2090 = vunpack.c.l.b16 %v670
        %v2091 = vunpack.c.h.b16 %v670
        %v2092 = vunpack.c.l.b16 %v671
        %v2093 = vunpack.c.h.b16 %v671
        %v2094 = vunpack.c.l.b16 %v672
        %v2095 = vunpack.c.h.b16 %v672
        %v2096 = vunpack.c.l.b16 %v673
        %v2097 = vunpack.c.h.b16 %v673
        %v2098 = vunpack.c.l.b16 %v674
        %v2099 = vunpack.c.h.b16 %v674
        %v2100 = vunpack.c.l.b16 %v675
        %v2101 = vunpack.c.h.b16 %v675
        %v2102 = vunpack.c.l.b16 %v676
        %v2103 = vunpack.c.h.b16 %v676
        %v2104 = vunpack.c.l.b16 %v677
        %v2105 = vunpack.c.h.b16 %v677
        %v2106 = vunpack.c.l.b16 %v678
        %v2107 = vunpack.c.h.b16 %v678
        %v2108 = vunpack.c.l.b16 %v679
        %v2109 = vunpack.c.h.b16 %v679
        %v2110 = vunpack.c.l.b16 %v680
        %v2111 = vunpack.c.h.b16 %v680
        %v2112 = vunpack.c.l.b16 %v681
        %v2113 = vunpack.c.h.b16 %v681
        %v2114 = vunpack.c.l.b16 %v682
        %v2115 = vunpack.c.h.b16 %v682
        %v2116 = vunpack.c.l.b16 %v683
        %v2117 = vunpack.c.h.b16 %v683
        %v2118 = vunpack.c.l.b16 %v684
        %v2119 = vunpack.c.h.b16 %v684
        %v2120 = vunpack.c.l.b16 %v685
        %v2121 = vunpack.c.h.b16 %v685
        %v2122 = vunpack.c.l.b16 %v686
        %v2123 = vunpack.c.h.b16 %v686
        %v2124 = vunpack.c.l.b16 %v687
        %v2125 = vunpack.c.h.b16 %v687
        %v2126 = vunpack.c.l.b16 %v688
        %v2127 = vunpack.c.h.b16 %v688
        %v2128 = vunpack.c.l.b16 %v689
        %v2129 = vunpack.c.h.b16 %v689
        %v2130 = vunpack.c.l.b16 %v690
        %v2131 = vunpack.c.h.b16 %v690
        %v2132 = vunpack.c.l.b16 %v691
        %v2133 = vunpack.c.h.b16 %v691
        %v2134 = vunpack.c.l.b16 %v692
        %v2135 = vunpack.c.h.b16 %v692
        %v2136 = vunpack.c.l.b16 %v693
        %v2137 = vunpack.c.h.b16 %v693
        %v2138 = vunpack.c.l.b16 %v694
        %v2139 = vunpack.c.h.b16 %v694
        %v2140 = vunpack.c.l.b16 %v695
        %v2141 = vunpack.c.h.b16 %v695
        %v2142 = vunpack.c.l.b16 %v696
        %v2143 = vunpack.c.h.b16 %v696
        %v2144 = vunpack.c.l.b16 %v697
        %v2145 = vunpack.c.h.b16 %v697
        %v2146 = vunpack.c.l.b16 %v698
        %v2147 = vunpack.c.h.b16 %v698
        %v2148 = vunpack.c.l.b16 %v699
        %v2149 = vunpack.c.h.b16 %v699
        %v2150 = vunpack.c.l.b16 %v700
        %v2151 = vunpack.c.h.b16 %v700
        %v2152 = vunpack.c.l.b16 %v701
        %v2153 = vunpack.c.h.b16 %v701
        %v2154 = vunpack.c.l.b16 %v702
        %v2155 = vunpack.c.h.b16 %v702
        %v2156 = vunpack.c.l.b16 %v703
        %v2157 = vunpack.c.h.b16 %v703
        %v2158 = vunpack.c.l.b16 %v704
        %v2159 = vunpack.c.h.b16 %v704
        %v2160 = vunpack.c.l.b16 %v705
        %v2161 = vunpack.c.h.b16 %v705
        %v2162 = vunpack.c.l.b16 %v706
        %v2163 = vunpack.c.h.b16 %v706
        %v2164 = vunpack.c.l.b16 %v707
        %v2165 = vunpack.c.h.b16 %v707
        %v2166 = vunpack.c.l.b16 %v708
        %v2167 = vunpack.c.h.b16 %v708
        %v2168 = vunpack.c.l.b16 %v709
        %v2169 = vunpack.c.h.b16 %v709
        %v2170 = vunpack.c.l.b16 %v710
        %v2171 = vunpack.c.h.b16 %v710
        %v2172 = vunpack.c.l.b16 %v711
        %v2173 = vunpack.c.h.b16 %v711
        %v2174 = vunpack.c.l.b16 %v712
        %v2175 = vunpack.c.h.b16 %v712
        %v2176 = vunpack.c.l.b16 %v713
        %v2177 = vunpack.c.h.b16 %v713
        %v2178 = vunpack.c.l.b16 %v714
        %v2179 = vunpack.c.h.b16 %v714
        %v2180 = vunpack.c.l.b16 %v715
        %v2181 = vunpack.c.h.b16 %v715
        %v2182 = vunpack.c.l.b16 %v716
        %v2183 = vunpack.c.h.b16 %v716
        %v2184 = vunpack.c.l.b16 %v717
        %v2185 = vunpack.c.h.b16 %v717
        %v2186 = vunpack.c.l.b16 %v718
        %v2187 = vunpack.c.h.b16 %v718
        %v2188 = vunpack.c.l.b16 %v719
        %v2189 = vunpack.c.h.b16 %v719
        %v2190 = vunpack.c.l.b16 %v720
        %v2191 = vunpack.c.h.b16 %v720
        %v2192 = vunpack.c.l.b16 %v721
        %v2193 = vunpack.c.h.b16 %v721
        %v2194 = vunpack.c.l.b16 %v722
        %v2195 = vunpack.c.h.b16 %v722
        %v2196 = vunpack.c.l.b16 %v723
        %v2197 = vunpack.c.h.b16 %v723
        %v2198 = vunpack.c.l.b16 %v724
        %v2199 = vunpack.c.h.b16 %v724
        %v2200 = vunpack.c.l.b16 %v725
        %v2201 = vunpack.c.h.b16 %v725
        %v2202 = vunpack.c.l.b16 %v726
        %v2203 = vunpack.c.h.b16 %v726
        %v2204 = vunpack.c.l.b16 %v727
        %v2205 = vunpack.c.h.b16 %v727
        %v2206 = vunpack.c.l.b16 %v728
        %v2207 = vunpack.c.h.b16 %v728
        %v2208 = vunpack.c.l.b16 %v729
        %v2209 = vunpack.c.h.b16 %v729
        %v2210 = vunpack.c.l.b16 %v730
        %v2211 = vunpack.c.h.b16 %v730
        %v2212 = vunpack.c.l.b16 %v731
        %v2213 = vunpack.c.h.b16 %v731
        %v2214 = vunpack.c.l.b16 %v732
        %v2215 = vunpack.c.h.b16 %v732
        %v2216 = vunpack.c.l.b16 %v733
        %v2217 = vunpack.c.h.b16 %v733
        %v2218 = vunpack.c.l.b16 %v734
        %v2219 = vunpack.c.h.b16 %v734
        %v2220 = vunpack.c.l.b16 %v735
        %v2221 = vunpack.c.h.b16 %v735
        %v2222 = vunpack.c.l.b16 %v736
        %v2223 = vunpack.c.h.b16 %v736
        %v2224 = vunpack.c.l.b16 %v737
        %v2225 = vunpack.c.h.b16 %v737
        %v2226 = vunpack.c.l.b16 %v738
        %v2227 = vunpack.c.h.b16 %v738
        %v2228 = vunpack.c.l.b16 %v739
        %v2229 = vunpack.c.h.b16 %v739
        %v2230 = vunpack.c.l.b16 %v740
        %v2231 = vunpack.c.h.b16 %v740
        %v2232 = vunpack.c.l.b16 %v741
        %v2233 = vunpack.c.h.b16 %v741
        %v2234 = vunpack.c.l.b16 %v742
        %v2235 = vunpack.c.h.b16 %v742
        %v2236 = vunpack.c.l.b16 %v743
        %v2237 = vunpack.c.h.b16 %v743
        %v2238 = vunpack.c.l.b16 %v744
        %v2239 = vunpack.c.h.b16 %v744
        %v2240 = vunpack.c.l.b16 %v745
        %v2241 = vunpack.c.h.b16 %v745
        %v2242 = vunpack.c.l.b16 %v746
        %v2243 = vunpack.c.h.b16 %v746
        %v2244 = vunpack.c.l.b16 %v747
        %v2245 = vunpack.c.h.b16 %v747
        %v2246 = vunpack.c.l.b16 %v748
        %v2247 = vunpack.c.h.b16 %v748
        %v2248 = vunpack.c.l.b16 %v749
        %v2249 = vunpack.c.h.b16 %v749
        %v2250 = vunpack.c.l.b16 %v750
        %v2251 = vunpack.c.h.b16 %v750
        %v2252 = vunpack.c.l.b16 %v751
        %v2253 = vunpack.c.h.b16 %v751
        %v2254 = vunpack.c.l.b16 %v752
        %v2255 = vunpack.c.h.b16 %v752
        %v2256 = vunpack.c.l.b16 %v753
        %v2257 = vunpack.c.h.b16 %v753
        %v2258 = vunpack.c.l.b16 %v754
        %v2259 = vunpack.c.h.b16 %v754
        %v2260 = vunpack.c.l.b16 %v755
        %v2261 = vunpack.c.h.b16 %v755
        %v2262 = vunpack.c.l.b16 %v756
        %v2263 = vunpack.c.h.b16 %v756
        %v2264 = vunpack.c.l.b16 %v757
        %v2265 = vunpack.c.h.b16 %v757
        %v2266 = vunpack.c.l.b16 %v758
        %v2267 = vunpack.c.h.b16 %v758
        %v2268 = vunpack.c.l.b16 %v759
        %v2269 = vunpack.c.h.b16 %v759
        %v2270 = vunpack.c.l.b16 %v760
        %v2271 = vunpack.c.h.b16 %v760
        %v2272 = vunpack.c.l.b16 %v761
        %v2273 = vunpack.c.h.b16 %v761
        %v2274 = vunpack.c.l.b16 %v762
        %v2275 = vunpack.c.h.b16 %v762
        %v2276 = vunpack.c.l.b16 %v763
        %v2277 = vunpack.c.h.b16 %v763
        %v2278 = vunpack.c.l.b16 %v764
        %v2279 = vunpack.c.h.b16 %v764
        %v2280 = vunpack.c.l.b16 %v765
        %v2281 = vunpack.c.h.b16 %v765
        %v2282 = vunpack.c.l.b16 %v766
        %v2283 = vunpack.c.h.b16 %v766
        %v2284 = vunpack.c.l.b16 %v767
        %v2285 = vunpack.c.h.b16 %v767
        %v2286 = vunpack.c.l.b16 %v768
        %v2287 = vunpack.c.h.b16 %v768
        %v2288 = vunpack.c.l.b16 %v769
        %v2289 = vunpack.c.h.b16 %v769
        %v2290 = vunpack.c.l.b16 %v770
        %v2291 = vunpack.c.h.b16 %v770
        %v2292 = vunpack.c.l.b16 %v771
        %v2293 = vunpack.c.h.b16 %v771
        %v2294 = vunpack.c.l.b16 %v772
        %v2295 = vunpack.c.h.b16 %v772
        %v2296 = vunpack.c.l.b16 %v773
        %v2297 = vunpack.c.h.b16 %v773
        %v2298 = vunpack.c.l.b16 %v774
        %v2299 = vunpack.c.h.b16 %v774
        %v2300 = vunpack.c.l.b16 %v775
        %v2301 = vunpack.c.h.b16 %v775
        %v2302 = vunpack.c.l.b16 %v776
        %v2303 = vunpack.c.h.b16 %v776
        %v2304 = vunpack.c.l.b16 %v777
        %v2305 = vunpack.c.h.b16 %v777
        %v2306 = vunpack.c.l.b16 %v778
        %v2307 = vunpack.c.h.b16 %v778
        %v2308 = vunpack.c.l.b16 %v779
        %v2309 = vunpack.c.h.b16 %v779
        %v2310 = vunpack.c.l.b16 %v780
        %v2311 = vunpack.c.h.b16 %v780
        %v2312 = vunpack.c.l.b16 %v781
        %v2313 = vunpack.c.h.b16 %v781
        %v2314 = vunpack.c.l.b16 %v782
        %v2315 = vunpack.c.h.b16 %v782
        %v2316 = vunpack.c.l.b16 %v783
        %v2317 = vunpack.c.h.b16 %v783
        %v2318 = vunpack.c.l.b16 %v784
        %v2319 = vunpack.c.h.b16 %v784
        %v2320 = vunpack.c.l.b16 %v785
        %v2321 = vunpack.c.h.b16 %v785
        %v2322 = vunpack.c.l.b16 %v786
        %v2323 = vunpack.c.h.b16 %v786
        %v2324 = vunpack.c.l.b16 %v787
        %v2325 = vunpack.c.h.b16 %v787
        %v2326 = vunpack.c.l.b16 %v788
        %v2327 = vunpack.c.h.b16 %v788
        %v2328 = vunpack.c.l.b16 %v789
        %v2329 = vunpack.c.h.b16 %v789
        %v2330 = vunpack.c.l.b16 %v790
        %v2331 = vunpack.c.h.b16 %v790
        %v2332 = vunpack.c.l.b16 %v791
        %v2333 = vunpack.c.h.b16 %v791
        %v2334 = vunpack.c.l.b16 %v792
        %v2335 = vunpack.c.h.b16 %v792
        %v2336 = vunpack.c.l.b16 %v793
        %v2337 = vunpack.c.h.b16 %v793
        %v2338 = vunpack.c.l.b16 %v794
        %v2339 = vunpack.c.h.b16 %v794
        %v2340 = vunpack.c.l.b16 %v795
        %v2341 = vunpack.c.h.b16 %v795
        %v2342 = vunpack.c.l.b16 %v796
        %v2343 = vunpack.c.h.b16 %v796
        %v2344 = vunpack.c.l.b16 %v797
        %v2345 = vunpack.c.h.b16 %v797
        %v2346 = vunpack.c.l.b16 %v798
        %v2347 = vunpack.c.h.b16 %v798
        %v2348 = vunpack.c.l.b16 %v799
        %v2349 = vunpack.c.h.b16 %v799
        %v2350 = vunpack.c.l.b16 %v800
        %v2351 = vunpack.c.h.b16 %v800
        %v2352 = vunpack.c.l.b16 %v801
        %v2353 = vunpack.c.h.b16 %v801
        %v2354 = vunpack.c.l.b16 %v802
        %v2355 = vunpack.c.h.b16 %v802
        %v2356 = vunpack.c.l.b16 %v803
        %v2357 = vunpack.c.h.b16 %v803
        %v2358 = vunpack.c.l.b16 %v804
        %v2359 = vunpack.c.h.b16 %v804
        %v2360 = vunpack.c.l.b16 %v805
        %v2361 = vunpack.c.h.b16 %v805
        %v2362 = vunpack.c.l.b16 %v806
        %v2363 = vunpack.c.h.b16 %v806
        %v2364 = vunpack.c.l.b16 %v807
        %v2365 = vunpack.c.h.b16 %v807
        %v2366 = vunpack.c.l.b16 %v808
        %v2367 = vunpack.c.h.b16 %v808
        %v2368 = vunpack.c.l.b16 %v809
        %v2369 = vunpack.c.h.b16 %v809
        %v2370 = vunpack.c.l.b16 %v810
        %v2371 = vunpack.c.h.b16 %v810
        %v2372 = vunpack.c.l.b16 %v811
        %v2373 = vunpack.c.h.b16 %v811
        %v2374 = vunpack.c.l.b16 %v812
        %v2375 = vunpack.c.h.b16 %v812
        %v2376 = vunpack.c.l.b16 %v813
        %v2377 = vunpack.c.h.b16 %v813
        %v2378 = vunpack.c.l.b16 %v814
        %v2379 = vunpack.c.h.b16 %v814
        %v2380 = vunpack.c.l.b16 %v815
        %v2381 = vunpack.c.h.b16 %v815
        %v2382 = vunpack.c.l.b16 %v816
        %v2383 = vunpack.c.h.b16 %v816
        %v2384 = vunpack.c.l.b16 %v817
        %v2385 = vunpack.c.h.b16 %v817
        %v2386 = vunpack.c.l.b16 %v818
        %v2387 = vunpack.c.h.b16 %v818
        %v2388 = vunpack.c.l.b16 %v819
        %v2389 = vunpack.c.h.b16 %v819
        %v2390 = vunpack.c.l.b16 %v820
        %v2391 = vunpack.c.h.b16 %v820
        %v2392 = vunpack.c.l.b16 %v821
        %v2393 = vunpack.c.h.b16 %v821
        %v2394 = vpack.c.b16 %v1378, %v1370
        %v2395 = vpack.c.b16 %v1379, %v1371
        %v2396 = vpack.c.b16 %v1380, %v1372
        %v2397 = vpack.c.b16 %v1381, %v1373
        %v2398 = vpack.c.b16 %v1382, %v1374
        %v2399 = vpack.c.b16 %v1383, %v1375
        %v2400 = vpack.c.b16 %v1384, %v1376
        %v2401 = vpack.c.b16 %v1385, %v1377
        %v2402 = vpack.c.b16 %v1394, %v1386
        %v2403 = vpack.c.b16 %v1395, %v1387
        %v2404 = vpack.c.b16 %v1396, %v1388
        %v2405 = vpack.c.b16 %v1397, %v1389
        %v2406 = vpack.c.b16 %v1398, %v1390
        %v2407 = vpack.c.b16 %v1399, %v1391
        %v2408 = vpack.c.b16 %v1400, %v1392
        %v2409 = vpack.c.b16 %v1401, %v1393
        %v2410 = vpack.c.b16 %v1410, %v1402
        %v2411 = vpack.c.b16 %v1411, %v1403
        %v2412 = vpack.c.b16 %v1412, %v1404
        %v2413 = vpack.c.b16 %v1413, %v1405
        %v2414 = vpack.c.b16 %v1414, %v1406
        %v2415 = vpack.c.b16 %v1415, %v1407
        %v2416 = vpack.c.b16 %v1416, %v1408
        %v2417 = vpack.c.b16 %v1417, %v1409
        %v2418 = vpack.c.b16 %v1426, %v1418
        %v2419 = vpack.c.b16 %v1427, %v1419
        %v2420 = vpack.c.b16 %v1428, %v1420
        %v2421 = vpack.c.b16 %v1429, %v1421
        %v2422 = vpack.c.b16 %v1430, %v1422
        %v2423 = vpack.c.b16 %v1431, %v1423
        %v2424 = vpack.c.b16 %v1432, %v1424
        %v2425 = vpack.c.b16 %v1433, %v1425
        %v2426 = vpack.c.b16 %v1442, %v1434
        %v2427 = vpack.c.b16 %v1443, %v1435
        %v2428 = vpack.c.b16 %v1444, %v1436
        %v2429 = vpack.c.b16 %v1445, %v1437
        %v2430 = vpack.c.b16 %v1446, %v1438
        %v2431 = vpack.c.b16 %v1447, %v1439
        %v2432 = vpack.c.b16 %v1448, %v1440
        %v2433 = vpack.c.b16 %v1449, %v1441
        %v2434 = vpack.c.b16 %v1458, %v1450
        %v2435 = vpack.c.b16 %v1459, %v1451
        %v2436 = vpack.c.b16 %v1460, %v1452
        %v2437 = vpack.c.b16 %v1461, %v1453
        %v2438 = vpack.c.b16 %v1462, %v1454
        %v2439 = vpack.c.b16 %v1463, %v1455
        %v2440 = vpack.c.b16 %v1464, %v1456
        %v2441 = vpack.c.b16 %v1465, %v1457
        %v2442 = vpack.c.b16 %v1474, %v1466
        %v2443 = vpack.c.b16 %v1475, %v1467
        %v2444 = vpack.c.b16 %v1476, %v1468
        %v2445 = vpack.c.b16 %v1477, %v1469
        %v2446 = vpack.c.b16 %v1478, %v1470
        %v2447 = vpack.c.b16 %v1479, %v1471
        %v2448 = vpack.c.b16 %v1480, %v1472
        %v2449 = vpack.c.b16 %v1481, %v1473
        %v2450 = vpack.c.b16 %v1490, %v1482
        %v2451 = vpack.c.b16 %v1491, %v1483
        %v2452 = vpack.c.b16 %v1492, %v1484
        %v2453 = vpack.c.b16 %v1493, %v1485
        %v2454 = vpack.c.b16 %v1494, %v1486
        %v2455 = vpack.c.b16 %v1495, %v1487
        %v2456 = vpack.c.b16 %v1496, %v1488
        %v2457 = vpack.c.b16 %v1497, %v1489
        %v2458 = vpack.c.b16 %v1506, %v1498
        %v2459 = vpack.c.b16 %v1507, %v1499
        %v2460 = vpack.c.b16 %v1508, %v1500
        %v2461 = vpack.c.b16 %v1509, %v1501
        %v2462 = vpack.c.b16 %v1510, %v1502
        %v2463 = vpack.c.b16 %v1511, %v1503
        %v2464 = vpack.c.b16 %v1512, %v1504
        %v2465 = vpack.c.b16 %v1513, %v1505
        %v2466 = vpack.c.b16 %v1522, %v1514
        %v2467 = vpack.c.b16 %v1523, %v1515
        %v2468 = vpack.c.b16 %v1524, %v1516
        %v2469 = vpack.c.b16 %v1525, %v1517
        %v2470 = vpack.c.b16 %v1526, %v1518
        %v2471 = vpack.c.b16 %v1527, %v1519
        %v2472 = vpack.c.b16 %v1528, %v1520
        %v2473 = vpack.c.b16 %v1529, %v1521
        %v2474 = vpack.c.b16 %v1538, %v1530
        %v2475 = vpack.c.b16 %v1539, %v1531
        %v2476 = vpack.c.b16 %v1540, %v1532
        %v2477 = vpack.c.b16 %v1541, %v1533
        %v2478 = vpack.c.b16 %v1542, %v1534
        %v2479 = vpack.c.b16 %v1543, %v1535
        %v2480 = vpack.c.b16 %v1544, %v1536
        %v2481 = vpack.c.b16 %v1545, %v1537
        %v2482 = vpack.c.b16 %v1554, %v1546
        %v2483 = vpack.c.b16 %v1555, %v1547
        %v2484 = vpack.c.b16 %v1556, %v1548
        %v2485 = vpack.c.b16 %v1557, %v1549
        %v2486 = vpack.c.b16 %v1558, %v1550
        %v2487 = vpack.c.b16 %v1559, %v1551
        %v2488 = vpack.c.b16 %v1560, %v1552
        %v2489 = vpack.c.b16 %v1561, %v1553
        %v2490 = vpack.c.b16 %v1570, %v1562
        %v2491 = vpack.c.b16 %v1571, %v1563
        %v2492 = vpack.c.b16 %v1572, %v1564
        %v2493 = vpack.c.b16 %v1573, %v1565
        %v2494 = vpack.c.b16 %v1574, %v1566
        %v2495 = vpack.c.b16 %v1575, %v1567
        %v2496 = vpack.c.b16 %v1576, %v1568
        %v2497 = vpack.c.b16 %v1577, %v1569
        %v2498 = vpack.c.b16 %v1586, %v1578
        %v2499 = vpack.c.b16 %v1587, %v1579
        %v2500 = vpack.c.b16 %v1588, %v1580
        %v2501 = vpack.c.b16 %v1589, %v1581
        %v2502 = vpack.c.b16 %v1590, %v1582
        %v2503 = vpack.c.b16 %v1591, %v1583
        %v2504 = vpack.c.b16 %v1592, %v1584
        %v2505 = vpack.c.b16 %v1593, %v1585
        %v2506 = vpack.c.b16 %v1602, %v1594
        %v2507 = vpack.c.b16 %v1603, %v1595
        %v2508 = vpack.c.b16 %v1604, %v1596
        %v2509 = vpack.c.b16 %v1605, %v1597
        %v2510 = vpack.c.b16 %v1606, %v1598
        %v2511 = vpack.c.b16 %v1607, %v1599
        %v2512 = vpack.c.b16 %v1608, %v1600
        %v2513 = vpack.c.b16 %v1609, %v1601
        %v2514 = vpack.c.b16 %v1618, %v1610
        %v2515 = vpack.c.b16 %v1619, %v1611
        %v2516 = vpack.c.b16 %v1620, %v1612
        %v2517 = vpack.c.b16 %v1621, %v1613
        %v2518 = vpack.c.b16 %v1622, %v1614
        %v2519 = vpack.c.b16 %v1623, %v1615
        %v2520 = vpack.c.b16 %v1624, %v1616
        %v2521 = vpack.c.b16 %v1625, %v1617
        %v2522 = vpack.c.b16 %v1634, %v1626
        %v2523 = vpack.c.b16 %v1635, %v1627
        %v2524 = vpack.c.b16 %v1636, %v1628
        %v2525 = vpack.c.b16 %v1637, %v1629
        %v2526 = vpack.c.b16 %v1638, %v1630
        %v2527 = vpack.c.b16 %v1639, %v1631
        %v2528 = vpack.c.b16 %v1640, %v1632
        %v2529 = vpack.c.b16 %v1641, %v1633
        %v2530 = vpack.c.b16 %v1650, %v1642
        %v2531 = vpack.c.b16 %v1651, %v1643
        %v2532 = vpack.c.b16 %v1652, %v1644
        %v2533 = vpack.c.b16 %v1653, %v1645
        %v2534 = vpack.c.b16 %v1654, %v1646
        %v2535 = vpack.c.b16 %v1655, %v1647
        %v2536 = vpack.c.b16 %v1656, %v1648
        %v2537 = vpack.c.b16 %v1657, %v1649
        %v2538 = vpack.c.b16 %v1666, %v1658
        %v2539 = vpack.c.b16 %v1667, %v1659
        %v2540 = vpack.c.b16 %v1668, %v1660
        %v2541 = vpack.c.b16 %v1669, %v1661
        %v2542 = vpack.c.b16 %v1670, %v1662
        %v2543 = vpack.c.b16 %v1671, %v1663
        %v2544 = vpack.c.b16 %v1672, %v1664
        %v2545 = vpack.c.b16 %v1673, %v1665
        %v2546 = vpack.c.b16 %v1682, %v1674
        %v2547 = vpack.c.b16 %v1683, %v1675
        %v2548 = vpack.c.b16 %v1684, %v1676
        %v2549 = vpack.c.b16 %v1685, %v1677
        %v2550 = vpack.c.b16 %v1686, %v1678
        %v2551 = vpack.c.b16 %v1687, %v1679
        %v2552 = vpack.c.b16 %v1688, %v1680
        %v2553 = vpack.c.b16 %v1689, %v1681
        %v2554 = vpack.c.b16 %v1698, %v1690
        %v2555 = vpack.c.b16 %v1699, %v1691
        %v2556 = vpack.c.b16 %v1700, %v1692
        %v2557 = vpack.c.b16 %v1701, %v1693
        %v2558 = vpack.c.b16 %v1702, %v1694
        %v2559 = vpack.c.b16 %v1703, %v1695
        %v2560 = vpack.c.b16 %v1704, %v1696
        %v2561 = vpack.c.b16 %v1705, %v1697
        %v2562 = vpack.c.b16 %v1714, %v1706
        %v2563 = vpack.c.b16 %v1715, %v1707
        %v2564 = vpack.c.b16 %v1716, %v1708
        %v2565 = vpack.c.b16 %v1717, %v1709
        %v2566 = vpack.c.b16 %v1718, %v1710
        %v2567 = vpack.c.b16 %v1719, %v1711
        %v2568 = vpack.c.b16 %v1720, %v1712
        %v2569 = vpack.c.b16 %v1721, %v1713
        %v2570 = vpack.c.b16 %v1730, %v1722
        %v2571 = vpack.c.b16 %v1731, %v1723
        %v2572 = vpack.c.b16 %v1732, %v1724
        %v2573 = vpack.c.b16 %v1733, %v1725
        %v2574 = vpack.c.b16 %v1734, %v1726
        %v2575 = vpack.c.b16 %v1735, %v1727
        %v2576 = vpack.c.b16 %v1736, %v1728
        %v2577 = vpack.c.b16 %v1737, %v1729
        %v2578 = vpack.c.b16 %v1746, %v1738
        %v2579 = vpack.c.b16 %v1747, %v1739
        %v2580 = vpack.c.b16 %v1748, %v1740
        %v2581 = vpack.c.b16 %v1749, %v1741
        %v2582 = vpack.c.b16 %v1750, %v1742
        %v2583 = vpack.c.b16 %v1751, %v1743
        %v2584 = vpack.c.b16 %v1752, %v1744
        %v2585 = vpack.c.b16 %v1753, %v1745
        %v2586 = vpack.c.b16 %v1762, %v1754
        %v2587 = vpack.c.b16 %v1763, %v1755
        %v2588 = vpack.c.b16 %v1764, %v1756
        %v2589 = vpack.c.b16 %v1765, %v1757
        %v2590 = vpack.c.b16 %v1766, %v1758
        %v2591 = vpack.c.b16 %v1767, %v1759
        %v2592 = vpack.c.b16 %v1768, %v1760
        %v2593 = vpack.c.b16 %v1769, %v1761
        %v2594 = vpack.c.b16 %v1778, %v1770
        %v2595 = vpack.c.b16 %v1779, %v1771
        %v2596 = vpack.c.b16 %v1780, %v1772
        %v2597 = vpack.c.b16 %v1781, %v1773
        %v2598 = vpack.c.b16 %v1782, %v1774
        %v2599 = vpack.c.b16 %v1783, %v1775
        %v2600 = vpack.c.b16 %v1784, %v1776
        %v2601 = vpack.c.b16 %v1785, %v1777
        %v2602 = vpack.c.b16 %v1794, %v1786
        %v2603 = vpack.c.b16 %v1795, %v1787
        %v2604 = vpack.c.b16 %v1796, %v1788
        %v2605 = vpack.c.b16 %v1797, %v1789
        %v2606 = vpack.c.b16 %v1798, %v1790
        %v2607 = vpack.c.b16 %v1799, %v1791
        %v2608 = vpack.c.b16 %v1800, %v1792
        %v2609 = vpack.c.b16 %v1801, %v1793
        %v2610 = vpack.c.b16 %v1810, %v1802
        %v2611 = vpack.c.b16 %v1811, %v1803
        %v2612 = vpack.c.b16 %v1812, %v1804
        %v2613 = vpack.c.b16 %v1813, %v1805
        %v2614 = vpack.c.b16 %v1814, %v1806
        %v2615 = vpack.c.b16 %v1815, %v1807
        %v2616 = vpack.c.b16 %v1816, %v1808
        %v2617 = vpack.c.b16 %v1817, %v1809
        %v2618 = vpack.c.b16 %v1826, %v1818
        %v2619 = vpack.c.b16 %v1827, %v1819
        %v2620 = vpack.c.b16 %v1828, %v1820
        %v2621 = vpack.c.b16 %v1829, %v1821
        %v2622 = vpack.c.b16 %v1830, %v1822
        %v2623 = vpack.c.b16 %v1831, %v1823
        %v2624 = vpack.c.b16 %v1832, %v1824
        %v2625 = vpack.c.b16 %v1833, %v1825
        %v2626 = vpack.c.b16 %v1842, %v1834
        %v2627 = vpack.c.b16 %v1843, %v1835
        %v2628 = vpack.c.b16 %v1844, %v1836
        %v2629 = vpack.c.b16 %v1845, %v1837
        %v2630 = vpack.c.b16 %v1846, %v1838
        %v2631 = vpack.c.b16 %v1847, %v1839
        %v2632 = vpack.c.b16 %v1848, %v1840
        %v2633 = vpack.c.b16 %v1849, %v1841
        %v2634 = vpack.c.b16 %v1858, %v1850
        %v2635 = vpack.c.b16 %v1859, %v1851
        %v2636 = vpack.c.b16 %v1860, %v1852
        %v2637 = vpack.c.b16 %v1861, %v1853
        %v2638 = vpack.c.b16 %v1862, %v1854
        %v2639 = vpack.c.b16 %v1863, %v1855
        %v2640 = vpack.c.b16 %v1864, %v1856
        %v2641 = vpack.c.b16 %v1865, %v1857
        %v2642 = vpack.c.b16 %v1874, %v1866
        %v2643 = vpack.c.b16 %v1875, %v1867
        %v2644 = vpack.c.b16 %v1876, %v1868
        %v2645 = vpack.c.b16 %v1877, %v1869
        %v2646 = vpack.c.b16 %v1878, %v1870
        %v2647 = vpack.c.b16 %v1879, %v1871
        %v2648 = vpack.c.b16 %v1880, %v1872
        %v2649 = vpack.c.b16 %v1881, %v1873
        %v2650 = vpack.c.b16 %v1890, %v1882
        %v2651 = vpack.c.b16 %v1891, %v1883
        %v2652 = vpack.c.b16 %v1892, %v1884
        %v2653 = vpack.c.b16 %v1893, %v1885
        %v2654 = vpack.c.b16 %v1894, %v1886
        %v2655 = vpack.c.b16 %v1895, %v1887
        %v2656 = vpack.c.b16 %v1896, %v1888
        %v2657 = vpack.c.b16 %v1897, %v1889
        %v2658 = vpack.c.b16 %v1906, %v1898
        %v2659 = vpack.c.b16 %v1907, %v1899
        %v2660 = vpack.c.b16 %v1908, %v1900
        %v2661 = vpack.c.b16 %v1909, %v1901
        %v2662 = vpack.c.b16 %v1910, %v1902
        %v2663 = vpack.c.b16 %v1911, %v1903
        %v2664 = vpack.c.b16 %v1912, %v1904
        %v2665 = vpack.c.b16 %v1913, %v1905
        %v2666 = vpack.c.b16 %v1922, %v1914
        %v2667 = vpack.c.b16 %v1923, %v1915
        %v2668 = vpack.c.b16 %v1924, %v1916
        %v2669 = vpack.c.b16 %v1925, %v1917
        %v2670 = vpack.c.b16 %v1926, %v1918
        %v2671 = vpack.c.b16 %v1927, %v1919
        %v2672 = vpack.c.b16 %v1928, %v1920
        %v2673 = vpack.c.b16 %v1929, %v1921
        %v2674 = vpack.c.b16 %v1938, %v1930
        %v2675 = vpack.c.b16 %v1939, %v1931
        %v2676 = vpack.c.b16 %v1940, %v1932
        %v2677 = vpack.c.b16 %v1941, %v1933
        %v2678 = vpack.c.b16 %v1942, %v1934
        %v2679 = vpack.c.b16 %v1943, %v1935
        %v2680 = vpack.c.b16 %v1944, %v1936
        %v2681 = vpack.c.b16 %v1945, %v1937
        %v2682 = vpack.c.b16 %v1954, %v1946
        %v2683 = vpack.c.b16 %v1955, %v1947
        %v2684 = vpack.c.b16 %v1956, %v1948
        %v2685 = vpack.c.b16 %v1957, %v1949
        %v2686 = vpack.c.b16 %v1958, %v1950
        %v2687 = vpack.c.b16 %v1959, %v1951
        %v2688 = vpack.c.b16 %v1960, %v1952
        %v2689 = vpack.c.b16 %v1961, %v1953
        %v2690 = vpack.c.b16 %v1970, %v1962
        %v2691 = vpack.c.b16 %v1971, %v1963
        %v2692 = vpack.c.b16 %v1972, %v1964
        %v2693 = vpack.c.b16 %v1973, %v1965
        %v2694 = vpack.c.b16 %v1974, %v1966
        %v2695 = vpack.c.b16 %v1975, %v1967
        %v2696 = vpack.c.b16 %v1976, %v1968
        %v2697 = vpack.c.b16 %v1977, %v1969
        %v2698 = vpack.c.b16 %v1986, %v1978
        %v2699 = vpack.c.b16 %v1987, %v1979
        %v2700 = vpack.c.b16 %v1988, %v1980
        %v2701 = vpack.c.b16 %v1989, %v1981
        %v2702 = vpack.c.b16 %v1990, %v1982
        %v2703 = vpack.c.b16 %v1991, %v1983
        %v2704 = vpack.c.b16 %v1992, %v1984
        %v2705 = vpack.c.b16 %v1993, %v1985
        %v2706 = vpack.c.b16 %v2002, %v1994
        %v2707 = vpack.c.b16 %v2003, %v1995
        %v2708 = vpack.c.b16 %v2004, %v1996
        %v2709 = vpack.c.b16 %v2005, %v1997
        %v2710 = vpack.c.b16 %v2006, %v1998
        %v2711 = vpack.c.b16 %v2007, %v1999
        %v2712 = vpack.c.b16 %v2008, %v2000
        %v2713 = vpack.c.b16 %v2009, %v2001
        %v2714 = vpack.c.b16 %v2018, %v2010
        %v2715 = vpack.c.b16 %v2019, %v2011
        %v2716 = vpack.c.b16 %v2020, %v2012
        %v2717 = vpack.c.b16 %v2021, %v2013
        %v2718 = vpack.c.b16 %v2022, %v2014
        %v2719 = vpack.c.b16 %v2023, %v2015
        %v2720 = vpack.c.b16 %v2024, %v2016
        %v2721 = vpack.c.b16 %v2025, %v2017
        %v2722 = vpack.c.b16 %v2034, %v2026
        %v2723 = vpack.c.b16 %v2035, %v2027
        %v2724 = vpack.c.b16 %v2036, %v2028
        %v2725 = vpack.c.b16 %v2037, %v2029
        %v2726 = vpack.c.b16 %v2038, %v2030
        %v2727 = vpack.c.b16 %v2039, %v2031
        %v2728 = vpack.c.b16 %v2040, %v2032
        %v2729 = vpack.c.b16 %v2041, %v2033
        %v2730 = vpack.c.b16 %v2050, %v2042
        %v2731 = vpack.c.b16 %v2051, %v2043
        %v2732 = vpack.c.b16 %v2052, %v2044
        %v2733 = vpack.c.b16 %v2053, %v2045
        %v2734 = vpack.c.b16 %v2054, %v2046
        %v2735 = vpack.c.b16 %v2055, %v2047
        %v2736 = vpack.c.b16 %v2056, %v2048
        %v2737 = vpack.c.b16 %v2057, %v2049
        %v2738 = vpack.c.b16 %v2066, %v2058
        %v2739 = vpack.c.b16 %v2067, %v2059
        %v2740 = vpack.c.b16 %v2068, %v2060
        %v2741 = vpack.c.b16 %v2069, %v2061
        %v2742 = vpack.c.b16 %v2070, %v2062
        %v2743 = vpack.c.b16 %v2071, %v2063
        %v2744 = vpack.c.b16 %v2072, %v2064
        %v2745 = vpack.c.b16 %v2073, %v2065
        %v2746 = vpack.c.b16 %v2082, %v2074
        %v2747 = vpack.c.b16 %v2083, %v2075
        %v2748 = vpack.c.b16 %v2084, %v2076
        %v2749 = vpack.c.b16 %v2085, %v2077
        %v2750 = vpack.c.b16 %v2086, %v2078
        %v2751 = vpack.c.b16 %v2087, %v2079
        %v2752 = vpack.c.b16 %v2088, %v2080
        %v2753 = vpack.c.b16 %v2089, %v2081
        %v2754 = vpack.c.b16 %v2098, %v2090
        %v2755 = vpack.c.b16 %v2099, %v2091
        %v2756 = vpack.c.b16 %v2100, %v2092
        %v2757 = vpack.c.b16 %v2101, %v2093
        %v2758 = vpack.c.b16 %v2102, %v2094
        %v2759 = vpack.c.b16 %v2103, %v2095
        %v2760 = vpack.c.b16 %v2104, %v2096
        %v2761 = vpack.c.b16 %v2105, %v2097
        %v2762 = vpack.c.b16 %v2114, %v2106
        %v2763 = vpack.c.b16 %v2115, %v2107
        %v2764 = vpack.c.b16 %v2116, %v2108
        %v2765 = vpack.c.b16 %v2117, %v2109
        %v2766 = vpack.c.b16 %v2118, %v2110
        %v2767 = vpack.c.b16 %v2119, %v2111
        %v2768 = vpack.c.b16 %v2120, %v2112
        %v2769 = vpack.c.b16 %v2121, %v2113
        %v2770 = vpack.c.b16 %v2130, %v2122
        %v2771 = vpack.c.b16 %v2131, %v2123
        %v2772 = vpack.c.b16 %v2132, %v2124
        %v2773 = vpack.c.b16 %v2133, %v2125
        %v2774 = vpack.c.b16 %v2134, %v2126
        %v2775 = vpack.c.b16 %v2135, %v2127
        %v2776 = vpack.c.b16 %v2136, %v2128
        %v2777 = vpack.c.b16 %v2137, %v2129
        %v2778 = vpack.c.b16 %v2146, %v2138
        %v2779 = vpack.c.b16 %v2147, %v2139
        %v2780 = vpack.c.b16 %v2148, %v2140
        %v2781 = vpack.c.b16 %v2149, %v2141
        %v2782 = vpack.c.b16 %v2150, %v2142
        %v2783 = vpack.c.b16 %v2151, %v2143
        %v2784 = vpack.c.b16 %v2152, %v2144
        %v2785 = vpack.c.b16 %v2153, %v2145
        %v2786 = vpack.c.b16 %v2162, %v2154
        %v2787 = vpack.c.b16 %v2163, %v2155
        %v2788 = vpack.c.b16 %v2164, %v2156
        %v2789 = vpack.c.b16 %v2165, %v2157
        %v2790 = vpack.c.b16 %v2166, %v2158
        %v2791 = vpack.c.b16 %v2167, %v2159
        %v2792 = vpack.c.b16 %v2168, %v2160
        %v2793 = vpack.c.b16 %v2169, %v2161
        %v2794 = vpack.c.b16 %v2178, %v2170
        %v2795 = vpack.c.b16 %v2179, %v2171
        %v2796 = vpack.c.b16 %v2180, %v2172
        %v2797 = vpack.c.b16 %v2181, %v2173
        %v2798 = vpack.c.b16 %v2182, %v2174
        %v2799 = vpack.c.b16 %v2183, %v2175
        %v2800 = vpack.c.b16 %v2184, %v2176
        %v2801 = vpack.c.b16 %v2185, %v2177
        %v2802 = vpack.c.b16 %v2194, %v2186
        %v2803 = vpack.c.b16 %v2195, %v2187
        %v2804 = vpack.c.b16 %v2196, %v2188
        %v2805 = vpack.c.b16 %v2197, %v2189
        %v2806 = vpack.c.b16 %v2198, %v2190
        %v2807 = vpack.c.b16 %v2199, %v2191
        %v2808 = vpack.c.b16 %v2200, %v2192
        %v2809 = vpack.c.b16 %v2201, %v2193
        %v2810 = vpack.c.b16 %v2210, %v2202
        %v2811 = vpack.c.b16 %v2211, %v2203
        %v2812 = vpack.c.b16 %v2212, %v2204
        %v2813 = vpack.c.b16 %v2213, %v2205
        %v2814 = vpack.c.b16 %v2214, %v2206
        %v2815 = vpack.c.b16 %v2215, %v2207
        %v2816 = vpack.c.b16 %v2216, %v2208
        %v2817 = vpack.c.b16 %v2217, %v2209
        %v2818 = vpack.c.b16 %v2226, %v2218
        %v2819 = vpack.c.b16 %v2227, %v2219
        %v2820 = vpack.c.b16 %v2228, %v2220
        %v2821 = vpack.c.b16 %v2229, %v2221
        %v2822 = vpack.c.b16 %v2230, %v2222
        %v2823 = vpack.c.b16 %v2231, %v2223
        %v2824 = vpack.c.b16 %v2232, %v2224
        %v2825 = vpack.c.b16 %v2233, %v2225
        %v2826 = vpack.c.b16 %v2242, %v2234
        %v2827 = vpack.c.b16 %v2243, %v2235
        %v2828 = vpack.c.b16 %v2244, %v2236
        %v2829 = vpack.c.b16 %v2245, %v2237
        %v2830 = vpack.c.b16 %v2246, %v2238
        %v2831 = vpack.c.b16 %v2247, %v2239
        %v2832 = vpack.c.b16 %v2248, %v2240
        %v2833 = vpack.c.b16 %v2249, %v2241
        %v2834 = vpack.c.b16 %v2258, %v2250
        %v2835 = vpack.c.b16 %v2259, %v2251
        %v2836 = vpack.c.b16 %v2260, %v2252
        %v2837 = vpack.c.b16 %v2261, %v2253
        %v2838 = vpack.c.b16 %v2262, %v2254
        %v2839 = vpack.c.b16 %v2263, %v2255
        %v2840 = vpack.c.b16 %v2264, %v2256
        %v2841 = vpack.c.b16 %v2265, %v2257
        %v2842 = vpack.c.b16 %v2274, %v2266
        %v2843 = vpack.c.b16 %v2275, %v2267
        %v2844 = vpack.c.b16 %v2276, %v2268
        %v2845 = vpack.c.b16 %v2277, %v2269
        %v2846 = vpack.c.b16 %v2278, %v2270
        %v2847 = vpack.c.b16 %v2279, %v2271
        %v2848 = vpack.c.b16 %v2280, %v2272
        %v2849 = vpack.c.b16 %v2281, %v2273
        %v2850 = vpack.c.b16 %v2290, %v2282
        %v2851 = vpack.c.b16 %v2291, %v2283
        %v2852 = vpack.c.b16 %v2292, %v2284
        %v2853 = vpack.c.b16 %v2293, %v2285
        %v2854 = vpack.c.b16 %v2294, %v2286
        %v2855 = vpack.c.b16 %v2295, %v2287
        %v2856 = vpack.c.b16 %v2296, %v2288
        %v2857 = vpack.c.b16 %v2297, %v2289
        %v2858 = vpack.c.b16 %v2306, %v2298
        %v2859 = vpack.c.b16 %v2307, %v2299
        %v2860 = vpack.c.b16 %v2308, %v2300
        %v2861 = vpack.c.b16 %v2309, %v2301
        %v2862 = vpack.c.b16 %v2310, %v2302
        %v2863 = vpack.c.b16 %v2311, %v2303
        %v2864 = vpack.c.b16 %v2312, %v2304
        %v2865 = vpack.c.b16 %v2313, %v2305
        %v2866 = vpack.c.b16 %v2322, %v2314
        %v2867 = vpack.c.b16 %v2323, %v2315
        %v2868 = vpack.c.b16 %v2324, %v2316
        %v2869 = vpack.c.b16 %v2325, %v2317
        %v2870 = vpack.c.b16 %v2326, %v2318
        %v2871 = vpack.c.b16 %v2327, %v2319
        %v2872 = vpack.c.b16 %v2328, %v2320
        %v2873 = vpack.c.b16 %v2329, %v2321
        %v2874 = vpack.c.b16 %v2338, %v2330
        %v2875 = vpack.c.b16 %v2339, %v2331
        %v2876 = vpack.c.b16 %v2340, %v2332
        %v2877 = vpack.c.b16 %v2341, %v2333
        %v2878 = vpack.c.b16 %v2342, %v2334
        %v2879 = vpack.c.b16 %v2343, %v2335
        %v2880 = vpack.c.b16 %v2344, %v2336
        %v2881 = vpack.c.b16 %v2345, %v2337
        %v2882 = vpack.c.b16 %v2354, %v2346
        %v2883 = vpack.c.b16 %v2355, %v2347
        %v2884 = vpack.c.b16 %v2356, %v2348
        %v2885 = vpack.c.b16 %v2357, %v2349
        %v2886 = vpack.c.b16 %v2358, %v2350
        %v2887 = vpack.c.b16 %v2359, %v2351
        %v2888 = vpack.c.b16 %v2360, %v2352
        %v2889 = vpack.c.b16 %v2361, %v2353
        %v2890 = vpack.c.b16 %v2370, %v2362
        %v2891 = vpack.c.b16 %v2371, %v2363
        %v2892 = vpack.c.b16 %v2372, %v2364
        %v2893 = vpack.c.b16 %v2373, %v2365
        %v2894 = vpack.c.b16 %v2374, %v2366
        %v2895 = vpack.c.b16 %v2375, %v2367
        %v2896 = vpack.c.b16 %v2376, %v2368
        %v2897 = vpack.c.b16 %v2377, %v2369
        %v2898 = vpack.c.b16 %v2386, %v2378
        %v2899 = vpack.c.b16 %v2387, %v2379
        %v2900 = vpack.c.b16 %v2388, %v2380
        %v2901 = vpack.c.b16 %v2389, %v2381
        %v2902 = vpack.c.b16 %v2390, %v2382
        %v2903 = vpack.c.b16 %v2391, %v2383
        %v2904 = vpack.c.b16 %v2392, %v2384
        %v2905 = vpack.c.b16 %v2393, %v2385
        %3418 = vmatpush.bf16.msra.mxu0 %v2450
        %3419 = vmatpush.bf16.msra.mxu0 %v2442
        %3420 = vmatpush.bf16.msra.mxu0 %v2434
        %3421 = vmatpush.bf16.msra.mxu0 %v2426
        %3422 = vmatpush.bf16.msra.mxu0 %v2418
        %3423 = vmatpush.bf16.msra.mxu0 %v2410
        %3424 = vmatpush.bf16.msra.mxu0 %v2402
        %3425 = vmatpush.bf16.msra.mxu0 %v2394
        %3426 = vmatmul.bf16.gmra.mxu0 %v842
        %v3427 = vpop.f32.mrf.mxu0
        %v3428 = vadd.f32 %v824, %v3427
        %v3429 = vpop.f32.mrf.mxu0
        %3430 = vdwg.mxu0
        %3431 = vmatpush.bf16.msra.mxu0 %v2514
        %3432 = vmatpush.bf16.msra.mxu0 %v2506
        %3433 = vmatpush.bf16.msra.mxu0 %v2498
        %3434 = vmatpush.bf16.msra.mxu0 %v2490
        %3435 = vmatpush.bf16.msra.mxu0 %v2482
        %3436 = vmatpush.bf16.msra.mxu0 %v2474
        %3437 = vmatpush.bf16.msra.mxu0 %v2466
        %3438 = vmatpush.bf16.msra.mxu0 %v2458
        %3439 = vmatmul.bf16.gmra.mxu0 %v843
        %v3440 = vpop.f32.mrf.mxu0
        %v3441 = vadd.f32 %v3428, %v3440
        %v3442 = vpop.f32.mrf.mxu0
        %3443 = vdwg.mxu0
        %3444 = vmatpush.bf16.msra.mxu0 %v2578
        %3445 = vmatpush.bf16.msra.mxu0 %v2570
        %3446 = vmatpush.bf16.msra.mxu0 %v2562
        %3447 = vmatpush.bf16.msra.mxu0 %v2554
        %3448 = vmatpush.bf16.msra.mxu0 %v2546
        %3449 = vmatpush.bf16.msra.mxu0 %v2538
        %3450 = vmatpush.bf16.msra.mxu0 %v2530
        %3451 = vmatpush.bf16.msra.mxu0 %v2522
        %3452 = vmatmul.bf16.gmra.mxu0 %v844
        %v3453 = vpop.f32.mrf.mxu0
        %v3454 = vadd.f32 %v3441, %v3453
        %v3455 = vpop.f32.mrf.mxu0
        %3456 = vdwg.mxu0
        %3457 = vmatpush.bf16.msra.mxu0 %v2642
        %3458 = vmatpush.bf16.msra.mxu0 %v2634
        %3459 = vmatpush.bf16.msra.mxu0 %v2626
        %3460 = vmatpush.bf16.msra.mxu0 %v2618
        %3461 = vmatpush.bf16.msra.mxu0 %v2610
        %3462 = vmatpush.bf16.msra.mxu0 %v2602
        %3463 = vmatpush.bf16.msra.mxu0 %v2594
        %3464 = vmatpush.bf16.msra.mxu0 %v2586
        %3465 = vmatmul.bf16.gmra.mxu0 %v845
        %v3466 = vpop.f32.mrf.mxu0
        %v3467 = vadd.f32 %v3454, %v3466
        %v3468 = vpop.f32.mrf.mxu0
        %3469 = vdwg.mxu0
        %3470 = vmatpush.bf16.msra.mxu0 %v2706
        %3471 = vmatpush.bf16.msra.mxu0 %v2698
        %3472 = vmatpush.bf16.msra.mxu0 %v2690
        %3473 = vmatpush.bf16.msra.mxu0 %v2682
        %3474 = vmatpush.bf16.msra.mxu0 %v2674
        %3475 = vmatpush.bf16.msra.mxu0 %v2666
        %3476 = vmatpush.bf16.msra.mxu0 %v2658
        %3477 = vmatpush.bf16.msra.mxu0 %v2650
        %3478 = vmatmul.bf16.gmra.mxu0 %v846
        %v3479 = vpop.f32.mrf.mxu0
        %v3480 = vadd.f32 %v3467, %v3479
        %v3481 = vpop.f32.mrf.mxu0
        %3482 = vdwg.mxu0
        %3483 = vmatpush.bf16.msra.mxu0 %v2770
        %3484 = vmatpush.bf16.msra.mxu0 %v2762
        %3485 = vmatpush.bf16.msra.mxu0 %v2754
        %3486 = vmatpush.bf16.msra.mxu0 %v2746
        %3487 = vmatpush.bf16.msra.mxu0 %v2738
        %3488 = vmatpush.bf16.msra.mxu0 %v2730
        %3489 = vmatpush.bf16.msra.mxu0 %v2722
        %3490 = vmatpush.bf16.msra.mxu0 %v2714
        %3491 = vmatmul.bf16.gmra.mxu0 %v847
        %v3492 = vpop.f32.mrf.mxu0
        %v3493 = vadd.f32 %v3480, %v3492
        %v3494 = vpop.f32.mrf.mxu0
        %3495 = vdwg.mxu0
        %3496 = vmatpush.bf16.msra.mxu0 %v2834
        %3497 = vmatpush.bf16.msra.mxu0 %v2826
        %3498 = vmatpush.bf16.msra.mxu0 %v2818
        %3499 = vmatpush.bf16.msra.mxu0 %v2810
        %3500 = vmatpush.bf16.msra.mxu0 %v2802
        %3501 = vmatpush.bf16.msra.mxu0 %v2794
        %3502 = vmatpush.bf16.msra.mxu0 %v2786
        %3503 = vmatpush.bf16.msra.mxu0 %v2778
        %3504 = vmatmul.bf16.gmra.mxu0 %v848
        %v3505 = vpop.f32.mrf.mxu0
        %v3506 = vadd.f32 %v3493, %v3505
        %v3507 = vpop.f32.mrf.mxu0
        %3508 = vdwg.mxu0
        %3509 = vmatpush.bf16.msra.mxu0 %v2898
        %3510 = vmatpush.bf16.msra.mxu0 %v2890
        %3511 = vmatpush.bf16.msra.mxu0 %v2882
        %3512 = vmatpush.bf16.msra.mxu0 %v2874
        %3513 = vmatpush.bf16.msra.mxu0 %v2866
        %3514 = vmatpush.bf16.msra.mxu0 %v2858
        %3515 = vmatpush.bf16.msra.mxu0 %v2850
        %3516 = vmatpush.bf16.msra.mxu0 %v2842
        %3517 = vmatmul.bf16.gmra.mxu0 %v849
        %v3518 = vpop.f32.mrf.mxu0
        %v3519 = vadd.f32 %v3506, %v3518
        %v3520 = vpop.f32.mrf.mxu0
        %3521 = vdwg.mxu0
        %3522 = vmatpush.bf16.msra.mxu0 %v2451
        %3523 = vmatpush.bf16.msra.mxu0 %v2443
        %3524 = vmatpush.bf16.msra.mxu0 %v2435
        %3525 = vmatpush.bf16.msra.mxu0 %v2427
        %3526 = vmatpush.bf16.msra.mxu0 %v2419
        %3527 = vmatpush.bf16.msra.mxu0 %v2411
        %3528 = vmatpush.bf16.msra.mxu0 %v2403
        %3529 = vmatpush.bf16.msra.mxu0 %v2395
        %3530 = vmatmul.bf16.gmra.mxu0 %v842
        %v3531 = vpop.f32.mrf.mxu0
        %v3532 = vadd.f32 %v825, %v3531
        %v3533 = vpop.f32.mrf.mxu0
        %3534 = vdwg.mxu0
        %3535 = vmatpush.bf16.msra.mxu0 %v2515
        %3536 = vmatpush.bf16.msra.mxu0 %v2507
        %3537 = vmatpush.bf16.msra.mxu0 %v2499
        %3538 = vmatpush.bf16.msra.mxu0 %v2491
        %3539 = vmatpush.bf16.msra.mxu0 %v2483
        %3540 = vmatpush.bf16.msra.mxu0 %v2475
        %3541 = vmatpush.bf16.msra.mxu0 %v2467
        %3542 = vmatpush.bf16.msra.mxu0 %v2459
        %3543 = vmatmul.bf16.gmra.mxu0 %v843
        %v3544 = vpop.f32.mrf.mxu0
        %v3545 = vadd.f32 %v3532, %v3544
        %v3546 = vpop.f32.mrf.mxu0
        %3547 = vdwg.mxu0
        %3548 = vmatpush.bf16.msra.mxu0 %v2579
        %3549 = vmatpush.bf16.msra.mxu0 %v2571
        %3550 = vmatpush.bf16.msra.mxu0 %v2563
        %3551 = vmatpush.bf16.msra.mxu0 %v2555
        %3552 = vmatpush.bf16.msra.mxu0 %v2547
        %3553 = vmatpush.bf16.msra.mxu0 %v2539
        %3554 = vmatpush.bf16.msra.mxu0 %v2531
        %3555 = vmatpush.bf16.msra.mxu0 %v2523
        %3556 = vmatmul.bf16.gmra.mxu0 %v844
        %v3557 = vpop.f32.mrf.mxu0
        %v3558 = vadd.f32 %v3545, %v3557
        %v3559 = vpop.f32.mrf.mxu0
        %3560 = vdwg.mxu0
        %3561 = vmatpush.bf16.msra.mxu0 %v2643
        %3562 = vmatpush.bf16.msra.mxu0 %v2635
        %3563 = vmatpush.bf16.msra.mxu0 %v2627
        %3564 = vmatpush.bf16.msra.mxu0 %v2619
        %3565 = vmatpush.bf16.msra.mxu0 %v2611
        %3566 = vmatpush.bf16.msra.mxu0 %v2603
        %3567 = vmatpush.bf16.msra.mxu0 %v2595
        %3568 = vmatpush.bf16.msra.mxu0 %v2587
        %3569 = vmatmul.bf16.gmra.mxu0 %v845
        %v3570 = vpop.f32.mrf.mxu0
        %v3571 = vadd.f32 %v3558, %v3570
        %v3572 = vpop.f32.mrf.mxu0
        %3573 = vdwg.mxu0
        %3574 = vmatpush.bf16.msra.mxu0 %v2707
        %3575 = vmatpush.bf16.msra.mxu0 %v2699
        %3576 = vmatpush.bf16.msra.mxu0 %v2691
        %3577 = vmatpush.bf16.msra.mxu0 %v2683
        %3578 = vmatpush.bf16.msra.mxu0 %v2675
        %3579 = vmatpush.bf16.msra.mxu0 %v2667
        %3580 = vmatpush.bf16.msra.mxu0 %v2659
        %3581 = vmatpush.bf16.msra.mxu0 %v2651
        %3582 = vmatmul.bf16.gmra.mxu0 %v846
        %v3583 = vpop.f32.mrf.mxu0
        %v3584 = vadd.f32 %v3571, %v3583
        %v3585 = vpop.f32.mrf.mxu0
        %3586 = vdwg.mxu0
        %3587 = vmatpush.bf16.msra.mxu0 %v2771
        %3588 = vmatpush.bf16.msra.mxu0 %v2763
        %3589 = vmatpush.bf16.msra.mxu0 %v2755
        %3590 = vmatpush.bf16.msra.mxu0 %v2747
        %3591 = vmatpush.bf16.msra.mxu0 %v2739
        %3592 = vmatpush.bf16.msra.mxu0 %v2731
        %3593 = vmatpush.bf16.msra.mxu0 %v2723
        %3594 = vmatpush.bf16.msra.mxu0 %v2715
        %3595 = vmatmul.bf16.gmra.mxu0 %v847
        %v3596 = vpop.f32.mrf.mxu0
        %v3597 = vadd.f32 %v3584, %v3596
        %v3598 = vpop.f32.mrf.mxu0
        %3599 = vdwg.mxu0
        %3600 = vmatpush.bf16.msra.mxu0 %v2835
        %3601 = vmatpush.bf16.msra.mxu0 %v2827
        %3602 = vmatpush.bf16.msra.mxu0 %v2819
        %3603 = vmatpush.bf16.msra.mxu0 %v2811
        %3604 = vmatpush.bf16.msra.mxu0 %v2803
        %3605 = vmatpush.bf16.msra.mxu0 %v2795
        %3606 = vmatpush.bf16.msra.mxu0 %v2787
        %3607 = vmatpush.bf16.msra.mxu0 %v2779
        %3608 = vmatmul.bf16.gmra.mxu0 %v848
        %v3609 = vpop.f32.mrf.mxu0
        %v3610 = vadd.f32 %v3597, %v3609
        %v3611 = vpop.f32.mrf.mxu0
        %3612 = vdwg.mxu0
        %3613 = vmatpush.bf16.msra.mxu0 %v2899
        %3614 = vmatpush.bf16.msra.mxu0 %v2891
        %3615 = vmatpush.bf16.msra.mxu0 %v2883
        %3616 = vmatpush.bf16.msra.mxu0 %v2875
        %3617 = vmatpush.bf16.msra.mxu0 %v2867
        %3618 = vmatpush.bf16.msra.mxu0 %v2859
        %3619 = vmatpush.bf16.msra.mxu0 %v2851
        %3620 = vmatpush.bf16.msra.mxu0 %v2843
        %3621 = vmatmul.bf16.gmra.mxu0 %v849
        %v3622 = vpop.f32.mrf.mxu0
        %v3623 = vadd.f32 %v3610, %v3622
        %v3624 = vpop.f32.mrf.mxu0
        %3625 = vdwg.mxu0
        %3626 = vmatpush.bf16.msra.mxu0 %v2452
        %3627 = vmatpush.bf16.msra.mxu0 %v2444
        %3628 = vmatpush.bf16.msra.mxu0 %v2436
        %3629 = vmatpush.bf16.msra.mxu0 %v2428
        %3630 = vmatpush.bf16.msra.mxu0 %v2420
        %3631 = vmatpush.bf16.msra.mxu0 %v2412
        %3632 = vmatpush.bf16.msra.mxu0 %v2404
        %3633 = vmatpush.bf16.msra.mxu0 %v2396
        %3634 = vmatmul.bf16.gmra.mxu0 %v842
        %v3635 = vpop.f32.mrf.mxu0
        %v3636 = vadd.f32 %v826, %v3635
        %v3637 = vpop.f32.mrf.mxu0
        %3638 = vdwg.mxu0
        %3639 = vmatpush.bf16.msra.mxu0 %v2516
        %3640 = vmatpush.bf16.msra.mxu0 %v2508
        %3641 = vmatpush.bf16.msra.mxu0 %v2500
        %3642 = vmatpush.bf16.msra.mxu0 %v2492
        %3643 = vmatpush.bf16.msra.mxu0 %v2484
        %3644 = vmatpush.bf16.msra.mxu0 %v2476
        %3645 = vmatpush.bf16.msra.mxu0 %v2468
        %3646 = vmatpush.bf16.msra.mxu0 %v2460
        %3647 = vmatmul.bf16.gmra.mxu0 %v843
        %v3648 = vpop.f32.mrf.mxu0
        %v3649 = vadd.f32 %v3636, %v3648
        %v3650 = vpop.f32.mrf.mxu0
        %3651 = vdwg.mxu0
        %3652 = vmatpush.bf16.msra.mxu0 %v2580
        %3653 = vmatpush.bf16.msra.mxu0 %v2572
        %3654 = vmatpush.bf16.msra.mxu0 %v2564
        %3655 = vmatpush.bf16.msra.mxu0 %v2556
        %3656 = vmatpush.bf16.msra.mxu0 %v2548
        %3657 = vmatpush.bf16.msra.mxu0 %v2540
        %3658 = vmatpush.bf16.msra.mxu0 %v2532
        %3659 = vmatpush.bf16.msra.mxu0 %v2524
        %3660 = vmatmul.bf16.gmra.mxu0 %v844
        %v3661 = vpop.f32.mrf.mxu0
        %v3662 = vadd.f32 %v3649, %v3661
        %v3663 = vpop.f32.mrf.mxu0
        %3664 = vdwg.mxu0
        %3665 = vmatpush.bf16.msra.mxu0 %v2644
        %3666 = vmatpush.bf16.msra.mxu0 %v2636
        %3667 = vmatpush.bf16.msra.mxu0 %v2628
        %3668 = vmatpush.bf16.msra.mxu0 %v2620
        %3669 = vmatpush.bf16.msra.mxu0 %v2612
        %3670 = vmatpush.bf16.msra.mxu0 %v2604
        %3671 = vmatpush.bf16.msra.mxu0 %v2596
        %3672 = vmatpush.bf16.msra.mxu0 %v2588
        %3673 = vmatmul.bf16.gmra.mxu0 %v845
        %v3674 = vpop.f32.mrf.mxu0
        %v3675 = vadd.f32 %v3662, %v3674
        %v3676 = vpop.f32.mrf.mxu0
        %3677 = vdwg.mxu0
        %3678 = vmatpush.bf16.msra.mxu0 %v2708
        %3679 = vmatpush.bf16.msra.mxu0 %v2700
        %3680 = vmatpush.bf16.msra.mxu0 %v2692
        %3681 = vmatpush.bf16.msra.mxu0 %v2684
        %3682 = vmatpush.bf16.msra.mxu0 %v2676
        %3683 = vmatpush.bf16.msra.mxu0 %v2668
        %3684 = vmatpush.bf16.msra.mxu0 %v2660
        %3685 = vmatpush.bf16.msra.mxu0 %v2652
        %3686 = vmatmul.bf16.gmra.mxu0 %v846
        %v3687 = vpop.f32.mrf.mxu0
        %v3688 = vadd.f32 %v3675, %v3687
        %v3689 = vpop.f32.mrf.mxu0
        %3690 = vdwg.mxu0
        %3691 = vmatpush.bf16.msra.mxu0 %v2772
        %3692 = vmatpush.bf16.msra.mxu0 %v2764
        %3693 = vmatpush.bf16.msra.mxu0 %v2756
        %3694 = vmatpush.bf16.msra.mxu0 %v2748
        %3695 = vmatpush.bf16.msra.mxu0 %v2740
        %3696 = vmatpush.bf16.msra.mxu0 %v2732
        %3697 = vmatpush.bf16.msra.mxu0 %v2724
        %3698 = vmatpush.bf16.msra.mxu0 %v2716
        %3699 = vmatmul.bf16.gmra.mxu0 %v847
        %v3700 = vpop.f32.mrf.mxu0
        %v3701 = vadd.f32 %v3688, %v3700
        %v3702 = vpop.f32.mrf.mxu0
        %3703 = vdwg.mxu0
        %3704 = vmatpush.bf16.msra.mxu0 %v2836
        %3705 = vmatpush.bf16.msra.mxu0 %v2828
        %3706 = vmatpush.bf16.msra.mxu0 %v2820
        %3707 = vmatpush.bf16.msra.mxu0 %v2812
        %3708 = vmatpush.bf16.msra.mxu0 %v2804
        %3709 = vmatpush.bf16.msra.mxu0 %v2796
        %3710 = vmatpush.bf16.msra.mxu0 %v2788
        %3711 = vmatpush.bf16.msra.mxu0 %v2780
        %3712 = vmatmul.bf16.gmra.mxu0 %v848
        %v3713 = vpop.f32.mrf.mxu0
        %v3714 = vadd.f32 %v3701, %v3713
        %v3715 = vpop.f32.mrf.mxu0
        %3716 = vdwg.mxu0
        %3717 = vmatpush.bf16.msra.mxu0 %v2900
        %3718 = vmatpush.bf16.msra.mxu0 %v2892
        %3719 = vmatpush.bf16.msra.mxu0 %v2884
        %3720 = vmatpush.bf16.msra.mxu0 %v2876
        %3721 = vmatpush.bf16.msra.mxu0 %v2868
        %3722 = vmatpush.bf16.msra.mxu0 %v2860
        %3723 = vmatpush.bf16.msra.mxu0 %v2852
        %3724 = vmatpush.bf16.msra.mxu0 %v2844
        %3725 = vmatmul.bf16.gmra.mxu0 %v849
        %v3726 = vpop.f32.mrf.mxu0
        %v3727 = vadd.f32 %v3714, %v3726
        %v3728 = vpop.f32.mrf.mxu0
        %3729 = vdwg.mxu0
        %3730 = vmatpush.bf16.msra.mxu0 %v2453
        %3731 = vmatpush.bf16.msra.mxu0 %v2445
        %3732 = vmatpush.bf16.msra.mxu0 %v2437
        %3733 = vmatpush.bf16.msra.mxu0 %v2429
        %3734 = vmatpush.bf16.msra.mxu0 %v2421
        %3735 = vmatpush.bf16.msra.mxu0 %v2413
        %3736 = vmatpush.bf16.msra.mxu0 %v2405
        %3737 = vmatpush.bf16.msra.mxu0 %v2397
        %3738 = vmatmul.bf16.gmra.mxu0 %v842
        %v3739 = vpop.f32.mrf.mxu0
        %v3740 = vadd.f32 %v827, %v3739
        %v3741 = vpop.f32.mrf.mxu0
        %3742 = vdwg.mxu0
        %3743 = vmatpush.bf16.msra.mxu0 %v2517
        %3744 = vmatpush.bf16.msra.mxu0 %v2509
        %3745 = vmatpush.bf16.msra.mxu0 %v2501
        %3746 = vmatpush.bf16.msra.mxu0 %v2493
        %3747 = vmatpush.bf16.msra.mxu0 %v2485
        %3748 = vmatpush.bf16.msra.mxu0 %v2477
        %3749 = vmatpush.bf16.msra.mxu0 %v2469
        %3750 = vmatpush.bf16.msra.mxu0 %v2461
        %3751 = vmatmul.bf16.gmra.mxu0 %v843
        %v3752 = vpop.f32.mrf.mxu0
        %v3753 = vadd.f32 %v3740, %v3752
        %v3754 = vpop.f32.mrf.mxu0
        %3755 = vdwg.mxu0
        %3756 = vmatpush.bf16.msra.mxu0 %v2581
        %3757 = vmatpush.bf16.msra.mxu0 %v2573
        %3758 = vmatpush.bf16.msra.mxu0 %v2565
        %3759 = vmatpush.bf16.msra.mxu0 %v2557
        %3760 = vmatpush.bf16.msra.mxu0 %v2549
        %3761 = vmatpush.bf16.msra.mxu0 %v2541
        %3762 = vmatpush.bf16.msra.mxu0 %v2533
        %3763 = vmatpush.bf16.msra.mxu0 %v2525
        %3764 = vmatmul.bf16.gmra.mxu0 %v844
        %v3765 = vpop.f32.mrf.mxu0
        %v3766 = vadd.f32 %v3753, %v3765
        %v3767 = vpop.f32.mrf.mxu0
        %3768 = vdwg.mxu0
        %3769 = vmatpush.bf16.msra.mxu0 %v2645
        %3770 = vmatpush.bf16.msra.mxu0 %v2637
        %3771 = vmatpush.bf16.msra.mxu0 %v2629
        %3772 = vmatpush.bf16.msra.mxu0 %v2621
        %3773 = vmatpush.bf16.msra.mxu0 %v2613
        %3774 = vmatpush.bf16.msra.mxu0 %v2605
        %3775 = vmatpush.bf16.msra.mxu0 %v2597
        %3776 = vmatpush.bf16.msra.mxu0 %v2589
        %3777 = vmatmul.bf16.gmra.mxu0 %v845
        %v3778 = vpop.f32.mrf.mxu0
        %v3779 = vadd.f32 %v3766, %v3778
        %v3780 = vpop.f32.mrf.mxu0
        %3781 = vdwg.mxu0
        %3782 = vmatpush.bf16.msra.mxu0 %v2709
        %3783 = vmatpush.bf16.msra.mxu0 %v2701
        %3784 = vmatpush.bf16.msra.mxu0 %v2693
        %3785 = vmatpush.bf16.msra.mxu0 %v2685
        %3786 = vmatpush.bf16.msra.mxu0 %v2677
        %3787 = vmatpush.bf16.msra.mxu0 %v2669
        %3788 = vmatpush.bf16.msra.mxu0 %v2661
        %3789 = vmatpush.bf16.msra.mxu0 %v2653
        %3790 = vmatmul.bf16.gmra.mxu0 %v846
        %v3791 = vpop.f32.mrf.mxu0
        %v3792 = vadd.f32 %v3779, %v3791
        %v3793 = vpop.f32.mrf.mxu0
        %3794 = vdwg.mxu0
        %3795 = vmatpush.bf16.msra.mxu0 %v2773
        %3796 = vmatpush.bf16.msra.mxu0 %v2765
        %3797 = vmatpush.bf16.msra.mxu0 %v2757
        %3798 = vmatpush.bf16.msra.mxu0 %v2749
        %3799 = vmatpush.bf16.msra.mxu0 %v2741
        %3800 = vmatpush.bf16.msra.mxu0 %v2733
        %3801 = vmatpush.bf16.msra.mxu0 %v2725
        %3802 = vmatpush.bf16.msra.mxu0 %v2717
        %3803 = vmatmul.bf16.gmra.mxu0 %v847
        %v3804 = vpop.f32.mrf.mxu0
        %v3805 = vadd.f32 %v3792, %v3804
        %v3806 = vpop.f32.mrf.mxu0
        %3807 = vdwg.mxu0
        %3808 = vmatpush.bf16.msra.mxu0 %v2837
        %3809 = vmatpush.bf16.msra.mxu0 %v2829
        %3810 = vmatpush.bf16.msra.mxu0 %v2821
        %3811 = vmatpush.bf16.msra.mxu0 %v2813
        %3812 = vmatpush.bf16.msra.mxu0 %v2805
        %3813 = vmatpush.bf16.msra.mxu0 %v2797
        %3814 = vmatpush.bf16.msra.mxu0 %v2789
        %3815 = vmatpush.bf16.msra.mxu0 %v2781
        %3816 = vmatmul.bf16.gmra.mxu0 %v848
        %v3817 = vpop.f32.mrf.mxu0
        %v3818 = vadd.f32 %v3805, %v3817
        %v3819 = vpop.f32.mrf.mxu0
        %3820 = vdwg.mxu0
        %3821 = vmatpush.bf16.msra.mxu0 %v2901
        %3822 = vmatpush.bf16.msra.mxu0 %v2893
        %3823 = vmatpush.bf16.msra.mxu0 %v2885
        %3824 = vmatpush.bf16.msra.mxu0 %v2877
        %3825 = vmatpush.bf16.msra.mxu0 %v2869
        %3826 = vmatpush.bf16.msra.mxu0 %v2861
        %3827 = vmatpush.bf16.msra.mxu0 %v2853
        %3828 = vmatpush.bf16.msra.mxu0 %v2845
        %3829 = vmatmul.bf16.gmra.mxu0 %v849
        %v3830 = vpop.f32.mrf.mxu0
        %v3831 = vadd.f32 %v3818, %v3830
        %v3832 = vpop.f32.mrf.mxu0
        %3833 = vdwg.mxu0
        %3834 = vmatpush.bf16.msra.mxu0 %v2454
        %3835 = vmatpush.bf16.msra.mxu0 %v2446
        %3836 = vmatpush.bf16.msra.mxu0 %v2438
        %3837 = vmatpush.bf16.msra.mxu0 %v2430
        %3838 = vmatpush.bf16.msra.mxu0 %v2422
        %3839 = vmatpush.bf16.msra.mxu0 %v2414
        %3840 = vmatpush.bf16.msra.mxu0 %v2406
        %3841 = vmatpush.bf16.msra.mxu0 %v2398
        %3842 = vmatmul.bf16.gmra.mxu0 %v842
        %v3843 = vpop.f32.mrf.mxu0
        %v3844 = vadd.f32 %v828, %v3843
        %v3845 = vpop.f32.mrf.mxu0
        %3846 = vdwg.mxu0
        %3847 = vmatpush.bf16.msra.mxu0 %v2518
        %3848 = vmatpush.bf16.msra.mxu0 %v2510
        %3849 = vmatpush.bf16.msra.mxu0 %v2502
        %3850 = vmatpush.bf16.msra.mxu0 %v2494
        %3851 = vmatpush.bf16.msra.mxu0 %v2486
        %3852 = vmatpush.bf16.msra.mxu0 %v2478
        %3853 = vmatpush.bf16.msra.mxu0 %v2470
        %3854 = vmatpush.bf16.msra.mxu0 %v2462
        %3855 = vmatmul.bf16.gmra.mxu0 %v843
        %v3856 = vpop.f32.mrf.mxu0
        %v3857 = vadd.f32 %v3844, %v3856
        %v3858 = vpop.f32.mrf.mxu0
        %3859 = vdwg.mxu0
        %3860 = vmatpush.bf16.msra.mxu0 %v2582
        %3861 = vmatpush.bf16.msra.mxu0 %v2574
        %3862 = vmatpush.bf16.msra.mxu0 %v2566
        %3863 = vmatpush.bf16.msra.mxu0 %v2558
        %3864 = vmatpush.bf16.msra.mxu0 %v2550
        %3865 = vmatpush.bf16.msra.mxu0 %v2542
        %3866 = vmatpush.bf16.msra.mxu0 %v2534
        %3867 = vmatpush.bf16.msra.mxu0 %v2526
        %3868 = vmatmul.bf16.gmra.mxu0 %v844
        %v3869 = vpop.f32.mrf.mxu0
        %v3870 = vadd.f32 %v3857, %v3869
        %v3871 = vpop.f32.mrf.mxu0
        %3872 = vdwg.mxu0
        %3873 = vmatpush.bf16.msra.mxu0 %v2646
        %3874 = vmatpush.bf16.msra.mxu0 %v2638
        %3875 = vmatpush.bf16.msra.mxu0 %v2630
        %3876 = vmatpush.bf16.msra.mxu0 %v2622
        %3877 = vmatpush.bf16.msra.mxu0 %v2614
        %3878 = vmatpush.bf16.msra.mxu0 %v2606
        %3879 = vmatpush.bf16.msra.mxu0 %v2598
        %3880 = vmatpush.bf16.msra.mxu0 %v2590
        %3881 = vmatmul.bf16.gmra.mxu0 %v845
        %v3882 = vpop.f32.mrf.mxu0
        %v3883 = vadd.f32 %v3870, %v3882
        %v3884 = vpop.f32.mrf.mxu0
        %3885 = vdwg.mxu0
        %3886 = vmatpush.bf16.msra.mxu0 %v2710
        %3887 = vmatpush.bf16.msra.mxu0 %v2702
        %3888 = vmatpush.bf16.msra.mxu0 %v2694
        %3889 = vmatpush.bf16.msra.mxu0 %v2686
        %3890 = vmatpush.bf16.msra.mxu0 %v2678
        %3891 = vmatpush.bf16.msra.mxu0 %v2670
        %3892 = vmatpush.bf16.msra.mxu0 %v2662
        %3893 = vmatpush.bf16.msra.mxu0 %v2654
        %3894 = vmatmul.bf16.gmra.mxu0 %v846
        %v3895 = vpop.f32.mrf.mxu0
        %v3896 = vadd.f32 %v3883, %v3895
        %v3897 = vpop.f32.mrf.mxu0
        %3898 = vdwg.mxu0
        %3899 = vmatpush.bf16.msra.mxu0 %v2774
        %3900 = vmatpush.bf16.msra.mxu0 %v2766
        %3901 = vmatpush.bf16.msra.mxu0 %v2758
        %3902 = vmatpush.bf16.msra.mxu0 %v2750
        %3903 = vmatpush.bf16.msra.mxu0 %v2742
        %3904 = vmatpush.bf16.msra.mxu0 %v2734
        %3905 = vmatpush.bf16.msra.mxu0 %v2726
        %3906 = vmatpush.bf16.msra.mxu0 %v2718
        %3907 = vmatmul.bf16.gmra.mxu0 %v847
        %v3908 = vpop.f32.mrf.mxu0
        %v3909 = vadd.f32 %v3896, %v3908
        %v3910 = vpop.f32.mrf.mxu0
        %3911 = vdwg.mxu0
        %3912 = vmatpush.bf16.msra.mxu0 %v2838
        %3913 = vmatpush.bf16.msra.mxu0 %v2830
        %3914 = vmatpush.bf16.msra.mxu0 %v2822
        %3915 = vmatpush.bf16.msra.mxu0 %v2814
        %3916 = vmatpush.bf16.msra.mxu0 %v2806
        %3917 = vmatpush.bf16.msra.mxu0 %v2798
        %3918 = vmatpush.bf16.msra.mxu0 %v2790
        %3919 = vmatpush.bf16.msra.mxu0 %v2782
        %3920 = vmatmul.bf16.gmra.mxu0 %v848
        %v3921 = vpop.f32.mrf.mxu0
        %v3922 = vadd.f32 %v3909, %v3921
        %v3923 = vpop.f32.mrf.mxu0
        %3924 = vdwg.mxu0
        %3925 = vmatpush.bf16.msra.mxu0 %v2902
        %3926 = vmatpush.bf16.msra.mxu0 %v2894
        %3927 = vmatpush.bf16.msra.mxu0 %v2886
        %3928 = vmatpush.bf16.msra.mxu0 %v2878
        %3929 = vmatpush.bf16.msra.mxu0 %v2870
        %3930 = vmatpush.bf16.msra.mxu0 %v2862
        %3931 = vmatpush.bf16.msra.mxu0 %v2854
        %3932 = vmatpush.bf16.msra.mxu0 %v2846
        %3933 = vmatmul.bf16.gmra.mxu0 %v849
        %v3934 = vpop.f32.mrf.mxu0
        %v3935 = vadd.f32 %v3922, %v3934
        %v3936 = vpop.f32.mrf.mxu0
        %3937 = vdwg.mxu0
        %3938 = vmatpush.bf16.msra.mxu0 %v2455
        %3939 = vmatpush.bf16.msra.mxu0 %v2447
        %3940 = vmatpush.bf16.msra.mxu0 %v2439
        %3941 = vmatpush.bf16.msra.mxu0 %v2431
        %3942 = vmatpush.bf16.msra.mxu0 %v2423
        %3943 = vmatpush.bf16.msra.mxu0 %v2415
        %3944 = vmatpush.bf16.msra.mxu0 %v2407
        %3945 = vmatpush.bf16.msra.mxu0 %v2399
        %3946 = vmatmul.bf16.gmra.mxu0 %v842
        %v3947 = vpop.f32.mrf.mxu0
        %v3948 = vadd.f32 %v829, %v3947
        %v3949 = vpop.f32.mrf.mxu0
        %3950 = vdwg.mxu0
        %3951 = vmatpush.bf16.msra.mxu0 %v2519
        %3952 = vmatpush.bf16.msra.mxu0 %v2511
        %3953 = vmatpush.bf16.msra.mxu0 %v2503
        %3954 = vmatpush.bf16.msra.mxu0 %v2495
        %3955 = vmatpush.bf16.msra.mxu0 %v2487
        %3956 = vmatpush.bf16.msra.mxu0 %v2479
        %3957 = vmatpush.bf16.msra.mxu0 %v2471
        %3958 = vmatpush.bf16.msra.mxu0 %v2463
        %3959 = vmatmul.bf16.gmra.mxu0 %v843
        %v3960 = vpop.f32.mrf.mxu0
        %v3961 = vadd.f32 %v3948, %v3960
        %v3962 = vpop.f32.mrf.mxu0
        %3963 = vdwg.mxu0
        %3964 = vmatpush.bf16.msra.mxu0 %v2583
        %3965 = vmatpush.bf16.msra.mxu0 %v2575
        %3966 = vmatpush.bf16.msra.mxu0 %v2567
        %3967 = vmatpush.bf16.msra.mxu0 %v2559
        %3968 = vmatpush.bf16.msra.mxu0 %v2551
        %3969 = vmatpush.bf16.msra.mxu0 %v2543
        %3970 = vmatpush.bf16.msra.mxu0 %v2535
        %3971 = vmatpush.bf16.msra.mxu0 %v2527
        %3972 = vmatmul.bf16.gmra.mxu0 %v844
        %v3973 = vpop.f32.mrf.mxu0
        %v3974 = vadd.f32 %v3961, %v3973
        %v3975 = vpop.f32.mrf.mxu0
        %3976 = vdwg.mxu0
        %3977 = vmatpush.bf16.msra.mxu0 %v2647
        %3978 = vmatpush.bf16.msra.mxu0 %v2639
        %3979 = vmatpush.bf16.msra.mxu0 %v2631
        %3980 = vmatpush.bf16.msra.mxu0 %v2623
        %3981 = vmatpush.bf16.msra.mxu0 %v2615
        %3982 = vmatpush.bf16.msra.mxu0 %v2607
        %3983 = vmatpush.bf16.msra.mxu0 %v2599
        %3984 = vmatpush.bf16.msra.mxu0 %v2591
        %3985 = vmatmul.bf16.gmra.mxu0 %v845
        %v3986 = vpop.f32.mrf.mxu0
        %v3987 = vadd.f32 %v3974, %v3986
        %v3988 = vpop.f32.mrf.mxu0
        %3989 = vdwg.mxu0
        %3990 = vmatpush.bf16.msra.mxu0 %v2711
        %3991 = vmatpush.bf16.msra.mxu0 %v2703
        %3992 = vmatpush.bf16.msra.mxu0 %v2695
        %3993 = vmatpush.bf16.msra.mxu0 %v2687
        %3994 = vmatpush.bf16.msra.mxu0 %v2679
        %3995 = vmatpush.bf16.msra.mxu0 %v2671
        %3996 = vmatpush.bf16.msra.mxu0 %v2663
        %3997 = vmatpush.bf16.msra.mxu0 %v2655
        %3998 = vmatmul.bf16.gmra.mxu0 %v846
        %v3999 = vpop.f32.mrf.mxu0
        %v4000 = vadd.f32 %v3987, %v3999
        %v4001 = vpop.f32.mrf.mxu0
        %4002 = vdwg.mxu0
        %4003 = vmatpush.bf16.msra.mxu0 %v2775
        %4004 = vmatpush.bf16.msra.mxu0 %v2767
        %4005 = vmatpush.bf16.msra.mxu0 %v2759
        %4006 = vmatpush.bf16.msra.mxu0 %v2751
        %4007 = vmatpush.bf16.msra.mxu0 %v2743
        %4008 = vmatpush.bf16.msra.mxu0 %v2735
        %4009 = vmatpush.bf16.msra.mxu0 %v2727
        %4010 = vmatpush.bf16.msra.mxu0 %v2719
        %4011 = vmatmul.bf16.gmra.mxu0 %v847
        %v4012 = vpop.f32.mrf.mxu0
        %v4013 = vadd.f32 %v4000, %v4012
        %v4014 = vpop.f32.mrf.mxu0
        %4015 = vdwg.mxu0
        %4016 = vmatpush.bf16.msra.mxu0 %v2839
        %4017 = vmatpush.bf16.msra.mxu0 %v2831
        %4018 = vmatpush.bf16.msra.mxu0 %v2823
        %4019 = vmatpush.bf16.msra.mxu0 %v2815
        %4020 = vmatpush.bf16.msra.mxu0 %v2807
        %4021 = vmatpush.bf16.msra.mxu0 %v2799
        %4022 = vmatpush.bf16.msra.mxu0 %v2791
        %4023 = vmatpush.bf16.msra.mxu0 %v2783
        %4024 = vmatmul.bf16.gmra.mxu0 %v848
        %v4025 = vpop.f32.mrf.mxu0
        %v4026 = vadd.f32 %v4013, %v4025
        %v4027 = vpop.f32.mrf.mxu0
        %4028 = vdwg.mxu0
        %4029 = vmatpush.bf16.msra.mxu0 %v2903
        %4030 = vmatpush.bf16.msra.mxu0 %v2895
        %4031 = vmatpush.bf16.msra.mxu0 %v2887
        %4032 = vmatpush.bf16.msra.mxu0 %v2879
        %4033 = vmatpush.bf16.msra.mxu0 %v2871
        %4034 = vmatpush.bf16.msra.mxu0 %v2863
        %4035 = vmatpush.bf16.msra.mxu0 %v2855
        %4036 = vmatpush.bf16.msra.mxu0 %v2847
        %4037 = vmatmul.bf16.gmra.mxu0 %v849
        %v4038 = vpop.f32.mrf.mxu0
        %v4039 = vadd.f32 %v4026, %v4038
        %v4040 = vpop.f32.mrf.mxu0
        %4041 = vdwg.mxu0
        %4042 = vmatpush.bf16.msra.mxu0 %v2456
        %4043 = vmatpush.bf16.msra.mxu0 %v2448
        %4044 = vmatpush.bf16.msra.mxu0 %v2440
        %4045 = vmatpush.bf16.msra.mxu0 %v2432
        %4046 = vmatpush.bf16.msra.mxu0 %v2424
        %4047 = vmatpush.bf16.msra.mxu0 %v2416
        %4048 = vmatpush.bf16.msra.mxu0 %v2408
        %4049 = vmatpush.bf16.msra.mxu0 %v2400
        %4050 = vmatmul.bf16.gmra.mxu0 %v842
        %v4051 = vpop.f32.mrf.mxu0
        %v4052 = vadd.f32 %v830, %v4051
        %v4053 = vpop.f32.mrf.mxu0
        %4054 = vdwg.mxu0
        %4055 = vmatpush.bf16.msra.mxu0 %v2520
        %4056 = vmatpush.bf16.msra.mxu0 %v2512
        %4057 = vmatpush.bf16.msra.mxu0 %v2504
        %4058 = vmatpush.bf16.msra.mxu0 %v2496
        %4059 = vmatpush.bf16.msra.mxu0 %v2488
        %4060 = vmatpush.bf16.msra.mxu0 %v2480
        %4061 = vmatpush.bf16.msra.mxu0 %v2472
        %4062 = vmatpush.bf16.msra.mxu0 %v2464
        %4063 = vmatmul.bf16.gmra.mxu0 %v843
        %v4064 = vpop.f32.mrf.mxu0
        %v4065 = vadd.f32 %v4052, %v4064
        %v4066 = vpop.f32.mrf.mxu0
        %4067 = vdwg.mxu0
        %4068 = vmatpush.bf16.msra.mxu0 %v2584
        %4069 = vmatpush.bf16.msra.mxu0 %v2576
        %4070 = vmatpush.bf16.msra.mxu0 %v2568
        %4071 = vmatpush.bf16.msra.mxu0 %v2560
        %4072 = vmatpush.bf16.msra.mxu0 %v2552
        %4073 = vmatpush.bf16.msra.mxu0 %v2544
        %4074 = vmatpush.bf16.msra.mxu0 %v2536
        %4075 = vmatpush.bf16.msra.mxu0 %v2528
        %4076 = vmatmul.bf16.gmra.mxu0 %v844
        %v4077 = vpop.f32.mrf.mxu0
        %v4078 = vadd.f32 %v4065, %v4077
        %v4079 = vpop.f32.mrf.mxu0
        %4080 = vdwg.mxu0
        %4081 = vmatpush.bf16.msra.mxu0 %v2648
        %4082 = vmatpush.bf16.msra.mxu0 %v2640
        %4083 = vmatpush.bf16.msra.mxu0 %v2632
        %4084 = vmatpush.bf16.msra.mxu0 %v2624
        %4085 = vmatpush.bf16.msra.mxu0 %v2616
        %4086 = vmatpush.bf16.msra.mxu0 %v2608
        %4087 = vmatpush.bf16.msra.mxu0 %v2600
        %4088 = vmatpush.bf16.msra.mxu0 %v2592
        %4089 = vmatmul.bf16.gmra.mxu0 %v845
        %v4090 = vpop.f32.mrf.mxu0
        %v4091 = vadd.f32 %v4078, %v4090
        %v4092 = vpop.f32.mrf.mxu0
        %4093 = vdwg.mxu0
        %4094 = vmatpush.bf16.msra.mxu0 %v2712
        %4095 = vmatpush.bf16.msra.mxu0 %v2704
        %4096 = vmatpush.bf16.msra.mxu0 %v2696
        %4097 = vmatpush.bf16.msra.mxu0 %v2688
        %4098 = vmatpush.bf16.msra.mxu0 %v2680
        %4099 = vmatpush.bf16.msra.mxu0 %v2672
        %4100 = vmatpush.bf16.msra.mxu0 %v2664
        %4101 = vmatpush.bf16.msra.mxu0 %v2656
        %4102 = vmatmul.bf16.gmra.mxu0 %v846
        %v4103 = vpop.f32.mrf.mxu0
        %v4104 = vadd.f32 %v4091, %v4103
        %v4105 = vpop.f32.mrf.mxu0
        %4106 = vdwg.mxu0
        %4107 = vmatpush.bf16.msra.mxu0 %v2776
        %4108 = vmatpush.bf16.msra.mxu0 %v2768
        %4109 = vmatpush.bf16.msra.mxu0 %v2760
        %4110 = vmatpush.bf16.msra.mxu0 %v2752
        %4111 = vmatpush.bf16.msra.mxu0 %v2744
        %4112 = vmatpush.bf16.msra.mxu0 %v2736
        %4113 = vmatpush.bf16.msra.mxu0 %v2728
        %4114 = vmatpush.bf16.msra.mxu0 %v2720
        %4115 = vmatmul.bf16.gmra.mxu0 %v847
        %v4116 = vpop.f32.mrf.mxu0
        %v4117 = vadd.f32 %v4104, %v4116
        %v4118 = vpop.f32.mrf.mxu0
        %4119 = vdwg.mxu0
        %4120 = vmatpush.bf16.msra.mxu0 %v2840
        %4121 = vmatpush.bf16.msra.mxu0 %v2832
        %4122 = vmatpush.bf16.msra.mxu0 %v2824
        %4123 = vmatpush.bf16.msra.mxu0 %v2816
        %4124 = vmatpush.bf16.msra.mxu0 %v2808
        %4125 = vmatpush.bf16.msra.mxu0 %v2800
        %4126 = vmatpush.bf16.msra.mxu0 %v2792
        %4127 = vmatpush.bf16.msra.mxu0 %v2784
        %4128 = vmatmul.bf16.gmra.mxu0 %v848
        %v4129 = vpop.f32.mrf.mxu0
        %v4130 = vadd.f32 %v4117, %v4129
        %v4131 = vpop.f32.mrf.mxu0
        %4132 = vdwg.mxu0
        %4133 = vmatpush.bf16.msra.mxu0 %v2904
        %4134 = vmatpush.bf16.msra.mxu0 %v2896
        %4135 = vmatpush.bf16.msra.mxu0 %v2888
        %4136 = vmatpush.bf16.msra.mxu0 %v2880
        %4137 = vmatpush.bf16.msra.mxu0 %v2872
        %4138 = vmatpush.bf16.msra.mxu0 %v2864
        %4139 = vmatpush.bf16.msra.mxu0 %v2856
        %4140 = vmatpush.bf16.msra.mxu0 %v2848
        %4141 = vmatmul.bf16.gmra.mxu0 %v849
        %v4142 = vpop.f32.mrf.mxu0
        %v4143 = vadd.f32 %v4130, %v4142
        %v4144 = vpop.f32.mrf.mxu0
        %4145 = vdwg.mxu0
        %4146 = vmatpush.bf16.msra.mxu0 %v2457
        %4147 = vmatpush.bf16.msra.mxu0 %v2449
        %4148 = vmatpush.bf16.msra.mxu0 %v2441
        %4149 = vmatpush.bf16.msra.mxu0 %v2433
        %4150 = vmatpush.bf16.msra.mxu0 %v2425
        %4151 = vmatpush.bf16.msra.mxu0 %v2417
        %4152 = vmatpush.bf16.msra.mxu0 %v2409
        %4153 = vmatpush.bf16.msra.mxu0 %v2401
        %4154 = vmatmul.bf16.gmra.mxu0 %v842
        %v4155 = vpop.f32.mrf.mxu0
        %v4156 = vadd.f32 %v831, %v4155
        %v4157 = vpop.f32.mrf.mxu0
        %4158 = vdwg.mxu0
        %4159 = vmatpush.bf16.msra.mxu0 %v2521
        %4160 = vmatpush.bf16.msra.mxu0 %v2513
        %4161 = vmatpush.bf16.msra.mxu0 %v2505
        %4162 = vmatpush.bf16.msra.mxu0 %v2497
        %4163 = vmatpush.bf16.msra.mxu0 %v2489
        %4164 = vmatpush.bf16.msra.mxu0 %v2481
        %4165 = vmatpush.bf16.msra.mxu0 %v2473
        %4166 = vmatpush.bf16.msra.mxu0 %v2465
        %4167 = vmatmul.bf16.gmra.mxu0 %v843
        %v4168 = vpop.f32.mrf.mxu0
        %v4169 = vadd.f32 %v4156, %v4168
        %v4170 = vpop.f32.mrf.mxu0
        %4171 = vdwg.mxu0
        %4172 = vmatpush.bf16.msra.mxu0 %v2585
        %4173 = vmatpush.bf16.msra.mxu0 %v2577
        %4174 = vmatpush.bf16.msra.mxu0 %v2569
        %4175 = vmatpush.bf16.msra.mxu0 %v2561
        %4176 = vmatpush.bf16.msra.mxu0 %v2553
        %4177 = vmatpush.bf16.msra.mxu0 %v2545
        %4178 = vmatpush.bf16.msra.mxu0 %v2537
        %4179 = vmatpush.bf16.msra.mxu0 %v2529
        %4180 = vmatmul.bf16.gmra.mxu0 %v844
        %v4181 = vpop.f32.mrf.mxu0
        %v4182 = vadd.f32 %v4169, %v4181
        %v4183 = vpop.f32.mrf.mxu0
        %4184 = vdwg.mxu0
        %4185 = vmatpush.bf16.msra.mxu0 %v2649
        %4186 = vmatpush.bf16.msra.mxu0 %v2641
        %4187 = vmatpush.bf16.msra.mxu0 %v2633
        %4188 = vmatpush.bf16.msra.mxu0 %v2625
        %4189 = vmatpush.bf16.msra.mxu0 %v2617
        %4190 = vmatpush.bf16.msra.mxu0 %v2609
        %4191 = vmatpush.bf16.msra.mxu0 %v2601
        %4192 = vmatpush.bf16.msra.mxu0 %v2593
        %4193 = vmatmul.bf16.gmra.mxu0 %v845
        %v4194 = vpop.f32.mrf.mxu0
        %v4195 = vadd.f32 %v4182, %v4194
        %v4196 = vpop.f32.mrf.mxu0
        %4197 = vdwg.mxu0
        %4198 = vmatpush.bf16.msra.mxu0 %v2713
        %4199 = vmatpush.bf16.msra.mxu0 %v2705
        %4200 = vmatpush.bf16.msra.mxu0 %v2697
        %4201 = vmatpush.bf16.msra.mxu0 %v2689
        %4202 = vmatpush.bf16.msra.mxu0 %v2681
        %4203 = vmatpush.bf16.msra.mxu0 %v2673
        %4204 = vmatpush.bf16.msra.mxu0 %v2665
        %4205 = vmatpush.bf16.msra.mxu0 %v2657
        %4206 = vmatmul.bf16.gmra.mxu0 %v846
        %v4207 = vpop.f32.mrf.mxu0
        %v4208 = vadd.f32 %v4195, %v4207
        %v4209 = vpop.f32.mrf.mxu0
        %4210 = vdwg.mxu0
        %4211 = vmatpush.bf16.msra.mxu0 %v2777
        %4212 = vmatpush.bf16.msra.mxu0 %v2769
        %4213 = vmatpush.bf16.msra.mxu0 %v2761
        %4214 = vmatpush.bf16.msra.mxu0 %v2753
        %4215 = vmatpush.bf16.msra.mxu0 %v2745
        %4216 = vmatpush.bf16.msra.mxu0 %v2737
        %4217 = vmatpush.bf16.msra.mxu0 %v2729
        %4218 = vmatpush.bf16.msra.mxu0 %v2721
        %4219 = vmatmul.bf16.gmra.mxu0 %v847
        %v4220 = vpop.f32.mrf.mxu0
        %v4221 = vadd.f32 %v4208, %v4220
        %v4222 = vpop.f32.mrf.mxu0
        %4223 = vdwg.mxu0
        %4224 = vmatpush.bf16.msra.mxu0 %v2841
        %4225 = vmatpush.bf16.msra.mxu0 %v2833
        %4226 = vmatpush.bf16.msra.mxu0 %v2825
        %4227 = vmatpush.bf16.msra.mxu0 %v2817
        %4228 = vmatpush.bf16.msra.mxu0 %v2809
        %4229 = vmatpush.bf16.msra.mxu0 %v2801
        %4230 = vmatpush.bf16.msra.mxu0 %v2793
        %4231 = vmatpush.bf16.msra.mxu0 %v2785
        %4232 = vmatmul.bf16.gmra.mxu0 %v848
        %v4233 = vpop.f32.mrf.mxu0
        %v4234 = vadd.f32 %v4221, %v4233
        %v4235 = vpop.f32.mrf.mxu0
        %4236 = vdwg.mxu0
        %4237 = vmatpush.bf16.msra.mxu0 %v2905
        %4238 = vmatpush.bf16.msra.mxu0 %v2897
        %4239 = vmatpush.bf16.msra.mxu0 %v2889
        %4240 = vmatpush.bf16.msra.mxu0 %v2881
        %4241 = vmatpush.bf16.msra.mxu0 %v2873
        %4242 = vmatpush.bf16.msra.mxu0 %v2865
        %4243 = vmatpush.bf16.msra.mxu0 %v2857
        %4244 = vmatpush.bf16.msra.mxu0 %v2849
        %4245 = vmatmul.bf16.gmra.mxu0 %v849
        %v4246 = vpop.f32.mrf.mxu0
        %v4247 = vadd.f32 %v4234, %v4246
        %v4248 = vpop.f32.mrf.mxu0
        %4249 = vdwg.mxu0
        %v4250 = vmax.f32 %v3519, 0.0
        %v4251 = vmax.f32 %v3623, 0.0
        %v4252 = vmax.f32 %v3727, 0.0
        %v4253 = vmax.f32 %v3831, 0.0
        %v4254 = vmax.f32 %v3935, 0.0
        %v4255 = vmax.f32 %v4039, 0.0
        %v4256 = vmax.f32 %v4143, 0.0
        %v4257 = vmax.f32 %v4247, 0.0
        %vm4258 = vcmask 1041408
        %v4259 = vsel %vm4258, %v4250, 0.0
        %v4260 = vrot.slane %v4259, 4
        %v4261 = vadd.f32 %v4259, %v4260
        %v4262 = vrot.slane %v4261, 2
        %v4263 = vadd.f32 %v4261, %v4262
        %v4264 = vrot.slane %v4263, 1
        %v4265 = vadd.f32 %v4263, %v4264
        %v4266 = vsel %vm4258, %v4251, 0.0
        %v4267 = vrot.slane %v4266, 4
        %v4268 = vadd.f32 %v4266, %v4267
        %v4269 = vrot.slane %v4268, 2
        %v4270 = vadd.f32 %v4268, %v4269
        %v4271 = vrot.slane %v4270, 1
        %v4272 = vadd.f32 %v4270, %v4271
        %v4273 = vsel %vm4258, %v4252, 0.0
        %v4274 = vrot.slane %v4273, 4
        %v4275 = vadd.f32 %v4273, %v4274
        %v4276 = vrot.slane %v4275, 2
        %v4277 = vadd.f32 %v4275, %v4276
        %v4278 = vrot.slane %v4277, 1
        %v4279 = vadd.f32 %v4277, %v4278
        %v4280 = vsel %vm4258, %v4253, 0.0
        %v4281 = vrot.slane %v4280, 4
        %v4282 = vadd.f32 %v4280, %v4281
        %v4283 = vrot.slane %v4282, 2
        %v4284 = vadd.f32 %v4282, %v4283
        %v4285 = vrot.slane %v4284, 1
        %v4286 = vadd.f32 %v4284, %v4285
        %v4287 = vsel %vm4258, %v4254, 0.0
        %v4288 = vrot.slane %v4287, 4
        %v4289 = vadd.f32 %v4287, %v4288
        %v4290 = vrot.slane %v4289, 2
        %v4291 = vadd.f32 %v4289, %v4290
        %v4292 = vrot.slane %v4291, 1
        %v4293 = vadd.f32 %v4291, %v4292
        %v4294 = vsel %vm4258, %v4255, 0.0
        %v4295 = vrot.slane %v4294, 4
        %v4296 = vadd.f32 %v4294, %v4295
        %v4297 = vrot.slane %v4296, 2
        %v4298 = vadd.f32 %v4296, %v4297
        %v4299 = vrot.slane %v4298, 1
        %v4300 = vadd.f32 %v4298, %v4299
        %v4301 = vsel %vm4258, %v4256, 0.0
        %v4302 = vrot.slane %v4301, 4
        %v4303 = vadd.f32 %v4301, %v4302
        %v4304 = vrot.slane %v4303, 2
        %v4305 = vadd.f32 %v4303, %v4304
        %v4306 = vrot.slane %v4305, 1
        %v4307 = vadd.f32 %v4305, %v4306
        %v4308 = vsel %vm4258, %v4257, 0.0
        %v4309 = vrot.slane %v4308, 4
        %v4310 = vadd.f32 %v4308, %v4309
        %v4311 = vrot.slane %v4310, 2
        %v4312 = vadd.f32 %v4310, %v4311
        %v4313 = vrot.slane %v4312, 1
        %v4314 = vadd.f32 %v4312, %v4313
        %v4315 = vrcp.pop 2.0
        %v4316 = vmul.f32 2.0, %v4315
        %v4317 = vsub.f32 1.0, %v4316
        %v4318 = vmul.f32 %v4315, %v4317
        %v4319 = vadd.f32 %v4315, %v4318
        %vm4320 = vweird.f32 %v4315
        %v4321 = vsel %vm4320, %v4315, %v4319
        %v4322 = vmul.f32 %v4265, %v4321
        %v4323 = vmul.f32 %v4272, %v4321
        %v4324 = vmul.f32 %v4279, %v4321
        %v4325 = vmul.f32 %v4286, %v4321
        %v4326 = vmul.f32 %v4293, %v4321
        %v4327 = vmul.f32 %v4300, %v4321
        %v4328 = vmul.f32 %v4307, %v4321
        %v4329 = vmul.f32 %v4314, %v4321
        %v4330 = vmul.f32 %v4250, %v4250
        %v4331 = vmul.f32 %v4251, %v4251
        %v4332 = vmul.f32 %v4252, %v4252
        %v4333 = vmul.f32 %v4253, %v4253
        %v4334 = vmul.f32 %v4254, %v4254
        %v4335 = vmul.f32 %v4255, %v4255
        %v4336 = vmul.f32 %v4256, %v4256
        %v4337 = vmul.f32 %v4257, %v4257
        %v4338 = vsel %vm4258, %v4330, 0.0
        %v4339 = vrot.slane %v4338, 4
        %v4340 = vadd.f32 %v4338, %v4339
        %v4341 = vrot.slane %v4340, 2
        %v4342 = vadd.f32 %v4340, %v4341
        %v4343 = vrot.slane %v4342, 1
        %v4344 = vadd.f32 %v4342, %v4343
        %v4345 = vsel %vm4258, %v4331, 0.0
        %v4346 = vrot.slane %v4345, 4
        %v4347 = vadd.f32 %v4345, %v4346
        %v4348 = vrot.slane %v4347, 2
        %v4349 = vadd.f32 %v4347, %v4348
        %v4350 = vrot.slane %v4349, 1
        %v4351 = vadd.f32 %v4349, %v4350
        %v4352 = vsel %vm4258, %v4332, 0.0
        %v4353 = vrot.slane %v4352, 4
        %v4354 = vadd.f32 %v4352, %v4353
        %v4355 = vrot.slane %v4354, 2
        %v4356 = vadd.f32 %v4354, %v4355
        %v4357 = vrot.slane %v4356, 1
        %v4358 = vadd.f32 %v4356, %v4357
        %v4359 = vsel %vm4258, %v4333, 0.0
        %v4360 = vrot.slane %v4359, 4
        %v4361 = vadd.f32 %v4359, %v4360
        %v4362 = vrot.slane %v4361, 2
        %v4363 = vadd.f32 %v4361, %v4362
        %v4364 = vrot.slane %v4363, 1
        %v4365 = vadd.f32 %v4363, %v4364
        %v4366 = vsel %vm4258, %v4334, 0.0
        %v4367 = vrot.slane %v4366, 4
        %v4368 = vadd.f32 %v4366, %v4367
        %v4369 = vrot.slane %v4368, 2
        %v4370 = vadd.f32 %v4368, %v4369
        %v4371 = vrot.slane %v4370, 1
        %v4372 = vadd.f32 %v4370, %v4371
        %v4373 = vsel %vm4258, %v4335, 0.0
        %v4374 = vrot.slane %v4373, 4
        %v4375 = vadd.f32 %v4373, %v4374
        %v4376 = vrot.slane %v4375, 2
        %v4377 = vadd.f32 %v4375, %v4376
        %v4378 = vrot.slane %v4377, 1
        %v4379 = vadd.f32 %v4377, %v4378
        %v4380 = vsel %vm4258, %v4336, 0.0
        %v4381 = vrot.slane %v4380, 4
        %v4382 = vadd.f32 %v4380, %v4381
        %v4383 = vrot.slane %v4382, 2
        %v4384 = vadd.f32 %v4382, %v4383
        %v4385 = vrot.slane %v4384, 1
        %v4386 = vadd.f32 %v4384, %v4385
        %v4387 = vsel %vm4258, %v4337, 0.0
        %v4388 = vrot.slane %v4387, 4
        %v4389 = vadd.f32 %v4387, %v4388
        %v4390 = vrot.slane %v4389, 2
        %v4391 = vadd.f32 %v4389, %v4390
        %v4392 = vrot.slane %v4391, 1
        %v4393 = vadd.f32 %v4391, %v4392
        %v4394 = vmul.f32 %v4344, %v4321
        %v4395 = vmul.f32 %v4351, %v4321
        %v4396 = vmul.f32 %v4358, %v4321
        %v4397 = vmul.f32 %v4365, %v4321
        %v4398 = vmul.f32 %v4372, %v4321
        %v4399 = vmul.f32 %v4379, %v4321
        %v4400 = vmul.f32 %v4386, %v4321
        %v4401 = vmul.f32 %v4393, %v4321
        %v4402 = vmul.f32 %v4322, %v4322
        %v4403 = vmul.f32 %v4323, %v4323
        %v4404 = vmul.f32 %v4324, %v4324
        %v4405 = vmul.f32 %v4325, %v4325
        %v4406 = vmul.f32 %v4326, %v4326
        %v4407 = vmul.f32 %v4327, %v4327
        %v4408 = vmul.f32 %v4328, %v4328
        %v4409 = vmul.f32 %v4329, %v4329
        %v4410 = vsub.f32 %v4394, %v4402
        %v4411 = vsub.f32 %v4395, %v4403
        %v4412 = vsub.f32 %v4396, %v4404
        %v4413 = vsub.f32 %v4397, %v4405
        %v4414 = vsub.f32 %v4398, %v4406
        %v4415 = vsub.f32 %v4399, %v4407
        %v4416 = vsub.f32 %v4400, %v4408
        %v4417 = vsub.f32 %v4401, %v4409
        %v4418 = vmax.f32 %v4410, 0.0
        %v4419 = vmax.f32 %v4411, 0.0
        %v4420 = vmax.f32 %v4412, 0.0
        %v4421 = vmax.f32 %v4413, 0.0
        %v4422 = vmax.f32 %v4414, 0.0
        %v4423 = vmax.f32 %v4415, 0.0
        %v4424 = vmax.f32 %v4416, 0.0
        %v4425 = vmax.f32 %v4417, 0.0
        %v4426 = vsub.f32 %v4250, %v4322
        %v4427 = vsub.f32 %v4251, %v4323
        %v4428 = vsub.f32 %v4252, %v4324
        %v4429 = vsub.f32 %v4253, %v4325
        %v4430 = vsub.f32 %v4254, %v4326
        %v4431 = vsub.f32 %v4255, %v4327
        %v4432 = vsub.f32 %v4256, %v4328
        %v4433 = vsub.f32 %v4257, %v4329
        %v4434 = vadd.f32 %v4418, 1e-05
        %v4435 = vadd.f32 %v4419, 1e-05
        %v4436 = vadd.f32 %v4420, 1e-05
        %v4437 = vadd.f32 %v4421, 1e-05
        %v4438 = vadd.f32 %v4422, 1e-05
        %v4439 = vadd.f32 %v4423, 1e-05
        %v4440 = vadd.f32 %v4424, 1e-05
        %v4441 = vadd.f32 %v4425, 1e-05
        %v4442 = vrsqrt.pop %v4434
        %v4443 = vmul.f32 %v4442, %v4434
        %v4444 = vmul.f32 %v4443, %v4442
        %v4445 = vmul.f32 0.5, %v4444
        %v4446 = vsub.f32 1.5, %v4445
        %v4447 = vmul.f32 %v4442, %v4446
        %vm4448 = vweird.f32 %v4434
        %vm4449 = vweird.f32 %v4442
        %vm4450 = vmor %vm4448, %vm4449
        %v4451 = vsel %vm4450, %v4442, %v4447
        %v4452 = vrsqrt.pop %v4435
        %v4453 = vmul.f32 %v4452, %v4435
        %v4454 = vmul.f32 %v4453, %v4452
        %v4455 = vmul.f32 0.5, %v4454
        %v4456 = vsub.f32 1.5, %v4455
        %v4457 = vmul.f32 %v4452, %v4456
        %vm4458 = vweird.f32 %v4435
        %vm4459 = vweird.f32 %v4452
        %vm4460 = vmor %vm4458, %vm4459
        %v4461 = vsel %vm4460, %v4452, %v4457
        %v4462 = vrsqrt.pop %v4436
        %v4463 = vmul.f32 %v4462, %v4436
        %v4464 = vmul.f32 %v4463, %v4462
        %v4465 = vmul.f32 0.5, %v4464
        %v4466 = vsub.f32 1.5, %v4465
        %v4467 = vmul.f32 %v4462, %v4466
        %vm4468 = vweird.f32 %v4436
        %vm4469 = vweird.f32 %v4462
        %vm4470 = vmor %vm4468, %vm4469
        %v4471 = vsel %vm4470, %v4462, %v4467
        %v4472 = vrsqrt.pop %v4437
        %v4473 = vmul.f32 %v4472, %v4437
        %v4474 = vmul.f32 %v4473, %v4472
        %v4475 = vmul.f32 0.5, %v4474
        %v4476 = vsub.f32 1.5, %v4475
        %v4477 = vmul.f32 %v4472, %v4476
        %vm4478 = vweird.f32 %v4437
        %vm4479 = vweird.f32 %v4472
        %vm4480 = vmor %vm4478, %vm4479
        %v4481 = vsel %vm4480, %v4472, %v4477
        %v4482 = vrsqrt.pop %v4438
        %v4483 = vmul.f32 %v4482, %v4438
        %v4484 = vmul.f32 %v4483, %v4482
        %v4485 = vmul.f32 0.5, %v4484
        %v4486 = vsub.f32 1.5, %v4485
        %v4487 = vmul.f32 %v4482, %v4486
        %vm4488 = vweird.f32 %v4438
        %vm4489 = vweird.f32 %v4482
        %vm4490 = vmor %vm4488, %vm4489
        %v4491 = vsel %vm4490, %v4482, %v4487
        %v4492 = vrsqrt.pop %v4439
        %v4493 = vmul.f32 %v4492, %v4439
        %v4494 = vmul.f32 %v4493, %v4492
        %v4495 = vmul.f32 0.5, %v4494
        %v4496 = vsub.f32 1.5, %v4495
        %v4497 = vmul.f32 %v4492, %v4496
        %vm4498 = vweird.f32 %v4439
        %vm4499 = vweird.f32 %v4492
        %vm4500 = vmor %vm4498, %vm4499
        %v4501 = vsel %vm4500, %v4492, %v4497
        %v4502 = vrsqrt.pop %v4440
        %v4503 = vmul.f32 %v4502, %v4440
        %v4504 = vmul.f32 %v4503, %v4502
        %v4505 = vmul.f32 0.5, %v4504
        %v4506 = vsub.f32 1.5, %v4505
        %v4507 = vmul.f32 %v4502, %v4506
        %vm4508 = vweird.f32 %v4440
        %vm4509 = vweird.f32 %v4502
        %vm4510 = vmor %vm4508, %vm4509
        %v4511 = vsel %vm4510, %v4502, %v4507
        %v4512 = vrsqrt.pop %v4441
        %v4513 = vmul.f32 %v4512, %v4441
        %v4514 = vmul.f32 %v4513, %v4512
        %v4515 = vmul.f32 0.5, %v4514
        %v4516 = vsub.f32 1.5, %v4515
        %v4517 = vmul.f32 %v4512, %v4516
        %vm4518 = vweird.f32 %v4441
        %vm4519 = vweird.f32 %v4512
        %vm4520 = vmor %vm4518, %vm4519
        %v4521 = vsel %vm4520, %v4512, %v4517
        %v4522 = vmul.f32 %v4426, %v4451
        %v4523 = vmul.f32 %v4427, %v4461
        %v4524 = vmul.f32 %v4428, %v4471
        %v4525 = vmul.f32 %v4429, %v4481
        %v4526 = vmul.f32 %v4430, %v4491
        %v4527 = vmul.f32 %v4431, %v4501
        %v4528 = vmul.f32 %v4432, %v4511
        %v4529 = vmul.f32 %v4433, %v4521
        %s4530 = scalar_lea.vmem %s269, 1 [#allocation7]
        %v4531 = vld [vmem:[%s4530] ss:$4 sm:$0xff]
        %v4533 = vperm.slane %v4531, 0
        %v4534 = vperm.slane %v4531, 1
        %v4535 = vperm.slane %v4531, 2
        %v4536 = vperm.slane %v4531, 3
        %v4537 = vperm.slane %v4531, 4
        %v4538 = vperm.slane %v4531, 5
        %v4539 = vperm.slane %v4531, 6
        %v4540 = vperm.slane %v4531, 7
        %v4549 = vmul.f32 %v4522, %v4533
        %v4550 = vmul.f32 %v4523, %v4534
        %v4551 = vmul.f32 %v4524, %v4535
        %v4552 = vmul.f32 %v4525, %v4536
        %v4553 = vmul.f32 %v4526, %v4537
        %v4554 = vmul.f32 %v4527, %v4538
        %v4555 = vmul.f32 %v4528, %v4539
        %v4556 = vmul.f32 %v4529, %v4540
        %s4557 = scalar_lea.vmem %s269, 2 [#allocation7]
        %v4558 = vld [vmem:[%s4557] ss:$4 sm:$0xff]
        %v4560 = vperm.slane %v4558, 0
        %v4561 = vperm.slane %v4558, 1
        %v4562 = vperm.slane %v4558, 2
        %v4563 = vperm.slane %v4558, 3
        %v4564 = vperm.slane %v4558, 4
        %v4565 = vperm.slane %v4558, 5
        %v4566 = vperm.slane %v4558, 6
        %v4567 = vperm.slane %v4558, 7
        %v4576 = vadd.f32 %v4549, %v4560
        %v4577 = vadd.f32 %v4550, %v4561
        %v4578 = vadd.f32 %v4551, %v4562
        %v4579 = vadd.f32 %v4552, %v4563
        %v4580 = vadd.f32 %v4553, %v4564
        %v4581 = vadd.f32 %v4554, %v4565
        %v4582 = vadd.f32 %v4555, %v4566
        %v4583 = vadd.f32 %v4556, %v4567
        %s4584 = sadd.s32 %s27, %s28
        %s4585 = smul.u32 %s4584, 1024
        %s4586 = sshra.s32 %s4585, 3
        %s4587 = sand.u32 %s4585, 7
        %s4588 = smul.addr %s4586, 4
        %s4589 = scalar_lea.vmem [#allocation8], %s4588
        %v4590 = vld [vmem:[%s4589] sm:$0xf]
        %v4591 = vld [vmem:[%s4589 + $0x4] sm:$0xf]
        %v4592 = vld [vmem:[%s4589 + $0x8] sm:$0xf]
        %v4593 = vld [vmem:[%s4589 + $0xc] sm:$0xf]
        %v4594 = vld [vmem:[%s4589 + $0x10] sm:$0xf]
        %v4595 = vld [vmem:[%s4589 + $0x14] sm:$0xf]
        %v4596 = vld [vmem:[%s4589 + $0x18] sm:$0xf]
        %v4597 = vld [vmem:[%s4589 + $0x1c] sm:$0xf]
        %v4598 = vld [vmem:[%s4589 + $0x20] sm:$0xf]
        %v4599 = vld [vmem:[%s4589 + $0x24] sm:$0xf]
        %v4600 = vld [vmem:[%s4589 + $0x28] sm:$0xf]
        %v4601 = vld [vmem:[%s4589 + $0x2c] sm:$0xf]
        %v4602 = vld [vmem:[%s4589 + $0x30] sm:$0xf]
        %v4603 = vld [vmem:[%s4589 + $0x34] sm:$0xf]
        %v4604 = vld [vmem:[%s4589 + $0x38] sm:$0xf]
        %v4605 = vld [vmem:[%s4589 + $0x3c] sm:$0xf]
        %v4606 = vld [vmem:[%s4589 + $0x40] sm:$0xf]
        %v4607 = vld [vmem:[%s4589 + $0x44] sm:$0xf]
        %v4608 = vld [vmem:[%s4589 + $0x48] sm:$0xf]
        %v4609 = vld [vmem:[%s4589 + $0x4c] sm:$0xf]
        %v4610 = vld [vmem:[%s4589 + $0x50] sm:$0xf]
        %v4611 = vld [vmem:[%s4589 + $0x54] sm:$0xf]
        %v4612 = vld [vmem:[%s4589 + $0x58] sm:$0xf]
        %v4613 = vld [vmem:[%s4589 + $0x5c] sm:$0xf]
        %v4614 = vld [vmem:[%s4589 + $0x60] sm:$0xf]
        %v4615 = vld [vmem:[%s4589 + $0x64] sm:$0xf]
        %v4616 = vld [vmem:[%s4589 + $0x68] sm:$0xf]
        %v4617 = vld [vmem:[%s4589 + $0x6c] sm:$0xf]
        %v4618 = vld [vmem:[%s4589 + $0x70] sm:$0xf]
        %v4619 = vld [vmem:[%s4589 + $0x74] sm:$0xf]
        %v4620 = vld [vmem:[%s4589 + $0x78] sm:$0xf]
        %v4621 = vld [vmem:[%s4589 + $0x7c] sm:$0xf]
        %v4622 = vld [vmem:[%s4589 + $0x80] sm:$0xf]
        %v4623 = vld [vmem:[%s4589 + $0x84] sm:$0xf]
        %v4624 = vld [vmem:[%s4589 + $0x88] sm:$0xf]
        %v4625 = vld [vmem:[%s4589 + $0x8c] sm:$0xf]
        %v4626 = vld [vmem:[%s4589 + $0x90] sm:$0xf]
        %v4627 = vld [vmem:[%s4589 + $0x94] sm:$0xf]
        %v4628 = vld [vmem:[%s4589 + $0x98] sm:$0xf]
        %v4629 = vld [vmem:[%s4589 + $0x9c] sm:$0xf]
        %v4630 = vld [vmem:[%s4589 + $0xa0] sm:$0xf]
        %v4631 = vld [vmem:[%s4589 + $0xa4] sm:$0xf]
        %v4632 = vld [vmem:[%s4589 + $0xa8] sm:$0xf]
        %v4633 = vld [vmem:[%s4589 + $0xac] sm:$0xf]
        %v4634 = vld [vmem:[%s4589 + $0xb0] sm:$0xf]
        %v4635 = vld [vmem:[%s4589 + $0xb4] sm:$0xf]
        %v4636 = vld [vmem:[%s4589 + $0xb8] sm:$0xf]
        %v4637 = vld [vmem:[%s4589 + $0xbc] sm:$0xf]
        %v4638 = vld [vmem:[%s4589 + $0xc0] sm:$0xf]
        %v4639 = vld [vmem:[%s4589 + $0xc4] sm:$0xf]
        %v4640 = vld [vmem:[%s4589 + $0xc8] sm:$0xf]
        %v4641 = vld [vmem:[%s4589 + $0xcc] sm:$0xf]
        %v4642 = vld [vmem:[%s4589 + $0xd0] sm:$0xf]
        %v4643 = vld [vmem:[%s4589 + $0xd4] sm:$0xf]
        %v4644 = vld [vmem:[%s4589 + $0xd8] sm:$0xf]
        %v4645 = vld [vmem:[%s4589 + $0xdc] sm:$0xf]
        %v4646 = vld [vmem:[%s4589 + $0xe0] sm:$0xf]
        %v4647 = vld [vmem:[%s4589 + $0xe4] sm:$0xf]
        %v4648 = vld [vmem:[%s4589 + $0xe8] sm:$0xf]
        %v4649 = vld [vmem:[%s4589 + $0xec] sm:$0xf]
        %v4650 = vld [vmem:[%s4589 + $0xf0] sm:$0xf]
        %v4651 = vld [vmem:[%s4589 + $0xf4] sm:$0xf]
        %v4652 = vld [vmem:[%s4589 + $0xf8] sm:$0xf]
        %v4653 = vld [vmem:[%s4589 + $0xfc] sm:$0xf]
        %v4654 = vld [vmem:[%s4589 + $0x100] sm:$0xf]
        %v4655 = vld [vmem:[%s4589 + $0x104] sm:$0xf]
        %v4656 = vld [vmem:[%s4589 + $0x108] sm:$0xf]
        %v4657 = vld [vmem:[%s4589 + $0x10c] sm:$0xf]
        %v4658 = vld [vmem:[%s4589 + $0x110] sm:$0xf]
        %v4659 = vld [vmem:[%s4589 + $0x114] sm:$0xf]
        %v4660 = vld [vmem:[%s4589 + $0x118] sm:$0xf]
        %v4661 = vld [vmem:[%s4589 + $0x11c] sm:$0xf]
        %v4662 = vld [vmem:[%s4589 + $0x120] sm:$0xf]
        %v4663 = vld [vmem:[%s4589 + $0x124] sm:$0xf]
        %v4664 = vld [vmem:[%s4589 + $0x128] sm:$0xf]
        %v4665 = vld [vmem:[%s4589 + $0x12c] sm:$0xf]
        %v4666 = vld [vmem:[%s4589 + $0x130] sm:$0xf]
        %v4667 = vld [vmem:[%s4589 + $0x134] sm:$0xf]
        %v4668 = vld [vmem:[%s4589 + $0x138] sm:$0xf]
        %v4669 = vld [vmem:[%s4589 + $0x13c] sm:$0xf]
        %v4670 = vld [vmem:[%s4589 + $0x140] sm:$0xf]
        %v4671 = vld [vmem:[%s4589 + $0x144] sm:$0xf]
        %v4672 = vld [vmem:[%s4589 + $0x148] sm:$0xf]
        %v4673 = vld [vmem:[%s4589 + $0x14c] sm:$0xf]
        %v4674 = vld [vmem:[%s4589 + $0x150] sm:$0xf]
        %v4675 = vld [vmem:[%s4589 + $0x154] sm:$0xf]
        %v4676 = vld [vmem:[%s4589 + $0x158] sm:$0xf]
        %v4677 = vld [vmem:[%s4589 + $0x15c] sm:$0xf]
        %v4678 = vld [vmem:[%s4589 + $0x160] sm:$0xf]
        %v4679 = vld [vmem:[%s4589 + $0x164] sm:$0xf]
        %v4680 = vld [vmem:[%s4589 + $0x168] sm:$0xf]
        %v4681 = vld [vmem:[%s4589 + $0x16c] sm:$0xf]
        %v4682 = vld [vmem:[%s4589 + $0x170] sm:$0xf]
        %v4683 = vld [vmem:[%s4589 + $0x174] sm:$0xf]
        %v4684 = vld [vmem:[%s4589 + $0x178] sm:$0xf]
        %v4685 = vld [vmem:[%s4589 + $0x17c] sm:$0xf]
        %v4686 = vld [vmem:[%s4589 + $0x180] sm:$0xf]
        %v4687 = vld [vmem:[%s4589 + $0x184] sm:$0xf]
        %v4688 = vld [vmem:[%s4589 + $0x188] sm:$0xf]
        %v4689 = vld [vmem:[%s4589 + $0x18c] sm:$0xf]
        %v4690 = vld [vmem:[%s4589 + $0x190] sm:$0xf]
        %v4691 = vld [vmem:[%s4589 + $0x194] sm:$0xf]
        %v4692 = vld [vmem:[%s4589 + $0x198] sm:$0xf]
        %v4693 = vld [vmem:[%s4589 + $0x19c] sm:$0xf]
        %v4694 = vld [vmem:[%s4589 + $0x1a0] sm:$0xf]
        %v4695 = vld [vmem:[%s4589 + $0x1a4] sm:$0xf]
        %v4696 = vld [vmem:[%s4589 + $0x1a8] sm:$0xf]
        %v4697 = vld [vmem:[%s4589 + $0x1ac] sm:$0xf]
        %v4698 = vld [vmem:[%s4589 + $0x1b0] sm:$0xf]
        %v4699 = vld [vmem:[%s4589 + $0x1b4] sm:$0xf]
        %v4700 = vld [vmem:[%s4589 + $0x1b8] sm:$0xf]
        %v4701 = vld [vmem:[%s4589 + $0x1bc] sm:$0xf]
        %v4702 = vld [vmem:[%s4589 + $0x1c0] sm:$0xf]
        %v4703 = vld [vmem:[%s4589 + $0x1c4] sm:$0xf]
        %v4704 = vld [vmem:[%s4589 + $0x1c8] sm:$0xf]
        %v4705 = vld [vmem:[%s4589 + $0x1cc] sm:$0xf]
        %v4706 = vld [vmem:[%s4589 + $0x1d0] sm:$0xf]
        %v4707 = vld [vmem:[%s4589 + $0x1d4] sm:$0xf]
        %v4708 = vld [vmem:[%s4589 + $0x1d8] sm:$0xf]
        %v4709 = vld [vmem:[%s4589 + $0x1dc] sm:$0xf]
        %v4710 = vld [vmem:[%s4589 + $0x1e0] sm:$0xf]
        %v4711 = vld [vmem:[%s4589 + $0x1e4] sm:$0xf]
        %v4712 = vld [vmem:[%s4589 + $0x1e8] sm:$0xf]
        %v4713 = vld [vmem:[%s4589 + $0x1ec] sm:$0xf]
        %v4714 = vld [vmem:[%s4589 + $0x1f0] sm:$0xf]
        %v4715 = vld [vmem:[%s4589 + $0x1f4] sm:$0xf]
        %v4716 = vld [vmem:[%s4589 + $0x1f8] sm:$0xf]
        %v4717 = vld [vmem:[%s4589 + $0x1fc] sm:$0xf]
        %v4718 = vpack.c.bf16 %v4576, %v4576
        %v4719 = vpack.c.bf16 %v4577, %v4577
        %v4720 = vpack.c.bf16 %v4578, %v4578
        %v4721 = vpack.c.bf16 %v4579, %v4579
        %v4722 = vpack.c.bf16 %v4580, %v4580
        %v4723 = vpack.c.bf16 %v4581, %v4581
        %v4724 = vpack.c.bf16 %v4582, %v4582
        %v4725 = vpack.c.bf16 %v4583, %v4583
        %v4854 = vunpack.c.l.b16 %v4590
        %v4855 = vunpack.c.l.b16 %v4591
        %v4856 = vunpack.c.l.b16 %v4592
        %v4857 = vunpack.c.l.b16 %v4593
        %v4858 = vunpack.c.l.b16 %v4594
        %v4859 = vunpack.c.l.b16 %v4595
        %v4860 = vunpack.c.l.b16 %v4596
        %v4861 = vunpack.c.l.b16 %v4597
        %v4862 = vunpack.c.l.b16 %v4598
        %v4863 = vunpack.c.l.b16 %v4599
        %v4864 = vunpack.c.l.b16 %v4600
        %v4865 = vunpack.c.l.b16 %v4601
        %v4866 = vunpack.c.l.b16 %v4602
        %v4867 = vunpack.c.l.b16 %v4603
        %v4868 = vunpack.c.l.b16 %v4604
        %v4869 = vunpack.c.l.b16 %v4605
        %v4870 = vunpack.c.l.b16 %v4606
        %v4871 = vunpack.c.l.b16 %v4607
        %v4872 = vunpack.c.l.b16 %v4608
        %v4873 = vunpack.c.l.b16 %v4609
        %v4874 = vunpack.c.l.b16 %v4610
        %v4875 = vunpack.c.l.b16 %v4611
        %v4876 = vunpack.c.l.b16 %v4612
        %v4877 = vunpack.c.l.b16 %v4613
        %v4878 = vunpack.c.l.b16 %v4614
        %v4879 = vunpack.c.l.b16 %v4615
        %v4880 = vunpack.c.l.b16 %v4616
        %v4881 = vunpack.c.l.b16 %v4617
        %v4882 = vunpack.c.l.b16 %v4618
        %v4883 = vunpack.c.l.b16 %v4619
        %v4884 = vunpack.c.l.b16 %v4620
        %v4885 = vunpack.c.l.b16 %v4621
        %v4886 = vunpack.c.l.b16 %v4622
        %v4887 = vunpack.c.l.b16 %v4623
        %v4888 = vunpack.c.l.b16 %v4624
        %v4889 = vunpack.c.l.b16 %v4625
        %v4890 = vunpack.c.l.b16 %v4626
        %v4891 = vunpack.c.l.b16 %v4627
        %v4892 = vunpack.c.l.b16 %v4628
        %v4893 = vunpack.c.l.b16 %v4629
        %v4894 = vunpack.c.l.b16 %v4630
        %v4895 = vunpack.c.l.b16 %v4631
        %v4896 = vunpack.c.l.b16 %v4632
        %v4897 = vunpack.c.l.b16 %v4633
        %v4898 = vunpack.c.l.b16 %v4634
        %v4899 = vunpack.c.l.b16 %v4635
        %v4900 = vunpack.c.l.b16 %v4636
        %v4901 = vunpack.c.l.b16 %v4637
        %v4902 = vunpack.c.l.b16 %v4638
        %v4903 = vunpack.c.l.b16 %v4639
        %v4904 = vunpack.c.l.b16 %v4640
        %v4905 = vunpack.c.l.b16 %v4641
        %v4906 = vunpack.c.l.b16 %v4642
        %v4907 = vunpack.c.l.b16 %v4643
        %v4908 = vunpack.c.l.b16 %v4644
        %v4909 = vunpack.c.l.b16 %v4645
        %v4910 = vunpack.c.l.b16 %v4646
        %v4911 = vunpack.c.l.b16 %v4647
        %v4912 = vunpack.c.l.b16 %v4648
        %v4913 = vunpack.c.l.b16 %v4649
        %v4914 = vunpack.c.l.b16 %v4650
        %v4915 = vunpack.c.l.b16 %v4651
        %v4916 = vunpack.c.l.b16 %v4652
        %v4917 = vunpack.c.l.b16 %v4653
        %v4918 = vunpack.c.l.b16 %v4654
        %v4919 = vunpack.c.l.b16 %v4655
        %v4920 = vunpack.c.l.b16 %v4656
        %v4921 = vunpack.c.l.b16 %v4657
        %v4922 = vunpack.c.l.b16 %v4658
        %v4923 = vunpack.c.l.b16 %v4659
        %v4924 = vunpack.c.l.b16 %v4660
        %v4925 = vunpack.c.l.b16 %v4661
        %v4926 = vunpack.c.l.b16 %v4662
        %v4927 = vunpack.c.l.b16 %v4663
        %v4928 = vunpack.c.l.b16 %v4664
        %v4929 = vunpack.c.l.b16 %v4665
        %v4930 = vunpack.c.l.b16 %v4666
        %v4931 = vunpack.c.l.b16 %v4667
        %v4932 = vunpack.c.l.b16 %v4668
        %v4933 = vunpack.c.l.b16 %v4669
        %v4934 = vunpack.c.l.b16 %v4670
        %v4935 = vunpack.c.l.b16 %v4671
        %v4936 = vunpack.c.l.b16 %v4672
        %v4937 = vunpack.c.l.b16 %v4673
        %v4938 = vunpack.c.l.b16 %v4674
        %v4939 = vunpack.c.l.b16 %v4675
        %v4940 = vunpack.c.l.b16 %v4676
        %v4941 = vunpack.c.l.b16 %v4677
        %v4942 = vunpack.c.l.b16 %v4678
        %v4943 = vunpack.c.l.b16 %v4679
        %v4944 = vunpack.c.l.b16 %v4680
        %v4945 = vunpack.c.l.b16 %v4681
        %v4946 = vunpack.c.l.b16 %v4682
        %v4947 = vunpack.c.l.b16 %v4683
        %v4948 = vunpack.c.l.b16 %v4684
        %v4949 = vunpack.c.l.b16 %v4685
        %v4950 = vunpack.c.l.b16 %v4686
        %v4951 = vunpack.c.l.b16 %v4687
        %v4952 = vunpack.c.l.b16 %v4688
        %v4953 = vunpack.c.l.b16 %v4689
        %v4954 = vunpack.c.l.b16 %v4690
        %v4955 = vunpack.c.l.b16 %v4691
        %v4956 = vunpack.c.l.b16 %v4692
        %v4957 = vunpack.c.l.b16 %v4693
        %v4958 = vunpack.c.l.b16 %v4694
        %v4959 = vunpack.c.l.b16 %v4695
        %v4960 = vunpack.c.l.b16 %v4696
        %v4961 = vunpack.c.l.b16 %v4697
        %v4962 = vunpack.c.l.b16 %v4698
        %v4963 = vunpack.c.l.b16 %v4699
        %v4964 = vunpack.c.l.b16 %v4700
        %v4965 = vunpack.c.l.b16 %v4701
        %v4966 = vunpack.c.l.b16 %v4702
        %v4967 = vunpack.c.l.b16 %v4703
        %v4968 = vunpack.c.l.b16 %v4704
        %v4969 = vunpack.c.l.b16 %v4705
        %v4970 = vunpack.c.l.b16 %v4706
        %v4971 = vunpack.c.l.b16 %v4707
        %v4972 = vunpack.c.l.b16 %v4708
        %v4973 = vunpack.c.l.b16 %v4709
        %v4974 = vunpack.c.l.b16 %v4710
        %v4975 = vunpack.c.l.b16 %v4711
        %v4976 = vunpack.c.l.b16 %v4712
        %v4977 = vunpack.c.l.b16 %v4713
        %v4978 = vunpack.c.l.b16 %v4714
        %v4979 = vunpack.c.l.b16 %v4715
        %v4980 = vunpack.c.l.b16 %v4716
        %v4981 = vunpack.c.l.b16 %v4717
        %v4982 = vpack.c.b16 %v4855, %v4854
        %v4983 = vpack.c.b16 %v4857, %v4856
        %v4984 = vpack.c.b16 %v4859, %v4858
        %v4985 = vpack.c.b16 %v4861, %v4860
        %v4986 = vpack.c.b16 %v4863, %v4862
        %v4987 = vpack.c.b16 %v4865, %v4864
        %v4988 = vpack.c.b16 %v4867, %v4866
        %v4989 = vpack.c.b16 %v4869, %v4868
        %v4990 = vpack.c.b16 %v4871, %v4870
        %v4991 = vpack.c.b16 %v4873, %v4872
        %v4992 = vpack.c.b16 %v4875, %v4874
        %v4993 = vpack.c.b16 %v4877, %v4876
        %v4994 = vpack.c.b16 %v4879, %v4878
        %v4995 = vpack.c.b16 %v4881, %v4880
        %v4996 = vpack.c.b16 %v4883, %v4882
        %v4997 = vpack.c.b16 %v4885, %v4884
        %v4998 = vpack.c.b16 %v4887, %v4886
        %v4999 = vpack.c.b16 %v4889, %v4888
        %v5000 = vpack.c.b16 %v4891, %v4890
        %v5001 = vpack.c.b16 %v4893, %v4892
        %v5002 = vpack.c.b16 %v4895, %v4894
        %v5003 = vpack.c.b16 %v4897, %v4896
        %v5004 = vpack.c.b16 %v4899, %v4898
        %v5005 = vpack.c.b16 %v4901, %v4900
        %v5006 = vpack.c.b16 %v4903, %v4902
        %v5007 = vpack.c.b16 %v4905, %v4904
        %v5008 = vpack.c.b16 %v4907, %v4906
        %v5009 = vpack.c.b16 %v4909, %v4908
        %v5010 = vpack.c.b16 %v4911, %v4910
        %v5011 = vpack.c.b16 %v4913, %v4912
        %v5012 = vpack.c.b16 %v4915, %v4914
        %v5013 = vpack.c.b16 %v4917, %v4916
        %v5014 = vpack.c.b16 %v4919, %v4918
        %v5015 = vpack.c.b16 %v4921, %v4920
        %v5016 = vpack.c.b16 %v4923, %v4922
        %v5017 = vpack.c.b16 %v4925, %v4924
        %v5018 = vpack.c.b16 %v4927, %v4926
        %v5019 = vpack.c.b16 %v4929, %v4928
        %v5020 = vpack.c.b16 %v4931, %v4930
        %v5021 = vpack.c.b16 %v4933, %v4932
        %v5022 = vpack.c.b16 %v4935, %v4934
        %v5023 = vpack.c.b16 %v4937, %v4936
        %v5024 = vpack.c.b16 %v4939, %v4938
        %v5025 = vpack.c.b16 %v4941, %v4940
        %v5026 = vpack.c.b16 %v4943, %v4942
        %v5027 = vpack.c.b16 %v4945, %v4944
        %v5028 = vpack.c.b16 %v4947, %v4946
        %v5029 = vpack.c.b16 %v4949, %v4948
        %v5030 = vpack.c.b16 %v4951, %v4950
        %v5031 = vpack.c.b16 %v4953, %v4952
        %v5032 = vpack.c.b16 %v4955, %v4954
        %v5033 = vpack.c.b16 %v4957, %v4956
        %v5034 = vpack.c.b16 %v4959, %v4958
        %v5035 = vpack.c.b16 %v4961, %v4960
        %v5036 = vpack.c.b16 %v4963, %v4962
        %v5037 = vpack.c.b16 %v4965, %v4964
        %v5038 = vpack.c.b16 %v4967, %v4966
        %v5039 = vpack.c.b16 %v4969, %v4968
        %v5040 = vpack.c.b16 %v4971, %v4970
        %v5041 = vpack.c.b16 %v4973, %v4972
        %v5042 = vpack.c.b16 %v4975, %v4974
        %v5043 = vpack.c.b16 %v4977, %v4976
        %v5044 = vpack.c.b16 %v4979, %v4978
        %v5045 = vpack.c.b16 %v4981, %v4980
        %5110 = vmatpush.bf16.msra.mxu0 %v4989
        %5111 = vmatpush.bf16.msra.mxu0 %v4988
        %5112 = vmatpush.bf16.msra.mxu0 %v4987
        %5113 = vmatpush.bf16.msra.mxu0 %v4986
        %5114 = vmatpush.bf16.msra.mxu0 %v4985
        %5115 = vmatpush.bf16.msra.mxu0 %v4984
        %5116 = vmatpush.bf16.msra.mxu0 %v4983
        %5117 = vmatpush.bf16.msra.mxu0 %v4982
        %5118 = vmatmul.bf16.gmra.mxu0 %v4718
        %v5119 = vpop.f32.mrf.mxu0
        %v5120 = vadd.f32 0.0, %v5119
        %v5121 = vpop.f32.mrf.mxu0
        %5122 = vdwg.mxu0
        %5123 = vmatpush.bf16.msra.mxu0 %v4997
        %5124 = vmatpush.bf16.msra.mxu0 %v4996
        %5125 = vmatpush.bf16.msra.mxu0 %v4995
        %5126 = vmatpush.bf16.msra.mxu0 %v4994
        %5127 = vmatpush.bf16.msra.mxu0 %v4993
        %5128 = vmatpush.bf16.msra.mxu0 %v4992
        %5129 = vmatpush.bf16.msra.mxu0 %v4991
        %5130 = vmatpush.bf16.msra.mxu0 %v4990
        %5131 = vmatmul.bf16.gmra.mxu0 %v4719
        %v5132 = vpop.f32.mrf.mxu0
        %v5133 = vadd.f32 %v5120, %v5132
        %v5134 = vpop.f32.mrf.mxu0
        %5135 = vdwg.mxu0
        %5136 = vmatpush.bf16.msra.mxu0 %v5005
        %5137 = vmatpush.bf16.msra.mxu0 %v5004
        %5138 = vmatpush.bf16.msra.mxu0 %v5003
        %5139 = vmatpush.bf16.msra.mxu0 %v5002
        %5140 = vmatpush.bf16.msra.mxu0 %v5001
        %5141 = vmatpush.bf16.msra.mxu0 %v5000
        %5142 = vmatpush.bf16.msra.mxu0 %v4999
        %5143 = vmatpush.bf16.msra.mxu0 %v4998
        %5144 = vmatmul.bf16.gmra.mxu0 %v4720
        %v5145 = vpop.f32.mrf.mxu0
        %v5146 = vadd.f32 %v5133, %v5145
        %v5147 = vpop.f32.mrf.mxu0
        %5148 = vdwg.mxu0
        %5149 = vmatpush.bf16.msra.mxu0 %v5013
        %5150 = vmatpush.bf16.msra.mxu0 %v5012
        %5151 = vmatpush.bf16.msra.mxu0 %v5011
        %5152 = vmatpush.bf16.msra.mxu0 %v5010
        %5153 = vmatpush.bf16.msra.mxu0 %v5009
        %5154 = vmatpush.bf16.msra.mxu0 %v5008
        %5155 = vmatpush.bf16.msra.mxu0 %v5007
        %5156 = vmatpush.bf16.msra.mxu0 %v5006
        %5157 = vmatmul.bf16.gmra.mxu0 %v4721
        %v5158 = vpop.f32.mrf.mxu0
        %v5159 = vadd.f32 %v5146, %v5158
        %v5160 = vpop.f32.mrf.mxu0
        %5161 = vdwg.mxu0
        %5162 = vmatpush.bf16.msra.mxu0 %v5021
        %5163 = vmatpush.bf16.msra.mxu0 %v5020
        %5164 = vmatpush.bf16.msra.mxu0 %v5019
        %5165 = vmatpush.bf16.msra.mxu0 %v5018
        %5166 = vmatpush.bf16.msra.mxu0 %v5017
        %5167 = vmatpush.bf16.msra.mxu0 %v5016
        %5168 = vmatpush.bf16.msra.mxu0 %v5015
        %5169 = vmatpush.bf16.msra.mxu0 %v5014
        %5170 = vmatmul.bf16.gmra.mxu0 %v4722
        %v5171 = vpop.f32.mrf.mxu0
        %v5172 = vadd.f32 %v5159, %v5171
        %v5173 = vpop.f32.mrf.mxu0
        %5174 = vdwg.mxu0
        %5175 = vmatpush.bf16.msra.mxu0 %v5029
        %5176 = vmatpush.bf16.msra.mxu0 %v5028
        %5177 = vmatpush.bf16.msra.mxu0 %v5027
        %5178 = vmatpush.bf16.msra.mxu0 %v5026
        %5179 = vmatpush.bf16.msra.mxu0 %v5025
        %5180 = vmatpush.bf16.msra.mxu0 %v5024
        %5181 = vmatpush.bf16.msra.mxu0 %v5023
        %5182 = vmatpush.bf16.msra.mxu0 %v5022
        %5183 = vmatmul.bf16.gmra.mxu0 %v4723
        %v5184 = vpop.f32.mrf.mxu0
        %v5185 = vadd.f32 %v5172, %v5184
        %v5186 = vpop.f32.mrf.mxu0
        %5187 = vdwg.mxu0
        %5188 = vmatpush.bf16.msra.mxu0 %v5037
        %5189 = vmatpush.bf16.msra.mxu0 %v5036
        %5190 = vmatpush.bf16.msra.mxu0 %v5035
        %5191 = vmatpush.bf16.msra.mxu0 %v5034
        %5192 = vmatpush.bf16.msra.mxu0 %v5033
        %5193 = vmatpush.bf16.msra.mxu0 %v5032
        %5194 = vmatpush.bf16.msra.mxu0 %v5031
        %5195 = vmatpush.bf16.msra.mxu0 %v5030
        %5196 = vmatmul.bf16.gmra.mxu0 %v4724
        %v5197 = vpop.f32.mrf.mxu0
        %v5198 = vadd.f32 %v5185, %v5197
        %v5199 = vpop.f32.mrf.mxu0
        %5200 = vdwg.mxu0
        %5201 = vmatpush.bf16.msra.mxu0 %v5045
        %5202 = vmatpush.bf16.msra.mxu0 %v5044
        %5203 = vmatpush.bf16.msra.mxu0 %v5043
        %5204 = vmatpush.bf16.msra.mxu0 %v5042
        %5205 = vmatpush.bf16.msra.mxu0 %v5041
        %5206 = vmatpush.bf16.msra.mxu0 %v5040
        %5207 = vmatpush.bf16.msra.mxu0 %v5039
        %5208 = vmatpush.bf16.msra.mxu0 %v5038
        %5209 = vmatmul.bf16.gmra.mxu0 %v4725
        %v5210 = vpop.f32.mrf.mxu0
        %v5211 = vadd.f32 %v5198, %v5210
        %v5212 = vpop.f32.mrf.mxu0
        %5213 = vdwg.mxu0
        %p5214 = scmp.eq.s32.totalorder %s28, 0
        // Predicated region
        $region53: #{tpu_custom_call.1} parent=35 // pred_check
          %p5215 = pneg %p5214
        $region54: #{tpu_custom_call.1} parent=35 // pred_check_branch
          %5217 = sbr.rel (%p5215) target = $region56
        $region55: #{tpu_custom_call.1} parent=35 // pred_region
          %5218 = vst [vmem:[%s304] sm:$0x3] %v5211
        $region56: #{tpu_custom_call.1} parent=35 // pred_fallthru
          _
        %p5219 = scmp.gt.s32.totalorder %s28, 0
        // Predicated region
        $region57: #{tpu_custom_call.1} parent=35 // pred_check
          %p5220 = pneg %p5219
        $region58: #{tpu_custom_call.1} parent=35 // pred_check_branch
          %5222 = sbr.rel (%p5220) target = $region60
        $region59: #{tpu_custom_call.1} parent=35 // pred_region
          %v5223 = vld [vmem:[%s304] sm:$0x3]
          %v5224 = vadd.f32 %v5223, %v5211
          %5225 = vst [vmem:[%s304] sm:$0x3] %v5224
        $region60: #{tpu_custom_call.1} parent=35 // pred_fallthru
          _
        %s5226 = sand.u32 %s141, 1
        %s5227 = scalar_lea.sflag [#allocation4], %s5226
        %s5228 = sand.u32 %s141, 1
        %s5229 = smul.addr %s5228, 2
        %s5230 = scalar_lea.vmem [#allocation10], %s5229
        // Predicated region
        $region61: #{tpu_custom_call.1} parent=35 // pred_check
          %p5231 = pneg %p151
        $region62: #{tpu_custom_call.1} parent=35 // pred_check_branch
          %5233 = sbr.rel (%p5231) target = $region64
        $region63: #{tpu_custom_call.1} parent=35 // pred_region
          %5235 = vsyncadd %s5227, 0
          %s5236 = smul.addr %s27, 2
          %s5237 = scalar_lea.hbm %s4, %s5236
          %s5239 = sshll.u32 %s5230, 4
          %s5240 = int_to_ptr.vmem [resolvable:$true] %s5239
          %s5241 = sshll.u32 %s5237, 4
          %s5242 = int_to_ptr.hbm [resolvable:$true] %s5241
          %5244 = dma.vmem_to_hbm [thread:$0]  %s5240, 32, %s5242, %s5227
        $region64: #{tpu_custom_call.1} parent=35 // pred_fallthru
          _
      $region36: #{tpu_custom_call.1} parent=5 // pred_fallthru
        _
      %p5245 = scmp.le.s32.totalorder 2, %s18
      // Predicated region
      $region65: #{tpu_custom_call.1} parent=5 // pred_check
        %p5246 = pneg %p5245
      $region66: #{tpu_custom_call.1} parent=5 // pred_check_branch
        %5248 = sbr.rel (%p5246) target = $region68
      $region67: #{tpu_custom_call.1} parent=5 // pred_region
        %s5249 = ssub.s32 %s18, 2
        // Predicated region
        $region69: #{tpu_custom_call.1} parent=67 // pred_check
          %p5250 = pneg %p157
        $region70: #{tpu_custom_call.1} parent=67 // pred_check_branch
          %5252 = sbr.rel (%p5250) target = $region72
        $region71: #{tpu_custom_call.1} parent=67 // pred_region
          %s5253 = sand.u32 %s142, 1
          %s5254 = scalar_lea.sflag [#allocation4], %s5253
          %s5255 = sand.u32 %s142, 1
          %s5256 = smul.addr %s5255, 2
          %s5257 = scalar_lea.vmem [#allocation10], %s5256
          %5259 = dma.done %s5254, 32
        $region72: #{tpu_custom_call.1} parent=67 // pred_fallthru
          _
      $region68: #{tpu_custom_call.1} parent=5 // pred_fallthru
        _
    $region6: #{tpu_custom_call.1} parent=1 // loop_footer
      %s22 = sadd.s32 1, %s18
    $region7: #{tpu_custom_call.1} parent=1 // loop_footer_branch
      %17 = sbr.rel target = $region3
    $region8: #{tpu_custom_call.1} parent=1 // loop_exit
      _
    %5260 = vsyncpa [#allocation3], 1
    %s5261 = scalar_lea.sflag [#allocation3], 1
    %5262 = vsyncpa %s5261, 1
    %5263 = vsyncpa [#allocation6], 1
    %s5264 = scalar_lea.sflag [#allocation6], 1
    %5265 = vsyncpa %s5264, 1
    %5266 = vsyncpa [#allocation9], 1
    %5267 = vsyncpa [#allocation4], 1
    %s5268 = scalar_lea.sflag [#allocation4], 1
    %5269 = vsyncpa %s5268, 1

</llo_original>
